<compile_context>
chip_gen: v6e
topology: v6e:2x2x1
jax: 0.10.0
libtpu: 0.0.40
codegen_flags: <defaults>
</compile_context>

<pallas_src>
import functools

import jax
import jax.numpy as jnp
from jax import lax
from jax.experimental import pallas as pl
from jax.experimental.pallas import tpu as pltpu  # noqa: F401  (kept for the scaling path)


# ----------------------------------------------------------------------------- kernel

def _layernorm(t, g, b):
    """LayerNorm over the last dim, eps = 1e-5 (PyTorch default)."""
    mu = jnp.mean(t, axis=-1, keepdims=True)
    var = jnp.mean((t - mu) ** 2, axis=-1, keepdims=True)
    return (t - mu) * lax.rsqrt(var + 1e-5) * g + b


def _decoder_kernel(z_ref, w_in_ref, b_in_ref,
                    w_qkv_ref, b_qkv_ref, w_o_ref, b_o_ref,
                    ln0_g_ref, ln0_b_ref, ln1_g_ref, ln1_b_ref,
                    w_f0_ref, b_f0_ref, w_f1_ref, b_f1_ref,
                    w_out_ref, b_out_ref,
                    out_ref,
                    *, B, S, H, dh, L):
    D = H * dh
    M = B * S

    # ---- input projection + relu; activation stays in vregs from here on ----
    x = jnp.maximum(
        jnp.dot(z_ref[...], w_in_ref[...], preferred_element_type=jnp.float32)
        + b_in_ref[...], 0.0)

    # ---- layers (static unroll; L is small and weights are all resident) ----
    for l in range(L):
        # Pre-LN -> fused Q/K/V projection (single wide matmul, head-major lanes).
        xn = _layernorm(x, ln0_g_ref[l], ln0_b_ref[l])
        qkv = (jnp.dot(xn, w_qkv_ref[l], preferred_element_type=jnp.float32)
               + b_qkv_ref[l])                                   # (M, 3D), scale pre-folded into Q

        # Attention: per head (static unroll), batched over B via dot_general batch dims.
        head_outs = []
        for h in range(H):
            q = qkv[:, h * dh:(h + 1) * dh].reshape(B, S, dh)
            k = qkv[:, D + h * dh:D + (h + 1) * dh].reshape(B, S, dh)
            v = qkv[:, 2 * D + h * dh:2 * D + (h + 1) * dh].reshape(B, S, dh)
            s = lax.dot_general(q, k, (((2,), (2,)), ((0,), (0,))),
                                preferred_element_type=jnp.float32)      # (B, S, S)
            p = jnp.exp(s - jnp.max(s, axis=-1, keepdims=True))
            p = p / jnp.sum(p, axis=-1, keepdims=True)                    # exact softmax
            o = lax.dot_general(p, v, (((2,), (1,)), ((0,), (0,))),
                                preferred_element_type=jnp.float32)       # (B, S, dh)
            head_outs.append(o.reshape(M, dh))

        # Out-projection folded across heads into one (M,D)@(D,D) matmul.
        attn = jnp.concatenate(head_outs, axis=-1)                        # (M, D) head-major
        xa = (jnp.dot(attn, w_o_ref[l], preferred_element_type=jnp.float32)
              + b_o_ref[l])

        # LN1 -> FFN (linear0 -> linear1 -> relu), fully fused in vregs.
        xan = _layernorm(xa, ln1_g_ref[l], ln1_b_ref[l])
        f0 = jnp.dot(xan, w_f0_ref[l], preferred_element_type=jnp.float32) + b_f0_ref[l]
        f1 = jnp.dot(f0, w_f1_ref[l], preferred_element_type=jnp.float32) + b_f1_ref[l]
        x = jnp.maximum(f1, 0.0)

    # ---- output projection (x is already ReLU'd, no extra max needed) ----
    # Note: d_out < 128 lanes => one masked store; fine at this size (pad to 128 if it grows).
    out_ref[...] = (jnp.dot(x, w_out_ref[...], preferred_element_type=jnp.float32)
                    + b_out_ref[...]).astype(out_ref.dtype)


# ----------------------------------------------------------------------------- wrapper

def decoder_forward(z, params, head_num):
    """z: (B, S, input_dim) -> (B, S, d_out). Single fused Pallas call, no grid."""
    B, S, input_dim = z.shape
    D = params["w_in"].shape[1]
    L = params["w_q"].shape[0]
    d_out = params["w_out"].shape[1]
    assert D % head_num == 0
    dh = D // head_num
    M = B * S
    scale = 1.0 / float(dh) ** 0.5

    # Pre-fold 1/sqrt(dh) into Q, and pack Q/K/V head-major into one (L, D, 3D) slab.
    def head_major_w(w):   # (L, H, D, dh) -> (L, D, H*dh)
        return jnp.transpose(w, (0, 2, 1, 3)).reshape(L, D, head_num * dh)

    def head_major_b(b):   # (L, H, 1, dh) -> (L, 1, H*dh)
        return jnp.transpose(b, (0, 2, 1, 3)).reshape(L, 1, head_num * dh)

    w_qkv = jnp.concatenate([head_major_w(params["w_q"] * scale),
                             head_major_w(params["w_k"]),
                             head_major_w(params["w_v"])], axis=-1)      # (L, D, 3D)
    b_qkv = jnp.concatenate([head_major_b(params["b_q"] * scale),
                             head_major_b(params["b_k"]),
                             head_major_b(params["b_v"])], axis=-1)      # (L, 1, 3D)
    # Out-proj folded: (L, H, dh, D) -> (L, D, D) with head-major rows.
    w_o_full = params["w_o"].reshape(L, D, D)

    args = [
        z.reshape(M, input_dim).astype(jnp.float32),
        params["w_in"], params["b_in"],
        w_qkv, b_qkv, w_o_full, params["b_o"],
        params["ln0_g"], params["ln0_b"], params["ln1_g"], params["ln1_b"],
        params["w_f0"], params["b_f0"], params["w_f1"], params["b_f1"],
        params["w_out"], params["b_out"],
    ]

    kernel = functools.partial(_decoder_kernel, B=B, S=S, H=head_num, dh=dh, L=L)
    # No grid / no BlockSpecs: every operand is small and lives whole in VMEM.
    out = pl.pallas_call(
        kernel,
        out_shape=jax.ShapeDtypeStruct((M, d_out), jnp.float32),
    )(*args)
    return out.reshape(B, S, d_out)


# ----------------------------------------------------------------------------- params

def init_params(key, input_dim, d_token, n_layers, head_num, ffn_dim, d_out, scale=0.1):
    """Per-layer weights stacked on a leading layer axis; attention in-proj stored
    head-major: w_q[l, h] == in_proj_weight[h*dh:(h+1)*dh, :].T (PyTorch q rows),
    and w_o[l, h] == out_proj.weight[:, h*dh:(h+1)*dh].T."""
    assert d_token % head_num == 0
    dh = d_token // head_num
    ks = iter(jax.random.split(key, 32))

    def nrm(shape):
        return scale * jax.random.normal(next(ks), shape, jnp.float32)

    return {
        "w_in": nrm((input_dim, d_token)), "b_in": nrm((1, d_token)),
        "ln0_g": jnp.ones((n_layers, 1, d_token), jnp.float32),
        "ln0_b": jnp.zeros((n_layers, 1, d_token), jnp.float32),
        "w_q": nrm((n_layers, head_num, d_token, dh)),
        "b_q": nrm((n_layers, head_num, 1, dh)),
        "w_k": nrm((n_layers, head_num, d_token, dh)),
        "b_k": nrm((n_layers, head_num, 1, dh)),
        "w_v": nrm((n_layers, head_num, d_token, dh)),
        "b_v": nrm((n_layers, head_num, 1, dh)),
        "w_o": nrm((n_layers, head_num, dh, d_token)),
        "b_o": nrm((n_layers, 1, d_token)),
        "ln1_g": jnp.ones((n_layers, 1, d_token), jnp.float32),
        "ln1_b": jnp.zeros((n_layers, 1, d_token), jnp.float32),
        "w_f0": nrm((n_layers, d_token, ffn_dim)), "b_f0": nrm((n_layers, 1, ffn_dim)),
        "w_f1": nrm((n_layers, ffn_dim, d_token)), "b_f1": nrm((n_layers, 1, d_token)),
        "w_out": nrm((d_token, d_out)), "b_out": nrm((1, d_out)),
    }


# ----------------------------------------------------------------------------- reference

def reference_forward(z, params, head_num):
    """Pure-JAX (XLA) reference for correctness checking."""
    B, S, _ = z.shape
    D = params["w_in"].shape[1]
    dh = D // head_num
    L = params["w_q"].shape[0]
    scale = 1.0 / float(dh) ** 0.5

    def ln(t, g, b):
        mu = t.mean(-1, keepdims=True)
        var = ((t - mu) ** 2).mean(-1, keepdims=True)
        return (t - mu) / jnp.sqrt(var + 1e-5) * g + b

    x = jnp.maximum(z.reshape(B * S, -1) @ params["w_in"] + params["b_in"], 0.0)
    for l in range(L):
        xn = ln(x, params["ln0_g"][l], params["ln0_b"][l])
        rows_out = []
        for b in range(B):
            sl = slice(b * S, (b + 1) * S)
            acc = jnp.broadcast_to(params["b_o"][l], (S, D))
            for h in range(head_num):
                q = (xn[sl] @ params["w_q"][l, h] + params["b_q"][l, h]) * scale
                k = xn[sl] @ params["w_k"][l, h] + params["b_k"][l, h]
                v = xn[sl] @ params["w_v"][l, h] + params["b_v"][l, h]
                p = jax.nn.softmax(q @ k.T, axis=-1)
                acc = acc + (p @ v) @ params["w_o"][l, h]
            rows_out.append(acc)
        xa = jnp.concatenate(rows_out, axis=0)
        xan = ln(xa, params["ln1_g"][l], params["ln1_b"][l])
        f0 = xan @ params["w_f0"][l] + params["b_f0"][l]
        f1 = f0 @ params["w_f1"][l] + params["b_f1"][l]
        x = jnp.maximum(f1, 0.0)
    out = jnp.maximum(x, 0.0) @ params["w_out"] + params["b_out"]
    return out.reshape(B, S, -1)


# ----------------------------------------------------------------------------- main

if __name__ == "__main__":
    B, S = 2, 8
    input_dim, d_token, n_layers, head_num = 16, 32, 2, 4
    ffn_dim, d_out = 64, 16

    key = jax.random.PRNGKey(0)
    k_param, k_data = jax.random.split(key)
    params = init_params(k_param, input_dim, d_token, n_layers, head_num, ffn_dim, d_out)
    z = jax.random.normal(k_data, (B, S, input_dim), jnp.float32)

    out = jax.block_until_ready(decoder_forward(z, params, head_num))
    assert out.shape == (B, S, d_out)
    assert bool(jnp.all(jnp.isfinite(out)))

    ref = jax.block_until_ready(reference_forward(z, params, head_num))
    max_err = float(jnp.max(jnp.abs(out - ref)))
    # exact softmax divide now => tight tolerance vs the XLA reference
    assert bool(jnp.allclose(out, ref, rtol=1e-3, atol=1e-4)), f"max abs err {max_err}"

    print("KERNEL_OK")
</pallas_src>

<mosaic_0001>
module attributes {stable_mosaic.version = 11 : i64} {
  func.func @_decoder_kernel(%arg0: memref<16x16xf32, #tpu.memory_space<vmem>>, %arg1: memref<16x32xf32, #tpu.memory_space<vmem>>, %arg2: memref<1x32xf32, #tpu.memory_space<vmem>>, %arg3: memref<2x32x96xf32, #tpu.memory_space<vmem>>, %arg4: memref<2x1x96xf32, #tpu.memory_space<vmem>>, %arg5: memref<2x32x32xf32, #tpu.memory_space<vmem>>, %arg6: memref<2x1x32xf32, #tpu.memory_space<vmem>>, %arg7: memref<2x1x32xf32, #tpu.memory_space<vmem>>, %arg8: memref<2x1x32xf32, #tpu.memory_space<vmem>>, %arg9: memref<2x1x32xf32, #tpu.memory_space<vmem>>, %arg10: memref<2x1x32xf32, #tpu.memory_space<vmem>>, %arg11: memref<2x32x64xf32, #tpu.memory_space<vmem>>, %arg12: memref<2x1x64xf32, #tpu.memory_space<vmem>>, %arg13: memref<2x64x32xf32, #tpu.memory_space<vmem>>, %arg14: memref<2x1x32xf32, #tpu.memory_space<vmem>>, %arg15: memref<32x16xf32, #tpu.memory_space<vmem>>, %arg16: memref<1x16xf32, #tpu.memory_space<vmem>>, %arg17: memref<16x16xf32, #tpu.memory_space<vmem>>) attributes {dimension_semantics = [], scalar_prefetch = 0 : i64, scratch_operands = 0 : i64, tpu.core_type = #tpu.core_type<tc>} {
    %c0 = arith.constant 0 : index
    %c0_0 = arith.constant 0 : index
    %0 = vector.load %arg0[%c0, %c0_0] : memref<16x16xf32, #tpu.memory_space<vmem>>, vector<16x16xf32>
    %c0_1 = arith.constant 0 : index
    %c0_2 = arith.constant 0 : index
    %1 = vector.load %arg1[%c0_1, %c0_2] : memref<16x32xf32, #tpu.memory_space<vmem>>, vector<16x32xf32>
    %cst = arith.constant dense<0.000000e+00> : vector<16x32xf32>
    %2 = tpu.matmul %0, %1, %cst {dimension_numbers = #tpu.dot_dimension_numbers<[1], [0], [0], [1], [0, 0, 1, 1], [], []>} : vector<16x16xf32>, vector<16x32xf32>, vector<16x32xf32> -> vector<16x32xf32>
    %c0_3 = arith.constant 0 : index
    %c0_4 = arith.constant 0 : index
    %3 = vector.load %arg2[%c0_3, %c0_4] : memref<1x32xf32, #tpu.memory_space<vmem>>, vector<1x32xf32>
    %4 = vector.broadcast %3 : vector<1x32xf32> to vector<16x32xf32>
    %5 = arith.addf %2, %4 : vector<16x32xf32>
    %cst_5 = arith.constant 0.000000e+00 : f32
    %6 = vector.broadcast %cst_5 : f32 to vector<16x32xf32>
    %7 = arith.maximumf %5, %6 : vector<16x32xf32>
    %c0_6 = arith.constant 0 : index
    %c0_7 = arith.constant 0 : index
    %c0_8 = arith.constant 0 : index
    %8 = vector.load %arg7[%c0_6, %c0_7, %c0_8] : memref<2x1x32xf32, #tpu.memory_space<vmem>>, vector<1x1x32xf32>
    %9 = vector.shape_cast %8 : vector<1x1x32xf32> to vector<1x32xf32>
    %c0_9 = arith.constant 0 : index
    %c0_10 = arith.constant 0 : index
    %c0_11 = arith.constant 0 : index
    %10 = vector.load %arg8[%c0_9, %c0_10, %c0_11] : memref<2x1x32xf32, #tpu.memory_space<vmem>>, vector<1x1x32xf32>
    %11 = vector.shape_cast %10 : vector<1x1x32xf32> to vector<1x32xf32>
    %cst_12 = arith.constant dense<0.000000e+00> : vector<16xf32>
    %12 = vector.multi_reduction <add>, %7, %cst_12 [1] : vector<16x32xf32> to vector<16xf32>
    %13 = vector.shape_cast %12 : vector<16xf32> to vector<16x1xf32>
    %cst_13 = arith.constant 3.200000e+01 : f32
    %14 = vector.broadcast %cst_13 : f32 to vector<16x1xf32>
    %15 = arith.divf %13, %14 : vector<16x1xf32>
    %16 = vector.broadcast %15 : vector<16x1xf32> to vector<16x32xf32>
    %17 = arith.subf %7, %16 : vector<16x32xf32>
    %18 = arith.mulf %17, %17 : vector<16x32xf32>
    %cst_14 = arith.constant dense<0.000000e+00> : vector<16xf32>
    %19 = vector.multi_reduction <add>, %18, %cst_14 [1] : vector<16x32xf32> to vector<16xf32>
    %20 = vector.shape_cast %19 : vector<16xf32> to vector<16x1xf32>
    %cst_15 = arith.constant 3.200000e+01 : f32
    %21 = vector.broadcast %cst_15 : f32 to vector<16x1xf32>
    %22 = arith.divf %20, %21 : vector<16x1xf32>
    %23 = vector.broadcast %15 : vector<16x1xf32> to vector<16x32xf32>
    %24 = arith.subf %7, %23 : vector<16x32xf32>
    %cst_16 = arith.constant 9.99999974E-6 : f32
    %25 = vector.broadcast %cst_16 : f32 to vector<16x1xf32>
    %26 = arith.addf %22, %25 : vector<16x1xf32>
    %27 = math.rsqrt %26 : vector<16x1xf32>
    %28 = vector.broadcast %27 : vector<16x1xf32> to vector<16x32xf32>
    %29 = arith.mulf %24, %28 : vector<16x32xf32>
    %30 = vector.broadcast %9 : vector<1x32xf32> to vector<16x32xf32>
    %31 = arith.mulf %29, %30 : vector<16x32xf32>
    %32 = vector.broadcast %11 : vector<1x32xf32> to vector<16x32xf32>
    %33 = arith.addf %31, %32 : vector<16x32xf32>
    %c0_17 = arith.constant 0 : index
    %c0_18 = arith.constant 0 : index
    %c0_19 = arith.constant 0 : index
    %34 = vector.load %arg3[%c0_17, %c0_18, %c0_19] : memref<2x32x96xf32, #tpu.memory_space<vmem>>, vector<1x32x96xf32>
    %35 = vector.shape_cast %34 : vector<1x32x96xf32> to vector<32x96xf32>
    %cst_20 = arith.constant dense<0.000000e+00> : vector<16x96xf32>
    %36 = tpu.matmul %33, %35, %cst_20 {dimension_numbers = #tpu.dot_dimension_numbers<[1], [0], [0], [1], [0, 0, 1, 1], [], []>} : vector<16x32xf32>, vector<32x96xf32>, vector<16x96xf32> -> vector<16x96xf32>
    %c0_21 = arith.constant 0 : index
    %c0_22 = arith.constant 0 : index
    %c0_23 = arith.constant 0 : index
    %37 = vector.load %arg4[%c0_21, %c0_22, %c0_23] : memref<2x1x96xf32, #tpu.memory_space<vmem>>, vector<1x1x96xf32>
    %38 = vector.shape_cast %37 : vector<1x1x96xf32> to vector<1x96xf32>
    %39 = vector.broadcast %38 : vector<1x96xf32> to vector<16x96xf32>
    %40 = arith.addf %36, %39 : vector<16x96xf32>
    %41 = vector.extract_strided_slice %40 {offsets = [0, 0], sizes = [16, 8], strides = [1, 1]} : vector<16x96xf32> to vector<16x8xf32>
    %42 = vector.shape_cast %41 : vector<16x8xf32> to vector<2x8x8xf32>
    %43 = vector.extract_strided_slice %40 {offsets = [0, 32], sizes = [16, 8], strides = [1, 1]} : vector<16x96xf32> to vector<16x8xf32>
    %44 = vector.shape_cast %43 : vector<16x8xf32> to vector<2x8x8xf32>
    %45 = vector.extract_strided_slice %40 {offsets = [0, 64], sizes = [16, 8], strides = [1, 1]} : vector<16x96xf32> to vector<16x8xf32>
    %46 = vector.shape_cast %45 : vector<16x8xf32> to vector<2x8x8xf32>
    %cst_24 = arith.constant dense<0.000000e+00> : vector<2x8x8xf32>
    %47 = tpu.matmul %42, %44, %cst_24 {dimension_numbers = #tpu.dot_dimension_numbers<[2], [2], [1], [1], [0, 0, 0, 1, 1, 1], [0], [0]>} : vector<2x8x8xf32>, vector<2x8x8xf32>, vector<2x8x8xf32> -> vector<2x8x8xf32>
    %cst_25 = arith.constant dense<0xFF800000> : vector<2x8xf32>
    %48 = vector.multi_reduction <maximumf>, %47, %cst_25 [2] : vector<2x8x8xf32> to vector<2x8xf32>
    %49 = vector.shape_cast %48 : vector<2x8xf32> to vector<2x8x1xf32>
    %50 = vector.broadcast %49 : vector<2x8x1xf32> to vector<2x8x8xf32>
    %51 = arith.subf %47, %50 : vector<2x8x8xf32>
    %52 = math.exp %51 : vector<2x8x8xf32>
    %cst_26 = arith.constant dense<0.000000e+00> : vector<2x8xf32>
    %53 = vector.multi_reduction <add>, %52, %cst_26 [2] : vector<2x8x8xf32> to vector<2x8xf32>
    %54 = vector.shape_cast %53 : vector<2x8xf32> to vector<2x8x1xf32>
    %55 = vector.broadcast %54 : vector<2x8x1xf32> to vector<2x8x8xf32>
    %56 = arith.divf %52, %55 : vector<2x8x8xf32>
    %cst_27 = arith.constant dense<0.000000e+00> : vector<2x8x8xf32>
    %57 = tpu.matmul %56, %46, %cst_27 {dimension_numbers = #tpu.dot_dimension_numbers<[2], [1], [1], [2], [0, 0, 0, 1, 1, 2], [0], [0]>} : vector<2x8x8xf32>, vector<2x8x8xf32>, vector<2x8x8xf32> -> vector<2x8x8xf32>
    %58 = vector.shape_cast %57 : vector<2x8x8xf32> to vector<16x8xf32>
    %59 = vector.extract_strided_slice %40 {offsets = [0, 8], sizes = [16, 8], strides = [1, 1]} : vector<16x96xf32> to vector<16x8xf32>
    %60 = vector.shape_cast %59 : vector<16x8xf32> to vector<2x8x8xf32>
    %61 = vector.extract_strided_slice %40 {offsets = [0, 40], sizes = [16, 8], strides = [1, 1]} : vector<16x96xf32> to vector<16x8xf32>
    %62 = vector.shape_cast %61 : vector<16x8xf32> to vector<2x8x8xf32>
    %63 = vector.extract_strided_slice %40 {offsets = [0, 72], sizes = [16, 8], strides = [1, 1]} : vector<16x96xf32> to vector<16x8xf32>
    %64 = vector.shape_cast %63 : vector<16x8xf32> to vector<2x8x8xf32>
    %cst_28 = arith.constant dense<0.000000e+00> : vector<2x8x8xf32>
    %65 = tpu.matmul %60, %62, %cst_28 {dimension_numbers = #tpu.dot_dimension_numbers<[2], [2], [1], [1], [0, 0, 0, 1, 1, 1], [0], [0]>} : vector<2x8x8xf32>, vector<2x8x8xf32>, vector<2x8x8xf32> -> vector<2x8x8xf32>
    %cst_29 = arith.constant dense<0xFF800000> : vector<2x8xf32>
    %66 = vector.multi_reduction <maximumf>, %65, %cst_29 [2] : vector<2x8x8xf32> to vector<2x8xf32>
    %67 = vector.shape_cast %66 : vector<2x8xf32> to vector<2x8x1xf32>
    %68 = vector.broadcast %67 : vector<2x8x1xf32> to vector<2x8x8xf32>
    %69 = arith.subf %65, %68 : vector<2x8x8xf32>
    %70 = math.exp %69 : vector<2x8x8xf32>
    %cst_30 = arith.constant dense<0.000000e+00> : vector<2x8xf32>
    %71 = vector.multi_reduction <add>, %70, %cst_30 [2] : vector<2x8x8xf32> to vector<2x8xf32>
    %72 = vector.shape_cast %71 : vector<2x8xf32> to vector<2x8x1xf32>
    %73 = vector.broadcast %72 : vector<2x8x1xf32> to vector<2x8x8xf32>
    %74 = arith.divf %70, %73 : vector<2x8x8xf32>
    %cst_31 = arith.constant dense<0.000000e+00> : vector<2x8x8xf32>
    %75 = tpu.matmul %74, %64, %cst_31 {dimension_numbers = #tpu.dot_dimension_numbers<[2], [1], [1], [2], [0, 0, 0, 1, 1, 2], [0], [0]>} : vector<2x8x8xf32>, vector<2x8x8xf32>, vector<2x8x8xf32> -> vector<2x8x8xf32>
    %76 = vector.shape_cast %75 : vector<2x8x8xf32> to vector<16x8xf32>
    %77 = vector.extract_strided_slice %40 {offsets = [0, 16], sizes = [16, 8], strides = [1, 1]} : vector<16x96xf32> to vector<16x8xf32>
    %78 = vector.shape_cast %77 : vector<16x8xf32> to vector<2x8x8xf32>
    %79 = vector.extract_strided_slice %40 {offsets = [0, 48], sizes = [16, 8], strides = [1, 1]} : vector<16x96xf32> to vector<16x8xf32>
    %80 = vector.shape_cast %79 : vector<16x8xf32> to vector<2x8x8xf32>
    %81 = vector.extract_strided_slice %40 {offsets = [0, 80], sizes = [16, 8], strides = [1, 1]} : vector<16x96xf32> to vector<16x8xf32>
    %82 = vector.shape_cast %81 : vector<16x8xf32> to vector<2x8x8xf32>
    %cst_32 = arith.constant dense<0.000000e+00> : vector<2x8x8xf32>
    %83 = tpu.matmul %78, %80, %cst_32 {dimension_numbers = #tpu.dot_dimension_numbers<[2], [2], [1], [1], [0, 0, 0, 1, 1, 1], [0], [0]>} : vector<2x8x8xf32>, vector<2x8x8xf32>, vector<2x8x8xf32> -> vector<2x8x8xf32>
    %cst_33 = arith.constant dense<0xFF800000> : vector<2x8xf32>
    %84 = vector.multi_reduction <maximumf>, %83, %cst_33 [2] : vector<2x8x8xf32> to vector<2x8xf32>
    %85 = vector.shape_cast %84 : vector<2x8xf32> to vector<2x8x1xf32>
    %86 = vector.broadcast %85 : vector<2x8x1xf32> to vector<2x8x8xf32>
    %87 = arith.subf %83, %86 : vector<2x8x8xf32>
    %88 = math.exp %87 : vector<2x8x8xf32>
    %cst_34 = arith.constant dense<0.000000e+00> : vector<2x8xf32>
    %89 = vector.multi_reduction <add>, %88, %cst_34 [2] : vector<2x8x8xf32> to vector<2x8xf32>
    %90 = vector.shape_cast %89 : vector<2x8xf32> to vector<2x8x1xf32>
    %91 = vector.broadcast %90 : vector<2x8x1xf32> to vector<2x8x8xf32>
    %92 = arith.divf %88, %91 : vector<2x8x8xf32>
    %cst_35 = arith.constant dense<0.000000e+00> : vector<2x8x8xf32>
    %93 = tpu.matmul %92, %82, %cst_35 {dimension_numbers = #tpu.dot_dimension_numbers<[2], [1], [1], [2], [0, 0, 0, 1, 1, 2], [0], [0]>} : vector<2x8x8xf32>, vector<2x8x8xf32>, vector<2x8x8xf32> -> vector<2x8x8xf32>
    %94 = vector.shape_cast %93 : vector<2x8x8xf32> to vector<16x8xf32>
    %95 = vector.extract_strided_slice %40 {offsets = [0, 24], sizes = [16, 8], strides = [1, 1]} : vector<16x96xf32> to vector<16x8xf32>
    %96 = vector.shape_cast %95 : vector<16x8xf32> to vector<2x8x8xf32>
    %97 = vector.extract_strided_slice %40 {offsets = [0, 56], sizes = [16, 8], strides = [1, 1]} : vector<16x96xf32> to vector<16x8xf32>
    %98 = vector.shape_cast %97 : vector<16x8xf32> to vector<2x8x8xf32>
    %99 = vector.extract_strided_slice %40 {offsets = [0, 88], sizes = [16, 8], strides = [1, 1]} : vector<16x96xf32> to vector<16x8xf32>
    %100 = vector.shape_cast %99 : vector<16x8xf32> to vector<2x8x8xf32>
    %cst_36 = arith.constant dense<0.000000e+00> : vector<2x8x8xf32>
    %101 = tpu.matmul %96, %98, %cst_36 {dimension_numbers = #tpu.dot_dimension_numbers<[2], [2], [1], [1], [0, 0, 0, 1, 1, 1], [0], [0]>} : vector<2x8x8xf32>, vector<2x8x8xf32>, vector<2x8x8xf32> -> vector<2x8x8xf32>
    %cst_37 = arith.constant dense<0xFF800000> : vector<2x8xf32>
    %102 = vector.multi_reduction <maximumf>, %101, %cst_37 [2] : vector<2x8x8xf32> to vector<2x8xf32>
    %103 = vector.shape_cast %102 : vector<2x8xf32> to vector<2x8x1xf32>
    %104 = vector.broadcast %103 : vector<2x8x1xf32> to vector<2x8x8xf32>
    %105 = arith.subf %101, %104 : vector<2x8x8xf32>
    %106 = math.exp %105 : vector<2x8x8xf32>
    %cst_38 = arith.constant dense<0.000000e+00> : vector<2x8xf32>
    %107 = vector.multi_reduction <add>, %106, %cst_38 [2] : vector<2x8x8xf32> to vector<2x8xf32>
    %108 = vector.shape_cast %107 : vector<2x8xf32> to vector<2x8x1xf32>
    %109 = vector.broadcast %108 : vector<2x8x1xf32> to vector<2x8x8xf32>
    %110 = arith.divf %106, %109 : vector<2x8x8xf32>
    %cst_39 = arith.constant dense<0.000000e+00> : vector<2x8x8xf32>
    %111 = tpu.matmul %110, %100, %cst_39 {dimension_numbers = #tpu.dot_dimension_numbers<[2], [1], [1], [2], [0, 0, 0, 1, 1, 2], [0], [0]>} : vector<2x8x8xf32>, vector<2x8x8xf32>, vector<2x8x8xf32> -> vector<2x8x8xf32>
    %112 = vector.shape_cast %111 : vector<2x8x8xf32> to vector<16x8xf32>
    %113 = tpu.concatenate %58, %76, %94, %112 in 1 : vector<16x8xf32>, vector<16x8xf32>, vector<16x8xf32>, vector<16x8xf32> -> vector<16x32xf32>
    %c0_40 = arith.constant 0 : index
    %c0_41 = arith.constant 0 : index
    %c0_42 = arith.constant 0 : index
    %114 = vector.load %arg5[%c0_40, %c0_41, %c0_42] : memref<2x32x32xf32, #tpu.memory_space<vmem>>, vector<1x32x32xf32>
    %115 = vector.shape_cast %114 : vector<1x32x32xf32> to vector<32x32xf32>
    %cst_43 = arith.constant dense<0.000000e+00> : vector<16x32xf32>
    %116 = tpu.matmul %113, %115, %cst_43 {dimension_numbers = #tpu.dot_dimension_numbers<[1], [0], [0], [1], [0, 0, 1, 1], [], []>} : vector<16x32xf32>, vector<32x32xf32>, vector<16x32xf32> -> vector<16x32xf32>
    %c0_44 = arith.constant 0 : index
    %c0_45 = arith.constant 0 : index
    %c0_46 = arith.constant 0 : index
    %117 = vector.load %arg6[%c0_44, %c0_45, %c0_46] : memref<2x1x32xf32, #tpu.memory_space<vmem>>, vector<1x1x32xf32>
    %118 = vector.shape_cast %117 : vector<1x1x32xf32> to vector<1x32xf32>
    %119 = vector.broadcast %118 : vector<1x32xf32> to vector<16x32xf32>
    %120 = arith.addf %116, %119 : vector<16x32xf32>
    %c0_47 = arith.constant 0 : index
    %c0_48 = arith.constant 0 : index
    %c0_49 = arith.constant 0 : index
    %121 = vector.load %arg9[%c0_47, %c0_48, %c0_49] : memref<2x1x32xf32, #tpu.memory_space<vmem>>, vector<1x1x32xf32>
    %122 = vector.shape_cast %121 : vector<1x1x32xf32> to vector<1x32xf32>
    %c0_50 = arith.constant 0 : index
    %c0_51 = arith.constant 0 : index
    %c0_52 = arith.constant 0 : index
    %123 = vector.load %arg10[%c0_50, %c0_51, %c0_52] : memref<2x1x32xf32, #tpu.memory_space<vmem>>, vector<1x1x32xf32>
    %124 = vector.shape_cast %123 : vector<1x1x32xf32> to vector<1x32xf32>
    %cst_53 = arith.constant dense<0.000000e+00> : vector<16xf32>
    %125 = vector.multi_reduction <add>, %120, %cst_53 [1] : vector<16x32xf32> to vector<16xf32>
    %126 = vector.shape_cast %125 : vector<16xf32> to vector<16x1xf32>
    %cst_54 = arith.constant 3.200000e+01 : f32
    %127 = vector.broadcast %cst_54 : f32 to vector<16x1xf32>
    %128 = arith.divf %126, %127 : vector<16x1xf32>
    %129 = vector.broadcast %128 : vector<16x1xf32> to vector<16x32xf32>
    %130 = arith.subf %120, %129 : vector<16x32xf32>
    %131 = arith.mulf %130, %130 : vector<16x32xf32>
    %cst_55 = arith.constant dense<0.000000e+00> : vector<16xf32>
    %132 = vector.multi_reduction <add>, %131, %cst_55 [1] : vector<16x32xf32> to vector<16xf32>
    %133 = vector.shape_cast %132 : vector<16xf32> to vector<16x1xf32>
    %cst_56 = arith.constant 3.200000e+01 : f32
    %134 = vector.broadcast %cst_56 : f32 to vector<16x1xf32>
    %135 = arith.divf %133, %134 : vector<16x1xf32>
    %136 = vector.broadcast %128 : vector<16x1xf32> to vector<16x32xf32>
    %137 = arith.subf %120, %136 : vector<16x32xf32>
    %cst_57 = arith.constant 9.99999974E-6 : f32
    %138 = vector.broadcast %cst_57 : f32 to vector<16x1xf32>
    %139 = arith.addf %135, %138 : vector<16x1xf32>
    %140 = math.rsqrt %139 : vector<16x1xf32>
    %141 = vector.broadcast %140 : vector<16x1xf32> to vector<16x32xf32>
    %142 = arith.mulf %137, %141 : vector<16x32xf32>
    %143 = vector.broadcast %122 : vector<1x32xf32> to vector<16x32xf32>
    %144 = arith.mulf %142, %143 : vector<16x32xf32>
    %145 = vector.broadcast %124 : vector<1x32xf32> to vector<16x32xf32>
    %146 = arith.addf %144, %145 : vector<16x32xf32>
    %c0_58 = arith.constant 0 : index
    %c0_59 = arith.constant 0 : index
    %c0_60 = arith.constant 0 : index
    %147 = vector.load %arg11[%c0_58, %c0_59, %c0_60] : memref<2x32x64xf32, #tpu.memory_space<vmem>>, vector<1x32x64xf32>
    %148 = vector.shape_cast %147 : vector<1x32x64xf32> to vector<32x64xf32>
    %cst_61 = arith.constant dense<0.000000e+00> : vector<16x64xf32>
    %149 = tpu.matmul %146, %148, %cst_61 {dimension_numbers = #tpu.dot_dimension_numbers<[1], [0], [0], [1], [0, 0, 1, 1], [], []>} : vector<16x32xf32>, vector<32x64xf32>, vector<16x64xf32> -> vector<16x64xf32>
    %c0_62 = arith.constant 0 : index
    %c0_63 = arith.constant 0 : index
    %c0_64 = arith.constant 0 : index
    %150 = vector.load %arg12[%c0_62, %c0_63, %c0_64] : memref<2x1x64xf32, #tpu.memory_space<vmem>>, vector<1x1x64xf32>
    %151 = vector.shape_cast %150 : vector<1x1x64xf32> to vector<1x64xf32>
    %152 = vector.broadcast %151 : vector<1x64xf32> to vector<16x64xf32>
    %153 = arith.addf %149, %152 : vector<16x64xf32>
    %c0_65 = arith.constant 0 : index
    %c0_66 = arith.constant 0 : index
    %c0_67 = arith.constant 0 : index
    %154 = vector.load %arg13[%c0_65, %c0_66, %c0_67] : memref<2x64x32xf32, #tpu.memory_space<vmem>>, vector<1x64x32xf32>
    %155 = vector.shape_cast %154 : vector<1x64x32xf32> to vector<64x32xf32>
    %cst_68 = arith.constant dense<0.000000e+00> : vector<16x32xf32>
    %156 = tpu.matmul %153, %155, %cst_68 {dimension_numbers = #tpu.dot_dimension_numbers<[1], [0], [0], [1], [0, 0, 1, 1], [], []>} : vector<16x64xf32>, vector<64x32xf32>, vector<16x32xf32> -> vector<16x32xf32>
    %c0_69 = arith.constant 0 : index
    %c0_70 = arith.constant 0 : index
    %c0_71 = arith.constant 0 : index
    %157 = vector.load %arg14[%c0_69, %c0_70, %c0_71] : memref<2x1x32xf32, #tpu.memory_space<vmem>>, vector<1x1x32xf32>
    %158 = vector.shape_cast %157 : vector<1x1x32xf32> to vector<1x32xf32>
    %159 = vector.broadcast %158 : vector<1x32xf32> to vector<16x32xf32>
    %160 = arith.addf %156, %159 : vector<16x32xf32>
    %cst_72 = arith.constant 0.000000e+00 : f32
    %161 = vector.broadcast %cst_72 : f32 to vector<16x32xf32>
    %162 = arith.maximumf %160, %161 : vector<16x32xf32>
    %c1 = arith.constant 1 : index
    %c0_73 = arith.constant 0 : index
    %c0_74 = arith.constant 0 : index
    %163 = vector.load %arg7[%c1, %c0_73, %c0_74] : memref<2x1x32xf32, #tpu.memory_space<vmem>>, vector<1x1x32xf32>
    %164 = vector.shape_cast %163 : vector<1x1x32xf32> to vector<1x32xf32>
    %c1_75 = arith.constant 1 : index
    %c0_76 = arith.constant 0 : index
    %c0_77 = arith.constant 0 : index
    %165 = vector.load %arg8[%c1_75, %c0_76, %c0_77] : memref<2x1x32xf32, #tpu.memory_space<vmem>>, vector<1x1x32xf32>
    %166 = vector.shape_cast %165 : vector<1x1x32xf32> to vector<1x32xf32>
    %cst_78 = arith.constant dense<0.000000e+00> : vector<16xf32>
    %167 = vector.multi_reduction <add>, %162, %cst_78 [1] : vector<16x32xf32> to vector<16xf32>
    %168 = vector.shape_cast %167 : vector<16xf32> to vector<16x1xf32>
    %cst_79 = arith.constant 3.200000e+01 : f32
    %169 = vector.broadcast %cst_79 : f32 to vector<16x1xf32>
    %170 = arith.divf %168, %169 : vector<16x1xf32>
    %171 = vector.broadcast %170 : vector<16x1xf32> to vector<16x32xf32>
    %172 = arith.subf %162, %171 : vector<16x32xf32>
    %173 = arith.mulf %172, %172 : vector<16x32xf32>
    %cst_80 = arith.constant dense<0.000000e+00> : vector<16xf32>
    %174 = vector.multi_reduction <add>, %173, %cst_80 [1] : vector<16x32xf32> to vector<16xf32>
    %175 = vector.shape_cast %174 : vector<16xf32> to vector<16x1xf32>
    %cst_81 = arith.constant 3.200000e+01 : f32
    %176 = vector.broadcast %cst_81 : f32 to vector<16x1xf32>
    %177 = arith.divf %175, %176 : vector<16x1xf32>
    %178 = vector.broadcast %170 : vector<16x1xf32> to vector<16x32xf32>
    %179 = arith.subf %162, %178 : vector<16x32xf32>
    %cst_82 = arith.constant 9.99999974E-6 : f32
    %180 = vector.broadcast %cst_82 : f32 to vector<16x1xf32>
    %181 = arith.addf %177, %180 : vector<16x1xf32>
    %182 = math.rsqrt %181 : vector<16x1xf32>
    %183 = vector.broadcast %182 : vector<16x1xf32> to vector<16x32xf32>
    %184 = arith.mulf %179, %183 : vector<16x32xf32>
    %185 = vector.broadcast %164 : vector<1x32xf32> to vector<16x32xf32>
    %186 = arith.mulf %184, %185 : vector<16x32xf32>
    %187 = vector.broadcast %166 : vector<1x32xf32> to vector<16x32xf32>
    %188 = arith.addf %186, %187 : vector<16x32xf32>
    %c1_83 = arith.constant 1 : index
    %c0_84 = arith.constant 0 : index
    %c0_85 = arith.constant 0 : index
    %189 = vector.load %arg3[%c1_83, %c0_84, %c0_85] : memref<2x32x96xf32, #tpu.memory_space<vmem>>, vector<1x32x96xf32>
    %190 = vector.shape_cast %189 : vector<1x32x96xf32> to vector<32x96xf32>
    %cst_86 = arith.constant dense<0.000000e+00> : vector<16x96xf32>
    %191 = tpu.matmul %188, %190, %cst_86 {dimension_numbers = #tpu.dot_dimension_numbers<[1], [0], [0], [1], [0, 0, 1, 1], [], []>} : vector<16x32xf32>, vector<32x96xf32>, vector<16x96xf32> -> vector<16x96xf32>
    %c1_87 = arith.constant 1 : index
    %c0_88 = arith.constant 0 : index
    %c0_89 = arith.constant 0 : index
    %192 = vector.load %arg4[%c1_87, %c0_88, %c0_89] : memref<2x1x96xf32, #tpu.memory_space<vmem>>, vector<1x1x96xf32>
    %193 = vector.shape_cast %192 : vector<1x1x96xf32> to vector<1x96xf32>
    %194 = vector.broadcast %193 : vector<1x96xf32> to vector<16x96xf32>
    %195 = arith.addf %191, %194 : vector<16x96xf32>
    %196 = vector.extract_strided_slice %195 {offsets = [0, 0], sizes = [16, 8], strides = [1, 1]} : vector<16x96xf32> to vector<16x8xf32>
    %197 = vector.shape_cast %196 : vector<16x8xf32> to vector<2x8x8xf32>
    %198 = vector.extract_strided_slice %195 {offsets = [0, 32], sizes = [16, 8], strides = [1, 1]} : vector<16x96xf32> to vector<16x8xf32>
    %199 = vector.shape_cast %198 : vector<16x8xf32> to vector<2x8x8xf32>
    %200 = vector.extract_strided_slice %195 {offsets = [0, 64], sizes = [16, 8], strides = [1, 1]} : vector<16x96xf32> to vector<16x8xf32>
    %201 = vector.shape_cast %200 : vector<16x8xf32> to vector<2x8x8xf32>
    %cst_90 = arith.constant dense<0.000000e+00> : vector<2x8x8xf32>
    %202 = tpu.matmul %197, %199, %cst_90 {dimension_numbers = #tpu.dot_dimension_numbers<[2], [2], [1], [1], [0, 0, 0, 1, 1, 1], [0], [0]>} : vector<2x8x8xf32>, vector<2x8x8xf32>, vector<2x8x8xf32> -> vector<2x8x8xf32>
    %cst_91 = arith.constant dense<0xFF800000> : vector<2x8xf32>
    %203 = vector.multi_reduction <maximumf>, %202, %cst_91 [2] : vector<2x8x8xf32> to vector<2x8xf32>
    %204 = vector.shape_cast %203 : vector<2x8xf32> to vector<2x8x1xf32>
    %205 = vector.broadcast %204 : vector<2x8x1xf32> to vector<2x8x8xf32>
    %206 = arith.subf %202, %205 : vector<2x8x8xf32>
    %207 = math.exp %206 : vector<2x8x8xf32>
    %cst_92 = arith.constant dense<0.000000e+00> : vector<2x8xf32>
    %208 = vector.multi_reduction <add>, %207, %cst_92 [2] : vector<2x8x8xf32> to vector<2x8xf32>
    %209 = vector.shape_cast %208 : vector<2x8xf32> to vector<2x8x1xf32>
    %210 = vector.broadcast %209 : vector<2x8x1xf32> to vector<2x8x8xf32>
    %211 = arith.divf %207, %210 : vector<2x8x8xf32>
    %cst_93 = arith.constant dense<0.000000e+00> : vector<2x8x8xf32>
    %212 = tpu.matmul %211, %201, %cst_93 {dimension_numbers = #tpu.dot_dimension_numbers<[2], [1], [1], [2], [0, 0, 0, 1, 1, 2], [0], [0]>} : vector<2x8x8xf32>, vector<2x8x8xf32>, vector<2x8x8xf32> -> vector<2x8x8xf32>
    %213 = vector.shape_cast %212 : vector<2x8x8xf32> to vector<16x8xf32>
    %214 = vector.extract_strided_slice %195 {offsets = [0, 8], sizes = [16, 8], strides = [1, 1]} : vector<16x96xf32> to vector<16x8xf32>
    %215 = vector.shape_cast %214 : vector<16x8xf32> to vector<2x8x8xf32>
    %216 = vector.extract_strided_slice %195 {offsets = [0, 40], sizes = [16, 8], strides = [1, 1]} : vector<16x96xf32> to vector<16x8xf32>
    %217 = vector.shape_cast %216 : vector<16x8xf32> to vector<2x8x8xf32>
    %218 = vector.extract_strided_slice %195 {offsets = [0, 72], sizes = [16, 8], strides = [1, 1]} : vector<16x96xf32> to vector<16x8xf32>
    %219 = vector.shape_cast %218 : vector<16x8xf32> to vector<2x8x8xf32>
    %cst_94 = arith.constant dense<0.000000e+00> : vector<2x8x8xf32>
    %220 = tpu.matmul %215, %217, %cst_94 {dimension_numbers = #tpu.dot_dimension_numbers<[2], [2], [1], [1], [0, 0, 0, 1, 1, 1], [0], [0]>} : vector<2x8x8xf32>, vector<2x8x8xf32>, vector<2x8x8xf32> -> vector<2x8x8xf32>
    %cst_95 = arith.constant dense<0xFF800000> : vector<2x8xf32>
    %221 = vector.multi_reduction <maximumf>, %220, %cst_95 [2] : vector<2x8x8xf32> to vector<2x8xf32>
    %222 = vector.shape_cast %221 : vector<2x8xf32> to vector<2x8x1xf32>
    %223 = vector.broadcast %222 : vector<2x8x1xf32> to vector<2x8x8xf32>
    %224 = arith.subf %220, %223 : vector<2x8x8xf32>
    %225 = math.exp %224 : vector<2x8x8xf32>
    %cst_96 = arith.constant dense<0.000000e+00> : vector<2x8xf32>
    %226 = vector.multi_reduction <add>, %225, %cst_96 [2] : vector<2x8x8xf32> to vector<2x8xf32>
    %227 = vector.shape_cast %226 : vector<2x8xf32> to vector<2x8x1xf32>
    %228 = vector.broadcast %227 : vector<2x8x1xf32> to vector<2x8x8xf32>
    %229 = arith.divf %225, %228 : vector<2x8x8xf32>
    %cst_97 = arith.constant dense<0.000000e+00> : vector<2x8x8xf32>
    %230 = tpu.matmul %229, %219, %cst_97 {dimension_numbers = #tpu.dot_dimension_numbers<[2], [1], [1], [2], [0, 0, 0, 1, 1, 2], [0], [0]>} : vector<2x8x8xf32>, vector<2x8x8xf32>, vector<2x8x8xf32> -> vector<2x8x8xf32>
    %231 = vector.shape_cast %230 : vector<2x8x8xf32> to vector<16x8xf32>
    %232 = vector.extract_strided_slice %195 {offsets = [0, 16], sizes = [16, 8], strides = [1, 1]} : vector<16x96xf32> to vector<16x8xf32>
    %233 = vector.shape_cast %232 : vector<16x8xf32> to vector<2x8x8xf32>
    %234 = vector.extract_strided_slice %195 {offsets = [0, 48], sizes = [16, 8], strides = [1, 1]} : vector<16x96xf32> to vector<16x8xf32>
    %235 = vector.shape_cast %234 : vector<16x8xf32> to vector<2x8x8xf32>
    %236 = vector.extract_strided_slice %195 {offsets = [0, 80], sizes = [16, 8], strides = [1, 1]} : vector<16x96xf32> to vector<16x8xf32>
    %237 = vector.shape_cast %236 : vector<16x8xf32> to vector<2x8x8xf32>
    %cst_98 = arith.constant dense<0.000000e+00> : vector<2x8x8xf32>
    %238 = tpu.matmul %233, %235, %cst_98 {dimension_numbers = #tpu.dot_dimension_numbers<[2], [2], [1], [1], [0, 0, 0, 1, 1, 1], [0], [0]>} : vector<2x8x8xf32>, vector<2x8x8xf32>, vector<2x8x8xf32> -> vector<2x8x8xf32>
    %cst_99 = arith.constant dense<0xFF800000> : vector<2x8xf32>
    %239 = vector.multi_reduction <maximumf>, %238, %cst_99 [2] : vector<2x8x8xf32> to vector<2x8xf32>
    %240 = vector.shape_cast %239 : vector<2x8xf32> to vector<2x8x1xf32>
    %241 = vector.broadcast %240 : vector<2x8x1xf32> to vector<2x8x8xf32>
    %242 = arith.subf %238, %241 : vector<2x8x8xf32>
    %243 = math.exp %242 : vector<2x8x8xf32>
    %cst_100 = arith.constant dense<0.000000e+00> : vector<2x8xf32>
    %244 = vector.multi_reduction <add>, %243, %cst_100 [2] : vector<2x8x8xf32> to vector<2x8xf32>
    %245 = vector.shape_cast %244 : vector<2x8xf32> to vector<2x8x1xf32>
    %246 = vector.broadcast %245 : vector<2x8x1xf32> to vector<2x8x8xf32>
    %247 = arith.divf %243, %246 : vector<2x8x8xf32>
    %cst_101 = arith.constant dense<0.000000e+00> : vector<2x8x8xf32>
    %248 = tpu.matmul %247, %237, %cst_101 {dimension_numbers = #tpu.dot_dimension_numbers<[2], [1], [1], [2], [0, 0, 0, 1, 1, 2], [0], [0]>} : vector<2x8x8xf32>, vector<2x8x8xf32>, vector<2x8x8xf32> -> vector<2x8x8xf32>
    %249 = vector.shape_cast %248 : vector<2x8x8xf32> to vector<16x8xf32>
    %250 = vector.extract_strided_slice %195 {offsets = [0, 24], sizes = [16, 8], strides = [1, 1]} : vector<16x96xf32> to vector<16x8xf32>
    %251 = vector.shape_cast %250 : vector<16x8xf32> to vector<2x8x8xf32>
    %252 = vector.extract_strided_slice %195 {offsets = [0, 56], sizes = [16, 8], strides = [1, 1]} : vector<16x96xf32> to vector<16x8xf32>
    %253 = vector.shape_cast %252 : vector<16x8xf32> to vector<2x8x8xf32>
    %254 = vector.extract_strided_slice %195 {offsets = [0, 88], sizes = [16, 8], strides = [1, 1]} : vector<16x96xf32> to vector<16x8xf32>
    %255 = vector.shape_cast %254 : vector<16x8xf32> to vector<2x8x8xf32>
    %cst_102 = arith.constant dense<0.000000e+00> : vector<2x8x8xf32>
    %256 = tpu.matmul %251, %253, %cst_102 {dimension_numbers = #tpu.dot_dimension_numbers<[2], [2], [1], [1], [0, 0, 0, 1, 1, 1], [0], [0]>} : vector<2x8x8xf32>, vector<2x8x8xf32>, vector<2x8x8xf32> -> vector<2x8x8xf32>
    %cst_103 = arith.constant dense<0xFF800000> : vector<2x8xf32>
    %257 = vector.multi_reduction <maximumf>, %256, %cst_103 [2] : vector<2x8x8xf32> to vector<2x8xf32>
    %258 = vector.shape_cast %257 : vector<2x8xf32> to vector<2x8x1xf32>
    %259 = vector.broadcast %258 : vector<2x8x1xf32> to vector<2x8x8xf32>
    %260 = arith.subf %256, %259 : vector<2x8x8xf32>
    %261 = math.exp %260 : vector<2x8x8xf32>
    %cst_104 = arith.constant dense<0.000000e+00> : vector<2x8xf32>
    %262 = vector.multi_reduction <add>, %261, %cst_104 [2] : vector<2x8x8xf32> to vector<2x8xf32>
    %263 = vector.shape_cast %262 : vector<2x8xf32> to vector<2x8x1xf32>
    %264 = vector.broadcast %263 : vector<2x8x1xf32> to vector<2x8x8xf32>
    %265 = arith.divf %261, %264 : vector<2x8x8xf32>
    %cst_105 = arith.constant dense<0.000000e+00> : vector<2x8x8xf32>
    %266 = tpu.matmul %265, %255, %cst_105 {dimension_numbers = #tpu.dot_dimension_numbers<[2], [1], [1], [2], [0, 0, 0, 1, 1, 2], [0], [0]>} : vector<2x8x8xf32>, vector<2x8x8xf32>, vector<2x8x8xf32> -> vector<2x8x8xf32>
    %267 = vector.shape_cast %266 : vector<2x8x8xf32> to vector<16x8xf32>
    %268 = tpu.concatenate %213, %231, %249, %267 in 1 : vector<16x8xf32>, vector<16x8xf32>, vector<16x8xf32>, vector<16x8xf32> -> vector<16x32xf32>
    %c1_106 = arith.constant 1 : index
    %c0_107 = arith.constant 0 : index
    %c0_108 = arith.constant 0 : index
    %269 = vector.load %arg5[%c1_106, %c0_107, %c0_108] : memref<2x32x32xf32, #tpu.memory_space<vmem>>, vector<1x32x32xf32>
    %270 = vector.shape_cast %269 : vector<1x32x32xf32> to vector<32x32xf32>
    %cst_109 = arith.constant dense<0.000000e+00> : vector<16x32xf32>
    %271 = tpu.matmul %268, %270, %cst_109 {dimension_numbers = #tpu.dot_dimension_numbers<[1], [0], [0], [1], [0, 0, 1, 1], [], []>} : vector<16x32xf32>, vector<32x32xf32>, vector<16x32xf32> -> vector<16x32xf32>
    %c1_110 = arith.constant 1 : index
    %c0_111 = arith.constant 0 : index
    %c0_112 = arith.constant 0 : index
    %272 = vector.load %arg6[%c1_110, %c0_111, %c0_112] : memref<2x1x32xf32, #tpu.memory_space<vmem>>, vector<1x1x32xf32>
    %273 = vector.shape_cast %272 : vector<1x1x32xf32> to vector<1x32xf32>
    %274 = vector.broadcast %273 : vector<1x32xf32> to vector<16x32xf32>
    %275 = arith.addf %271, %274 : vector<16x32xf32>
    %c1_113 = arith.constant 1 : index
    %c0_114 = arith.constant 0 : index
    %c0_115 = arith.constant 0 : index
    %276 = vector.load %arg9[%c1_113, %c0_114, %c0_115] : memref<2x1x32xf32, #tpu.memory_space<vmem>>, vector<1x1x32xf32>
    %277 = vector.shape_cast %276 : vector<1x1x32xf32> to vector<1x32xf32>
    %c1_116 = arith.constant 1 : index
    %c0_117 = arith.constant 0 : index
    %c0_118 = arith.constant 0 : index
    %278 = vector.load %arg10[%c1_116, %c0_117, %c0_118] : memref<2x1x32xf32, #tpu.memory_space<vmem>>, vector<1x1x32xf32>
    %279 = vector.shape_cast %278 : vector<1x1x32xf32> to vector<1x32xf32>
    %cst_119 = arith.constant dense<0.000000e+00> : vector<16xf32>
    %280 = vector.multi_reduction <add>, %275, %cst_119 [1] : vector<16x32xf32> to vector<16xf32>
    %281 = vector.shape_cast %280 : vector<16xf32> to vector<16x1xf32>
    %cst_120 = arith.constant 3.200000e+01 : f32
    %282 = vector.broadcast %cst_120 : f32 to vector<16x1xf32>
    %283 = arith.divf %281, %282 : vector<16x1xf32>
    %284 = vector.broadcast %283 : vector<16x1xf32> to vector<16x32xf32>
    %285 = arith.subf %275, %284 : vector<16x32xf32>
    %286 = arith.mulf %285, %285 : vector<16x32xf32>
    %cst_121 = arith.constant dense<0.000000e+00> : vector<16xf32>
    %287 = vector.multi_reduction <add>, %286, %cst_121 [1] : vector<16x32xf32> to vector<16xf32>
    %288 = vector.shape_cast %287 : vector<16xf32> to vector<16x1xf32>
    %cst_122 = arith.constant 3.200000e+01 : f32
    %289 = vector.broadcast %cst_122 : f32 to vector<16x1xf32>
    %290 = arith.divf %288, %289 : vector<16x1xf32>
    %291 = vector.broadcast %283 : vector<16x1xf32> to vector<16x32xf32>
    %292 = arith.subf %275, %291 : vector<16x32xf32>
    %cst_123 = arith.constant 9.99999974E-6 : f32
    %293 = vector.broadcast %cst_123 : f32 to vector<16x1xf32>
    %294 = arith.addf %290, %293 : vector<16x1xf32>
    %295 = math.rsqrt %294 : vector<16x1xf32>
    %296 = vector.broadcast %295 : vector<16x1xf32> to vector<16x32xf32>
    %297 = arith.mulf %292, %296 : vector<16x32xf32>
    %298 = vector.broadcast %277 : vector<1x32xf32> to vector<16x32xf32>
    %299 = arith.mulf %297, %298 : vector<16x32xf32>
    %300 = vector.broadcast %279 : vector<1x32xf32> to vector<16x32xf32>
    %301 = arith.addf %299, %300 : vector<16x32xf32>
    %c1_124 = arith.constant 1 : index
    %c0_125 = arith.constant 0 : index
    %c0_126 = arith.constant 0 : index
    %302 = vector.load %arg11[%c1_124, %c0_125, %c0_126] : memref<2x32x64xf32, #tpu.memory_space<vmem>>, vector<1x32x64xf32>
    %303 = vector.shape_cast %302 : vector<1x32x64xf32> to vector<32x64xf32>
    %cst_127 = arith.constant dense<0.000000e+00> : vector<16x64xf32>
    %304 = tpu.matmul %301, %303, %cst_127 {dimension_numbers = #tpu.dot_dimension_numbers<[1], [0], [0], [1], [0, 0, 1, 1], [], []>} : vector<16x32xf32>, vector<32x64xf32>, vector<16x64xf32> -> vector<16x64xf32>
    %c1_128 = arith.constant 1 : index
    %c0_129 = arith.constant 0 : index
    %c0_130 = arith.constant 0 : index
    %305 = vector.load %arg12[%c1_128, %c0_129, %c0_130] : memref<2x1x64xf32, #tpu.memory_space<vmem>>, vector<1x1x64xf32>
    %306 = vector.shape_cast %305 : vector<1x1x64xf32> to vector<1x64xf32>
    %307 = vector.broadcast %306 : vector<1x64xf32> to vector<16x64xf32>
    %308 = arith.addf %304, %307 : vector<16x64xf32>
    %c1_131 = arith.constant 1 : index
    %c0_132 = arith.constant 0 : index
    %c0_133 = arith.constant 0 : index
    %309 = vector.load %arg13[%c1_131, %c0_132, %c0_133] : memref<2x64x32xf32, #tpu.memory_space<vmem>>, vector<1x64x32xf32>
    %310 = vector.shape_cast %309 : vector<1x64x32xf32> to vector<64x32xf32>
    %cst_134 = arith.constant dense<0.000000e+00> : vector<16x32xf32>
    %311 = tpu.matmul %308, %310, %cst_134 {dimension_numbers = #tpu.dot_dimension_numbers<[1], [0], [0], [1], [0, 0, 1, 1], [], []>} : vector<16x64xf32>, vector<64x32xf32>, vector<16x32xf32> -> vector<16x32xf32>
    %c1_135 = arith.constant 1 : index
    %c0_136 = arith.constant 0 : index
    %c0_137 = arith.constant 0 : index
    %312 = vector.load %arg14[%c1_135, %c0_136, %c0_137] : memref<2x1x32xf32, #tpu.memory_space<vmem>>, vector<1x1x32xf32>
    %313 = vector.shape_cast %312 : vector<1x1x32xf32> to vector<1x32xf32>
    %314 = vector.broadcast %313 : vector<1x32xf32> to vector<16x32xf32>
    %315 = arith.addf %311, %314 : vector<16x32xf32>
    %cst_138 = arith.constant 0.000000e+00 : f32
    %316 = vector.broadcast %cst_138 : f32 to vector<16x32xf32>
    %317 = arith.maximumf %315, %316 : vector<16x32xf32>
    %c0_139 = arith.constant 0 : index
    %c0_140 = arith.constant 0 : index
    %318 = vector.load %arg15[%c0_139, %c0_140] : memref<32x16xf32, #tpu.memory_space<vmem>>, vector<32x16xf32>
    %cst_141 = arith.constant dense<0.000000e+00> : vector<16x16xf32>
    %319 = tpu.matmul %317, %318, %cst_141 {dimension_numbers = #tpu.dot_dimension_numbers<[1], [0], [0], [1], [0, 0, 1, 1], [], []>} : vector<16x32xf32>, vector<32x16xf32>, vector<16x16xf32> -> vector<16x16xf32>
    %c0_142 = arith.constant 0 : index
    %c0_143 = arith.constant 0 : index
    %320 = vector.load %arg16[%c0_142, %c0_143] : memref<1x16xf32, #tpu.memory_space<vmem>>, vector<1x16xf32>
    %321 = vector.broadcast %320 : vector<1x16xf32> to vector<16x16xf32>
    %322 = arith.addf %319, %321 : vector<16x16xf32>
    %c0_144 = arith.constant 0 : index
    %c0_145 = arith.constant 0 : index
    %323 = vector.load %arg17[%c0_144, %c0_145] : memref<16x16xf32, #tpu.memory_space<vmem>>, vector<16x16xf32>
    tpu.vector_store %arg17[%c0_144, %c0_145], %322 {strides = array<i32>} : memref<16x16xf32, #tpu.memory_space<vmem>>, vector<16x16xf32>,
    return
  }
}

</mosaic_0001>

<llo_original>
// kernel: tpu_custom_call.1
$region0: #{tpu_custom_call.1}
  #allocation0 [shape = 'u32[]', space=smem, size = 0x4, offset = 0x4, fixed_abs, tag = 'smem constant byte address 0x4 - core index']
  #allocation1 [shape = 'u32[144,128]{1,0:T(1,128)}', space=vmem, size = 0x12000, scoped, tag = 'internal scratch']
  %s0 = inlined_call_operand.hbm [shape: f32[16,16], index: 0, kind: input, shape index: {}]
  %s1 = inlined_call_operand.hbm [shape: f32[16,32], index: 1, kind: input, shape index: {}]
  %s2 = inlined_call_operand.vmem [shape: f32[1,32], index: 2, kind: input, shape index: {}]
  %s3 = inlined_call_operand.vmem [shape: f32[2,32,96], index: 3, kind: input, shape index: {}]
  %s4 = inlined_call_operand.vmem [shape: f32[2,1,96], index: 4, kind: input, shape index: {}]
  %s5 = inlined_call_operand.vmem [shape: f32[2,32,32], index: 5, kind: input, shape index: {}]
  %s6 = inlined_call_operand.vmem [shape: f32[2,1,32], index: 6, kind: input, shape index: {}]
  %s7 = inlined_call_operand.vmem [shape: f32[2,1,32], index: 7, kind: input, shape index: {}]
  %s8 = inlined_call_operand.hbm [shape: f32[2,1,32], index: 8, kind: input, shape index: {}]
  %s9 = inlined_call_operand.hbm [shape: f32[2,1,32], index: 9, kind: input, shape index: {}]
  %s10 = inlined_call_operand.hbm [shape: f32[2,1,32], index: 10, kind: input, shape index: {}]
  %s11 = inlined_call_operand.vmem [shape: f32[2,32,64], index: 11, kind: input, shape index: {}]
  %s12 = inlined_call_operand.hbm [shape: f32[2,1,64], index: 12, kind: input, shape index: {}]
  %s13 = inlined_call_operand.vmem [shape: f32[2,64,32], index: 13, kind: input, shape index: {}]
  %s14 = inlined_call_operand.vmem [shape: f32[2,1,32], index: 14, kind: input, shape index: {}]
  %s15 = inlined_call_operand.vmem [shape: f32[32,16], index: 15, kind: input, shape index: {}]
  %s16 = inlined_call_operand.vmem [shape: f32[1,16], index: 16, kind: input, shape index: {}]
  %s17 = inlined_call_operand.hbm [shape: f32[16,16], index: 17, kind: output, shape index: {}]
  %s18 = sld [smem:[#allocation0]]
  $region102: #{tpu_custom_call.1} parent=0
    _
  %s20 = ssub.s32 1, %s18
  %s21 = scalar_select 0, %s20, %s18
  $region1: #{tpu_custom_call.1} parent=0
    #allocation2 [shape = 'u8[8192]{0}', space=vmem, size = 0x2000, scoped, tag = 'input window, operand 0, single buffered']
    #allocation3 [shape = 's32[1]{0}', space=sflag, size = 0x4, scoped, tag = 'scoped memory for tpu_custom_call.1']
    #allocation4 [shape = 's32[1]{0}', space=sflag, size = 0x4, scoped, tag = 'scoped memory for tpu_custom_call.1']
    #allocation5 [shape = 'u8[8192]{0}', space=vmem, size = 0x2000, scoped, tag = 'input window, operand 1, single buffered']
    #allocation6 [shape = 's32[1]{0}', space=sflag, size = 0x4, scoped, tag = 'scoped memory for tpu_custom_call.1']
    #allocation7 [shape = 'u8[1024]{0}', space=vmem, size = 0x400, scoped, tag = 'input window, operand 8, single buffered']
    #allocation8 [shape = 'u8[1024]{0}', space=vmem, size = 0x400, scoped, tag = 'input window, operand 9, single buffered']
    #allocation9 [shape = 's32[1]{0}', space=sflag, size = 0x4, scoped, tag = 'scoped memory for tpu_custom_call.1']
    #allocation10 [shape = 'u8[1024]{0}', space=vmem, size = 0x400, scoped, tag = 'input window, operand 10, single buffered']
    #allocation11 [shape = 'u8[1024]{0}', space=vmem, size = 0x400, scoped, tag = 'input window, operand 12, single buffered']
    #allocation12 [shape = 's32[1]{0}', space=sflag, size = 0x4, scoped, tag = 'scoped memory for tpu_custom_call.1']
    #allocation13 [shape = 'u8[8192]{0}', space=vmem, size = 0x2000, scoped, tag = 'output window, operand 0, single buffered']
    %22 = vsyncpa [#allocation3], 0
    %23 = vsyncpa [#allocation6], 0
    %24 = vsyncpa [#allocation9], 0
    %25 = vsyncpa [#allocation12], 0
    %26 = vsyncpa [#allocation4], 0
    // Predicated region
    $region2: #{tpu_custom_call.1} parent=1 // pred_check
      _
    $region3: #{tpu_custom_call.1} parent=1 // pred_check_branch
      %28 = sbr.rel (0) target = $region5
    $region4: #{tpu_custom_call.1} parent=1 // pred_region
      %s30 = ssub.s32 256, 256
      %31 = vsyncadd [#allocation3], %s30
      %s32 = sshll.u32 [#allocation2], 4
      %s33 = int_to_ptr.vmem [resolvable:$true] %s32
      %38 = dma.hbm_to_vmem [thread:$0]  %s0, 256, %s33, [#allocation3], 128, 128, 8
    $region5: #{tpu_custom_call.1} parent=1 // pred_fallthru
      _
    // Predicated region
    $region6: #{tpu_custom_call.1} parent=1 // pred_check
      _
    $region7: #{tpu_custom_call.1} parent=1 // pred_check_branch
      %40 = sbr.rel (0) target = $region9
    $region8: #{tpu_custom_call.1} parent=1 // pred_region
      %s42 = ssub.s32 256, 256
      %43 = vsyncadd [#allocation6], %s42
      %s44 = sshll.u32 [#allocation5], 4
      %s45 = int_to_ptr.vmem [resolvable:$true] %s44
      %50 = dma.hbm_to_vmem [thread:$0]  %s1, 256, %s45, [#allocation6], 128, 128, 8
    $region9: #{tpu_custom_call.1} parent=1 // pred_fallthru
      _
    // Predicated region
    $region10: #{tpu_custom_call.1} parent=1 // pred_check
      _
    $region11: #{tpu_custom_call.1} parent=1 // pred_check_branch
      %52 = sbr.rel (0) target = $region13
    $region12: #{tpu_custom_call.1} parent=1 // pred_region
      _
    $region13: #{tpu_custom_call.1} parent=1 // pred_fallthru
      _
    // Predicated region
    $region14: #{tpu_custom_call.1} parent=1 // pred_check
      _
    $region15: #{tpu_custom_call.1} parent=1 // pred_check_branch
      %54 = sbr.rel (0) target = $region17
    $region16: #{tpu_custom_call.1} parent=1 // pred_region
      _
    $region17: #{tpu_custom_call.1} parent=1 // pred_fallthru
      _
    // Predicated region
    $region18: #{tpu_custom_call.1} parent=1 // pred_check
      _
    $region19: #{tpu_custom_call.1} parent=1 // pred_check_branch
      %56 = sbr.rel (0) target = $region21
    $region20: #{tpu_custom_call.1} parent=1 // pred_region
      _
    $region21: #{tpu_custom_call.1} parent=1 // pred_fallthru
      _
    // Predicated region
    $region22: #{tpu_custom_call.1} parent=1 // pred_check
      _
    $region23: #{tpu_custom_call.1} parent=1 // pred_check_branch
      %58 = sbr.rel (0) target = $region25
    $region24: #{tpu_custom_call.1} parent=1 // pred_region
      _
    $region25: #{tpu_custom_call.1} parent=1 // pred_fallthru
      _
    // Predicated region
    $region26: #{tpu_custom_call.1} parent=1 // pred_check
      _
    $region27: #{tpu_custom_call.1} parent=1 // pred_check_branch
      %60 = sbr.rel (0) target = $region29
    $region28: #{tpu_custom_call.1} parent=1 // pred_region
      _
    $region29: #{tpu_custom_call.1} parent=1 // pred_fallthru
      _
    // Predicated region
    $region30: #{tpu_custom_call.1} parent=1 // pred_check
      _
    $region31: #{tpu_custom_call.1} parent=1 // pred_check_branch
      %62 = sbr.rel (0) target = $region33
    $region32: #{tpu_custom_call.1} parent=1 // pred_region
      _
    $region33: #{tpu_custom_call.1} parent=1 // pred_fallthru
      _
    // Predicated region
    $region34: #{tpu_custom_call.1} parent=1 // pred_check
      _
    $region35: #{tpu_custom_call.1} parent=1 // pred_check_branch
      %64 = sbr.rel (0) target = $region37
    $region36: #{tpu_custom_call.1} parent=1 // pred_region
      %s66 = ssub.s32 32, 32
      %67 = vsyncadd [#allocation6], %s66
      %s68 = sshll.u32 [#allocation7], 4
      %s69 = int_to_ptr.vmem [resolvable:$true] %s68
      %74 = dma.hbm_to_vmem [thread:$0]  %s8, 32, %s69, [#allocation6], 16, 16, 1
    $region37: #{tpu_custom_call.1} parent=1 // pred_fallthru
      _
    // Predicated region
    $region38: #{tpu_custom_call.1} parent=1 // pred_check
      _
    $region39: #{tpu_custom_call.1} parent=1 // pred_check_branch
      %76 = sbr.rel (0) target = $region41
    $region40: #{tpu_custom_call.1} parent=1 // pred_region
      %s78 = ssub.s32 32, 32
      %79 = vsyncadd [#allocation9], %s78
      %s80 = sshll.u32 [#allocation8], 4
      %s81 = int_to_ptr.vmem [resolvable:$true] %s80
      %86 = dma.hbm_to_vmem [thread:$0]  %s9, 32, %s81, [#allocation9], 16, 16, 1
    $region41: #{tpu_custom_call.1} parent=1 // pred_fallthru
      _
    // Predicated region
    $region42: #{tpu_custom_call.1} parent=1 // pred_check
      _
    $region43: #{tpu_custom_call.1} parent=1 // pred_check_branch
      %88 = sbr.rel (0) target = $region45
    $region44: #{tpu_custom_call.1} parent=1 // pred_region
      %s90 = ssub.s32 32, 32
      %91 = vsyncadd [#allocation9], %s90
      %s92 = sshll.u32 [#allocation10], 4
      %s93 = int_to_ptr.vmem [resolvable:$true] %s92
      %98 = dma.hbm_to_vmem [thread:$0]  %s10, 32, %s93, [#allocation9], 16, 16, 1
    $region45: #{tpu_custom_call.1} parent=1 // pred_fallthru
      _
    // Predicated region
    $region46: #{tpu_custom_call.1} parent=1 // pred_check
      _
    $region47: #{tpu_custom_call.1} parent=1 // pred_check_branch
      %100 = sbr.rel (0) target = $region49
    $region48: #{tpu_custom_call.1} parent=1 // pred_region
      _
    $region49: #{tpu_custom_call.1} parent=1 // pred_fallthru
      _
    // Predicated region
    $region50: #{tpu_custom_call.1} parent=1 // pred_check
      _
    $region51: #{tpu_custom_call.1} parent=1 // pred_check_branch
      %102 = sbr.rel (0) target = $region53
    $region52: #{tpu_custom_call.1} parent=1 // pred_region
      %s104 = ssub.s32 32, 32
      %105 = vsyncadd [#allocation12], %s104
      %s106 = sshll.u32 [#allocation11], 4
      %s107 = int_to_ptr.vmem [resolvable:$true] %s106
      %112 = dma.hbm_to_vmem [thread:$0]  %s12, 32, %s107, [#allocation12], 16, 16, 1
    $region53: #{tpu_custom_call.1} parent=1 // pred_fallthru
      _
    // Predicated region
    $region54: #{tpu_custom_call.1} parent=1 // pred_check
      _
    $region55: #{tpu_custom_call.1} parent=1 // pred_check_branch
      %114 = sbr.rel (0) target = $region57
    $region56: #{tpu_custom_call.1} parent=1 // pred_region
      _
    $region57: #{tpu_custom_call.1} parent=1 // pred_fallthru
      _
    // Predicated region
    $region58: #{tpu_custom_call.1} parent=1 // pred_check
      _
    $region59: #{tpu_custom_call.1} parent=1 // pred_check_branch
      %116 = sbr.rel (0) target = $region61
    $region60: #{tpu_custom_call.1} parent=1 // pred_region
      _
    $region61: #{tpu_custom_call.1} parent=1 // pred_fallthru
      _
    // Predicated region
    $region62: #{tpu_custom_call.1} parent=1 // pred_check
      _
    $region63: #{tpu_custom_call.1} parent=1 // pred_check_branch
      %118 = sbr.rel (0) target = $region65
    $region64: #{tpu_custom_call.1} parent=1 // pred_region
      _
    $region65: #{tpu_custom_call.1} parent=1 // pred_fallthru
      _
    // Predicated region
    $region66: #{tpu_custom_call.1} parent=1 // pred_check
      _
    $region67: #{tpu_custom_call.1} parent=1 // pred_check_branch
      %120 = sbr.rel (0) target = $region69
    $region68: #{tpu_custom_call.1} parent=1 // pred_region
      _
    $region69: #{tpu_custom_call.1} parent=1 // pred_fallthru
      _
    // Predicated region
    $region70: #{tpu_custom_call.1} parent=1 // pred_check
      _
    $region71: #{tpu_custom_call.1} parent=1 // pred_check_branch
      %122 = sbr.rel (0) target = $region73
    $region72: #{tpu_custom_call.1} parent=1 // pred_region
      %123 = dma.done [#allocation3], 256
    $region73: #{tpu_custom_call.1} parent=1 // pred_fallthru
      _
    // Predicated region
    $region74: #{tpu_custom_call.1} parent=1 // pred_check
      _
    $region75: #{tpu_custom_call.1} parent=1 // pred_check_branch
      %125 = sbr.rel (0) target = $region77
    $region76: #{tpu_custom_call.1} parent=1 // pred_region
      %126 = dma.done [#allocation6], 256
    $region77: #{tpu_custom_call.1} parent=1 // pred_fallthru
      _
    // Predicated region
    $region78: #{tpu_custom_call.1} parent=1 // pred_check
      _
    $region79: #{tpu_custom_call.1} parent=1 // pred_check_branch
      %128 = sbr.rel (0) target = $region81
    $region80: #{tpu_custom_call.1} parent=1 // pred_region
      %129 = dma.done [#allocation6], 32
    $region81: #{tpu_custom_call.1} parent=1 // pred_fallthru
      _
    // Predicated region
    $region82: #{tpu_custom_call.1} parent=1 // pred_check
      _
    $region83: #{tpu_custom_call.1} parent=1 // pred_check_branch
      %131 = sbr.rel (0) target = $region85
    $region84: #{tpu_custom_call.1} parent=1 // pred_region
      %132 = dma.done [#allocation9], 32
    $region85: #{tpu_custom_call.1} parent=1 // pred_fallthru
      _
    // Predicated region
    $region86: #{tpu_custom_call.1} parent=1 // pred_check
      _
    $region87: #{tpu_custom_call.1} parent=1 // pred_check_branch
      %134 = sbr.rel (0) target = $region89
    $region88: #{tpu_custom_call.1} parent=1 // pred_region
      %135 = dma.done [#allocation9], 32
    $region89: #{tpu_custom_call.1} parent=1 // pred_fallthru
      _
    // Predicated region
    $region90: #{tpu_custom_call.1} parent=1 // pred_check
      _
    $region91: #{tpu_custom_call.1} parent=1 // pred_check_branch
      %137 = sbr.rel (0) target = $region93
    $region92: #{tpu_custom_call.1} parent=1 // pred_region
      %138 = dma.done [#allocation12], 32
    $region93: #{tpu_custom_call.1} parent=1 // pred_fallthru
      _
    %v139 = vld [vmem:[#allocation2] sm:$0xff]
    %v140 = vld [vmem:[#allocation2 + $0x8] sm:$0xff]
    %v141 = vld [vmem:[#allocation5] sm:$0xff]
    %v142 = vld [vmem:[#allocation5 + $0x8] sm:$0xff]
    %v143 = vld [vmem:[%s2] sm:$0x1]
    %v145 = vlaneseq
    %v146 = vshrl.u32 %v145, 7
    %v147 = vsub.s32 0, %v146
    %v148 = vrot.slane %v143, %v147
    %vm150 = vcmask 130048
    %v152 = vsel %vm150, %v139, 0
    %v155 = vsel %vm150, %v140, 0
    %157 = vmatprep.subr.mxu0 0.0
    %158 = vmatpush1.msra.mxu0 0.0
    %159 = vmatprep.subr.mxu0 0.0
    %160 = vmatpush1.msra.mxu0 0.0
    %161 = vmatprep.subr.mxu0 0.0
    %162 = vmatpush1.msra.mxu0 0.0
    %163 = vmatprep.subr.mxu0 0.0
    %164 = vmatpush1.msra.mxu0 0.0
    %165 = vmatprep.subr.mxu0 0.0
    %166 = vmatpush1.msra.mxu0 0.0
    %167 = vmatprep.subr.mxu0 0.0
    %168 = vmatpush1.msra.mxu0 0.0
    %169 = vmatprep.subr.mxu0 0.0
    %170 = vmatpush1.msra.mxu0 0.0
    %171 = vmatprep.subr.mxu0 0.0
    %172 = vmatpush1.msra.mxu0 0.0
    %173 = vmatprep.subr.mxu0 0.0
    %174 = vmatpush1.msra.mxu0 0.0
    %175 = vmatprep.subr.mxu0 0.0
    %176 = vmatpush1.msra.mxu0 0.0
    %177 = vmatprep.subr.mxu0 0.0
    %178 = vmatpush1.msra.mxu0 0.0
    %179 = vmatprep.subr.mxu0 0.0
    %180 = vmatpush1.msra.mxu0 0.0
    %181 = vmatprep.subr.mxu0 0.0
    %182 = vmatpush1.msra.mxu0 0.0
    %183 = vmatprep.subr.mxu0 0.0
    %184 = vmatpush1.msra.mxu0 0.0
    %185 = vmatprep.subr.mxu0 0.0
    %186 = vmatpush1.msra.mxu0 %v142
    %187 = vmatprep.subr.mxu0 0.0
    %188 = vmatpush1.msra.mxu0 %v141
    %189 = vmatprep.subr.mxu0 0.0
    %190 = vmatpush2.msra.mxu0 0.0
    %191 = vmatprep.subr.mxu0 0.0
    %192 = vmatpush2.msra.mxu0 0.0
    %193 = vmatprep.subr.mxu0 0.0
    %194 = vmatpush2.msra.mxu0 0.0
    %195 = vmatprep.subr.mxu0 0.0
    %196 = vmatpush2.msra.mxu0 0.0
    %197 = vmatprep.subr.mxu0 0.0
    %198 = vmatpush2.msra.mxu0 0.0
    %199 = vmatprep.subr.mxu0 0.0
    %200 = vmatpush2.msra.mxu0 0.0
    %201 = vmatprep.subr.mxu0 0.0
    %202 = vmatpush2.msra.mxu0 0.0
    %203 = vmatprep.subr.mxu0 0.0
    %204 = vmatpush2.msra.mxu0 0.0
    %205 = vmatprep.subr.mxu0 0.0
    %206 = vmatpush2.msra.mxu0 0.0
    %207 = vmatprep.subr.mxu0 0.0
    %208 = vmatpush2.msra.mxu0 0.0
    %209 = vmatprep.subr.mxu0 0.0
    %210 = vmatpush2.msra.mxu0 0.0
    %211 = vmatprep.subr.mxu0 0.0
    %212 = vmatpush2.msra.mxu0 0.0
    %213 = vmatprep.subr.mxu0 0.0
    %214 = vmatpush2.msra.mxu0 0.0
    %215 = vmatprep.subr.mxu0 0.0
    %216 = vmatpush2.msra.mxu0 0.0
    %217 = vmatprep.subr.mxu0 0.0
    %218 = vmatpush2.msra.mxu0 0.0
    %219 = vmatprep.subr.mxu0 0.0
    %220 = vmatpush2.msra.mxu0 0.0
    %221 = vmatprep.mubr.f32.mxu0 0.0
    %222 = vmatmul.mubr.f32.gmra.mxu0 %v152
    %v223 = vpop.f32.mrf.mxu0
    %v224 = vadd.f32 %v148, %v223
    %v225 = vpop.f32.mrf.mxu0
    %226 = vmatprep.mubr.f32.mxu0 0.0
    %227 = vmatmul.mubr.f32.gmra.mxu0 %v155
    %v228 = vpop.f32.mrf.mxu0
    %v229 = vadd.f32 %v148, %v228
    %v230 = vpop.f32.mrf.mxu0
    %231 = vdwg.mxu0
    %v232 = vmax.f32 %v224, 0.0
    %v233 = vmax.f32 %v229, 0.0
    %v234 = vld [vmem:[%s7] sm:$0x1]
    %v235 = vld [vmem:[#allocation7] sm:$0x1]
    %vm236 = vcmask 261120
    %v237 = vsel %vm236, %v232, 0.0
    %238 = vadd.xlane.f32.xlu0 %v237
    %v239 = vpop.xlane.xlu0 %238
    %v240 = vsel %vm236, %v233, 0.0
    %241 = vadd.xlane.f32.xlu0 %v240
    %v242 = vpop.xlane.xlu0 %241
    %v243 = vrcp.pop 32.0
    %v244 = vmul.f32 %v239, %v243
    %v245 = vmul.f32 %v242, %v243
    %v246 = vsub.f32 %v232, %v244
    %v247 = vsub.f32 %v233, %v245
    %v248 = vmul.f32 %v246, %v246
    %v249 = vmul.f32 %v247, %v247
    %v250 = vsel %vm236, %v248, 0.0
    %251 = vadd.xlane.f32.xlu0 %v250
    %v252 = vpop.xlane.xlu0 %251
    %v253 = vsel %vm236, %v249, 0.0
    %254 = vadd.xlane.f32.xlu0 %v253
    %v255 = vpop.xlane.xlu0 %254
    %v256 = vmul.f32 %v252, %v243
    %v257 = vmul.f32 %v255, %v243
    %v258 = vadd.f32 %v256, 1e-05
    %v259 = vadd.f32 %v257, 1e-05
    %v260 = vrsqrt.pop %v258
    %v261 = vrsqrt.pop %v259
    %v262 = vmul.f32 %v246, %v260
    %v263 = vmul.f32 %v247, %v261
    %v265 = vlaneseq
    %v266 = vshrl.u32 %v265, 7
    %v267 = vsub.s32 0, %v266
    %v268 = vrot.slane %v234, %v267
    %v270 = vmul.f32 %v262, %v268
    %v271 = vmul.f32 %v263, %v268
    %v273 = vlaneseq
    %v274 = vshrl.u32 %v273, 7
    %v275 = vsub.s32 0, %v274
    %v276 = vrot.slane %v235, %v275
    %v278 = vadd.f32 %v270, %v276
    %v279 = vadd.f32 %v271, %v276
    %v280 = vld [vmem:[%s3] sm:$0xff]
    %v281 = vld [vmem:[%s3 + $0x8] sm:$0xff]
    %v282 = vld [vmem:[%s3 + $0x10] sm:$0xff]
    %v283 = vld [vmem:[%s3 + $0x18] sm:$0xff]
    %v284 = vld [vmem:[%s4] sm:$0x1]
    %v286 = vlaneseq
    %v287 = vshrl.u32 %v286, 7
    %v288 = vsub.s32 0, %v287
    %v289 = vrot.slane %v284, %v288
    %v292 = vsel %vm236, %v278, 0
    %v295 = vsel %vm236, %v279, 0
    %297 = vmatprep.subr.mxu0 0.0
    %298 = vmatpush1.msra.mxu0 0.0
    %299 = vmatprep.subr.mxu0 0.0
    %300 = vmatpush1.msra.mxu0 0.0
    %301 = vmatprep.subr.mxu0 0.0
    %302 = vmatpush1.msra.mxu0 0.0
    %303 = vmatprep.subr.mxu0 0.0
    %304 = vmatpush1.msra.mxu0 0.0
    %305 = vmatprep.subr.mxu0 0.0
    %306 = vmatpush1.msra.mxu0 0.0
    %307 = vmatprep.subr.mxu0 0.0
    %308 = vmatpush1.msra.mxu0 0.0
    %309 = vmatprep.subr.mxu0 0.0
    %310 = vmatpush1.msra.mxu0 0.0
    %311 = vmatprep.subr.mxu0 0.0
    %312 = vmatpush1.msra.mxu0 0.0
    %313 = vmatprep.subr.mxu0 0.0
    %314 = vmatpush1.msra.mxu0 0.0
    %315 = vmatprep.subr.mxu0 0.0
    %316 = vmatpush1.msra.mxu0 0.0
    %317 = vmatprep.subr.mxu0 0.0
    %318 = vmatpush1.msra.mxu0 0.0
    %319 = vmatprep.subr.mxu0 0.0
    %320 = vmatpush1.msra.mxu0 0.0
    %321 = vmatprep.subr.mxu0 0.0
    %322 = vmatpush1.msra.mxu0 %v283
    %323 = vmatprep.subr.mxu0 0.0
    %324 = vmatpush1.msra.mxu0 %v282
    %325 = vmatprep.subr.mxu0 0.0
    %326 = vmatpush1.msra.mxu0 %v281
    %327 = vmatprep.subr.mxu0 0.0
    %328 = vmatpush1.msra.mxu0 %v280
    %329 = vmatprep.subr.mxu0 0.0
    %330 = vmatpush2.msra.mxu0 0.0
    %331 = vmatprep.subr.mxu0 0.0
    %332 = vmatpush2.msra.mxu0 0.0
    %333 = vmatprep.subr.mxu0 0.0
    %334 = vmatpush2.msra.mxu0 0.0
    %335 = vmatprep.subr.mxu0 0.0
    %336 = vmatpush2.msra.mxu0 0.0
    %337 = vmatprep.subr.mxu0 0.0
    %338 = vmatpush2.msra.mxu0 0.0
    %339 = vmatprep.subr.mxu0 0.0
    %340 = vmatpush2.msra.mxu0 0.0
    %341 = vmatprep.subr.mxu0 0.0
    %342 = vmatpush2.msra.mxu0 0.0
    %343 = vmatprep.subr.mxu0 0.0
    %344 = vmatpush2.msra.mxu0 0.0
    %345 = vmatprep.subr.mxu0 0.0
    %346 = vmatpush2.msra.mxu0 0.0
    %347 = vmatprep.subr.mxu0 0.0
    %348 = vmatpush2.msra.mxu0 0.0
    %349 = vmatprep.subr.mxu0 0.0
    %350 = vmatpush2.msra.mxu0 0.0
    %351 = vmatprep.subr.mxu0 0.0
    %352 = vmatpush2.msra.mxu0 0.0
    %353 = vmatprep.subr.mxu0 0.0
    %354 = vmatpush2.msra.mxu0 0.0
    %355 = vmatprep.subr.mxu0 0.0
    %356 = vmatpush2.msra.mxu0 0.0
    %357 = vmatprep.subr.mxu0 0.0
    %358 = vmatpush2.msra.mxu0 0.0
    %359 = vmatprep.subr.mxu0 0.0
    %360 = vmatpush2.msra.mxu0 0.0
    %361 = vmatprep.mubr.f32.mxu0 0.0
    %362 = vmatmul.mubr.f32.gmra.mxu0 %v292
    %v363 = vpop.f32.mrf.mxu0
    %v364 = vadd.f32 %v289, %v363
    %v365 = vpop.f32.mrf.mxu0
    %366 = vmatprep.mubr.f32.mxu0 0.0
    %367 = vmatmul.mubr.f32.gmra.mxu0 %v295
    %v368 = vpop.f32.mrf.mxu0
    %v369 = vadd.f32 %v289, %v368
    %v370 = vpop.f32.mrf.mxu0
    %371 = vdwg.mxu0
    %373 = vrot.lane.b32.xlu0 %v364, 96
    %v374 = vpop.permute.xlu0 %373
    %vm375 = vcmask 64512
    %v376 = vsel %vm375, %v364, 0
    %v378 = vsel %vm375, %v374, 0
    %380 = vmatprep.subr.mxu0 0.0
    %381 = vmatpush1.xpose.msra.mxu0 0.0
    %382 = vmatprep.subr.mxu0 0.0
    %383 = vmatpush1.xpose.msra.mxu0 0.0
    %384 = vmatprep.subr.mxu0 0.0
    %385 = vmatpush1.xpose.msra.mxu0 0.0
    %386 = vmatprep.subr.mxu0 0.0
    %387 = vmatpush1.xpose.msra.mxu0 0.0
    %388 = vmatprep.subr.mxu0 0.0
    %389 = vmatpush1.xpose.msra.mxu0 0.0
    %390 = vmatprep.subr.mxu0 0.0
    %391 = vmatpush1.xpose.msra.mxu0 0.0
    %392 = vmatprep.subr.mxu0 0.0
    %393 = vmatpush1.xpose.msra.mxu0 0.0
    %394 = vmatprep.subr.mxu0 0.0
    %395 = vmatpush1.xpose.msra.mxu0 0.0
    %396 = vmatprep.subr.mxu0 0.0
    %397 = vmatpush1.xpose.msra.mxu0 0.0
    %398 = vmatprep.subr.mxu0 0.0
    %399 = vmatpush1.xpose.msra.mxu0 0.0
    %400 = vmatprep.subr.mxu0 0.0
    %401 = vmatpush1.xpose.msra.mxu0 0.0
    %402 = vmatprep.subr.mxu0 0.0
    %403 = vmatpush1.xpose.msra.mxu0 0.0
    %404 = vmatprep.subr.mxu0 0.0
    %405 = vmatpush1.xpose.msra.mxu0 0.0
    %406 = vmatprep.subr.mxu0 0.0
    %407 = vmatpush1.xpose.msra.mxu0 0.0
    %408 = vmatprep.subr.mxu0 0.0
    %409 = vmatpush1.xpose.msra.mxu0 0.0
    %410 = vmatprep.subr.mxu0 0.0
    %411 = vmatpush1.xpose.msra.mxu0 %v378
    %412 = vmatprep.subr.mxu0 0.0
    %413 = vmatpush2.xpose.msra.mxu0 0.0
    %414 = vmatprep.subr.mxu0 0.0
    %415 = vmatpush2.xpose.msra.mxu0 0.0
    %416 = vmatprep.subr.mxu0 0.0
    %417 = vmatpush2.xpose.msra.mxu0 0.0
    %418 = vmatprep.subr.mxu0 0.0
    %419 = vmatpush2.xpose.msra.mxu0 0.0
    %420 = vmatprep.subr.mxu0 0.0
    %421 = vmatpush2.xpose.msra.mxu0 0.0
    %422 = vmatprep.subr.mxu0 0.0
    %423 = vmatpush2.xpose.msra.mxu0 0.0
    %424 = vmatprep.subr.mxu0 0.0
    %425 = vmatpush2.xpose.msra.mxu0 0.0
    %426 = vmatprep.subr.mxu0 0.0
    %427 = vmatpush2.xpose.msra.mxu0 0.0
    %428 = vmatprep.subr.mxu0 0.0
    %429 = vmatpush2.xpose.msra.mxu0 0.0
    %430 = vmatprep.subr.mxu0 0.0
    %431 = vmatpush2.xpose.msra.mxu0 0.0
    %432 = vmatprep.subr.mxu0 0.0
    %433 = vmatpush2.xpose.msra.mxu0 0.0
    %434 = vmatprep.subr.mxu0 0.0
    %435 = vmatpush2.xpose.msra.mxu0 0.0
    %436 = vmatprep.subr.mxu0 0.0
    %437 = vmatpush2.xpose.msra.mxu0 0.0
    %438 = vmatprep.subr.mxu0 0.0
    %439 = vmatpush2.xpose.msra.mxu0 0.0
    %440 = vmatprep.subr.mxu0 0.0
    %441 = vmatpush2.xpose.msra.mxu0 0.0
    %442 = vmatprep.subr.mxu0 0.0
    %443 = vmatpush2.xpose.msra.mxu0 0.0
    %444 = vmatprep.mubr.f32.mxu0 0.0
    %445 = vmatmul.mubr.f32.gmra.mxu0 %v376
    %v446 = vpop.f32.mrf.mxu0
    %v447 = vadd.f32 0.0, %v446
    %v448 = vpop.f32.mrf.mxu0
    %449 = vdwg.mxu0
    %451 = vrot.lane.b32.xlu0 %v369, 96
    %v452 = vpop.permute.xlu0 %451
    %v453 = vsel %vm375, %v369, 0
    %v455 = vsel %vm375, %v452, 0
    %457 = vmatprep.subr.mxu0 0.0
    %458 = vmatpush1.xpose.msra.mxu0 0.0
    %459 = vmatprep.subr.mxu0 0.0
    %460 = vmatpush1.xpose.msra.mxu0 0.0
    %461 = vmatprep.subr.mxu0 0.0
    %462 = vmatpush1.xpose.msra.mxu0 0.0
    %463 = vmatprep.subr.mxu0 0.0
    %464 = vmatpush1.xpose.msra.mxu0 0.0
    %465 = vmatprep.subr.mxu0 0.0
    %466 = vmatpush1.xpose.msra.mxu0 0.0
    %467 = vmatprep.subr.mxu0 0.0
    %468 = vmatpush1.xpose.msra.mxu0 0.0
    %469 = vmatprep.subr.mxu0 0.0
    %470 = vmatpush1.xpose.msra.mxu0 0.0
    %471 = vmatprep.subr.mxu0 0.0
    %472 = vmatpush1.xpose.msra.mxu0 0.0
    %473 = vmatprep.subr.mxu0 0.0
    %474 = vmatpush1.xpose.msra.mxu0 0.0
    %475 = vmatprep.subr.mxu0 0.0
    %476 = vmatpush1.xpose.msra.mxu0 0.0
    %477 = vmatprep.subr.mxu0 0.0
    %478 = vmatpush1.xpose.msra.mxu0 0.0
    %479 = vmatprep.subr.mxu0 0.0
    %480 = vmatpush1.xpose.msra.mxu0 0.0
    %481 = vmatprep.subr.mxu0 0.0
    %482 = vmatpush1.xpose.msra.mxu0 0.0
    %483 = vmatprep.subr.mxu0 0.0
    %484 = vmatpush1.xpose.msra.mxu0 0.0
    %485 = vmatprep.subr.mxu0 0.0
    %486 = vmatpush1.xpose.msra.mxu0 0.0
    %487 = vmatprep.subr.mxu0 0.0
    %488 = vmatpush1.xpose.msra.mxu0 %v455
    %489 = vmatprep.subr.mxu0 0.0
    %490 = vmatpush2.xpose.msra.mxu0 0.0
    %491 = vmatprep.subr.mxu0 0.0
    %492 = vmatpush2.xpose.msra.mxu0 0.0
    %493 = vmatprep.subr.mxu0 0.0
    %494 = vmatpush2.xpose.msra.mxu0 0.0
    %495 = vmatprep.subr.mxu0 0.0
    %496 = vmatpush2.xpose.msra.mxu0 0.0
    %497 = vmatprep.subr.mxu0 0.0
    %498 = vmatpush2.xpose.msra.mxu0 0.0
    %499 = vmatprep.subr.mxu0 0.0
    %500 = vmatpush2.xpose.msra.mxu0 0.0
    %501 = vmatprep.subr.mxu0 0.0
    %502 = vmatpush2.xpose.msra.mxu0 0.0
    %503 = vmatprep.subr.mxu0 0.0
    %504 = vmatpush2.xpose.msra.mxu0 0.0
    %505 = vmatprep.subr.mxu0 0.0
    %506 = vmatpush2.xpose.msra.mxu0 0.0
    %507 = vmatprep.subr.mxu0 0.0
    %508 = vmatpush2.xpose.msra.mxu0 0.0
    %509 = vmatprep.subr.mxu0 0.0
    %510 = vmatpush2.xpose.msra.mxu0 0.0
    %511 = vmatprep.subr.mxu0 0.0
    %512 = vmatpush2.xpose.msra.mxu0 0.0
    %513 = vmatprep.subr.mxu0 0.0
    %514 = vmatpush2.xpose.msra.mxu0 0.0
    %515 = vmatprep.subr.mxu0 0.0
    %516 = vmatpush2.xpose.msra.mxu0 0.0
    %517 = vmatprep.subr.mxu0 0.0
    %518 = vmatpush2.xpose.msra.mxu0 0.0
    %519 = vmatprep.subr.mxu0 0.0
    %520 = vmatpush2.xpose.msra.mxu0 0.0
    %521 = vmatprep.mubr.f32.mxu0 0.0
    %522 = vmatmul.mubr.f32.gmra.mxu0 %v453
    %v523 = vpop.f32.mrf.mxu0
    %v524 = vadd.f32 0.0, %v523
    %v525 = vpop.f32.mrf.mxu0
    %526 = vdwg.mxu0
    %v527 = vsel %vm375, %v447, -inf
    %528 = vmax.xlane.f32.xlu0 %v527
    %v529 = vpop.xlane.xlu0 %528
    %v530 = vsel %vm375, %v524, -inf
    %531 = vmax.xlane.f32.xlu0 %v530
    %v532 = vpop.xlane.xlu0 %531
    %v533 = vsub.f32 %v447, %v529
    %v534 = vsub.f32 %v524, %v532
    %v535 = vmul.f32 %v533, 1.442695
    %v536 = vpow.pop %v535
    %v537 = vmul.f32 %v534, 1.442695
    %v538 = vpow.pop %v537
    %v539 = vsel %vm375, %v536, 0.0
    %540 = vadd.xlane.f32.xlu0 %v539
    %v541 = vpop.xlane.xlu0 %540
    %v542 = vsel %vm375, %v538, 0.0
    %543 = vadd.xlane.f32.xlu0 %v542
    %v544 = vpop.xlane.xlu0 %543
    %v545 = vrcp.pop %v541
    %v546 = vmul.f32 %v536, %v545
    %v547 = vrcp.pop %v544
    %v548 = vmul.f32 %v538, %v547
    %549 = vrot.lane.b32.xlu0 %v364, 64
    %v550 = vpop.permute.xlu0 %549
    %v553 = vsel %vm375, %v546, 0
    %555 = vmatprep.subr.mxu0 0.0
    %556 = vmatpush1.msra.mxu0 0.0
    %557 = vmatprep.subr.mxu0 0.0
    %558 = vmatpush1.msra.mxu0 0.0
    %559 = vmatprep.subr.mxu0 0.0
    %560 = vmatpush1.msra.mxu0 0.0
    %561 = vmatprep.subr.mxu0 0.0
    %562 = vmatpush1.msra.mxu0 0.0
    %563 = vmatprep.subr.mxu0 0.0
    %564 = vmatpush1.msra.mxu0 0.0
    %565 = vmatprep.subr.mxu0 0.0
    %566 = vmatpush1.msra.mxu0 0.0
    %567 = vmatprep.subr.mxu0 0.0
    %568 = vmatpush1.msra.mxu0 0.0
    %569 = vmatprep.subr.mxu0 0.0
    %570 = vmatpush1.msra.mxu0 0.0
    %571 = vmatprep.subr.mxu0 0.0
    %572 = vmatpush1.msra.mxu0 0.0
    %573 = vmatprep.subr.mxu0 0.0
    %574 = vmatpush1.msra.mxu0 0.0
    %575 = vmatprep.subr.mxu0 0.0
    %576 = vmatpush1.msra.mxu0 0.0
    %577 = vmatprep.subr.mxu0 0.0
    %578 = vmatpush1.msra.mxu0 0.0
    %579 = vmatprep.subr.mxu0 0.0
    %580 = vmatpush1.msra.mxu0 0.0
    %581 = vmatprep.subr.mxu0 0.0
    %582 = vmatpush1.msra.mxu0 0.0
    %583 = vmatprep.subr.mxu0 0.0
    %584 = vmatpush1.msra.mxu0 0.0
    %585 = vmatprep.subr.mxu0 0.0
    %586 = vmatpush1.msra.mxu0 %v550
    %587 = vmatprep.subr.mxu0 0.0
    %588 = vmatpush2.msra.mxu0 0.0
    %589 = vmatprep.subr.mxu0 0.0
    %590 = vmatpush2.msra.mxu0 0.0
    %591 = vmatprep.subr.mxu0 0.0
    %592 = vmatpush2.msra.mxu0 0.0
    %593 = vmatprep.subr.mxu0 0.0
    %594 = vmatpush2.msra.mxu0 0.0
    %595 = vmatprep.subr.mxu0 0.0
    %596 = vmatpush2.msra.mxu0 0.0
    %597 = vmatprep.subr.mxu0 0.0
    %598 = vmatpush2.msra.mxu0 0.0
    %599 = vmatprep.subr.mxu0 0.0
    %600 = vmatpush2.msra.mxu0 0.0
    %601 = vmatprep.subr.mxu0 0.0
    %602 = vmatpush2.msra.mxu0 0.0
    %603 = vmatprep.subr.mxu0 0.0
    %604 = vmatpush2.msra.mxu0 0.0
    %605 = vmatprep.subr.mxu0 0.0
    %606 = vmatpush2.msra.mxu0 0.0
    %607 = vmatprep.subr.mxu0 0.0
    %608 = vmatpush2.msra.mxu0 0.0
    %609 = vmatprep.subr.mxu0 0.0
    %610 = vmatpush2.msra.mxu0 0.0
    %611 = vmatprep.subr.mxu0 0.0
    %612 = vmatpush2.msra.mxu0 0.0
    %613 = vmatprep.subr.mxu0 0.0
    %614 = vmatpush2.msra.mxu0 0.0
    %615 = vmatprep.subr.mxu0 0.0
    %616 = vmatpush2.msra.mxu0 0.0
    %617 = vmatprep.subr.mxu0 0.0
    %618 = vmatpush2.msra.mxu0 0.0
    %619 = vmatprep.mubr.f32.mxu0 0.0
    %620 = vmatmul.mubr.f32.gmra.mxu0 %v553
    %v621 = vpop.f32.mrf.mxu0
    %v622 = vadd.f32 0.0, %v621
    %v623 = vpop.f32.mrf.mxu0
    %624 = vdwg.mxu0
    %625 = vrot.lane.b32.xlu0 %v369, 64
    %v626 = vpop.permute.xlu0 %625
    %v629 = vsel %vm375, %v548, 0
    %631 = vmatprep.subr.mxu0 0.0
    %632 = vmatpush1.msra.mxu0 0.0
    %633 = vmatprep.subr.mxu0 0.0
    %634 = vmatpush1.msra.mxu0 0.0
    %635 = vmatprep.subr.mxu0 0.0
    %636 = vmatpush1.msra.mxu0 0.0
    %637 = vmatprep.subr.mxu0 0.0
    %638 = vmatpush1.msra.mxu0 0.0
    %639 = vmatprep.subr.mxu0 0.0
    %640 = vmatpush1.msra.mxu0 0.0
    %641 = vmatprep.subr.mxu0 0.0
    %642 = vmatpush1.msra.mxu0 0.0
    %643 = vmatprep.subr.mxu0 0.0
    %644 = vmatpush1.msra.mxu0 0.0
    %645 = vmatprep.subr.mxu0 0.0
    %646 = vmatpush1.msra.mxu0 0.0
    %647 = vmatprep.subr.mxu0 0.0
    %648 = vmatpush1.msra.mxu0 0.0
    %649 = vmatprep.subr.mxu0 0.0
    %650 = vmatpush1.msra.mxu0 0.0
    %651 = vmatprep.subr.mxu0 0.0
    %652 = vmatpush1.msra.mxu0 0.0
    %653 = vmatprep.subr.mxu0 0.0
    %654 = vmatpush1.msra.mxu0 0.0
    %655 = vmatprep.subr.mxu0 0.0
    %656 = vmatpush1.msra.mxu0 0.0
    %657 = vmatprep.subr.mxu0 0.0
    %658 = vmatpush1.msra.mxu0 0.0
    %659 = vmatprep.subr.mxu0 0.0
    %660 = vmatpush1.msra.mxu0 0.0
    %661 = vmatprep.subr.mxu0 0.0
    %662 = vmatpush1.msra.mxu0 %v626
    %663 = vmatprep.subr.mxu0 0.0
    %664 = vmatpush2.msra.mxu0 0.0
    %665 = vmatprep.subr.mxu0 0.0
    %666 = vmatpush2.msra.mxu0 0.0
    %667 = vmatprep.subr.mxu0 0.0
    %668 = vmatpush2.msra.mxu0 0.0
    %669 = vmatprep.subr.mxu0 0.0
    %670 = vmatpush2.msra.mxu0 0.0
    %671 = vmatprep.subr.mxu0 0.0
    %672 = vmatpush2.msra.mxu0 0.0
    %673 = vmatprep.subr.mxu0 0.0
    %674 = vmatpush2.msra.mxu0 0.0
    %675 = vmatprep.subr.mxu0 0.0
    %676 = vmatpush2.msra.mxu0 0.0
    %677 = vmatprep.subr.mxu0 0.0
    %678 = vmatpush2.msra.mxu0 0.0
    %679 = vmatprep.subr.mxu0 0.0
    %680 = vmatpush2.msra.mxu0 0.0
    %681 = vmatprep.subr.mxu0 0.0
    %682 = vmatpush2.msra.mxu0 0.0
    %683 = vmatprep.subr.mxu0 0.0
    %684 = vmatpush2.msra.mxu0 0.0
    %685 = vmatprep.subr.mxu0 0.0
    %686 = vmatpush2.msra.mxu0 0.0
    %687 = vmatprep.subr.mxu0 0.0
    %688 = vmatpush2.msra.mxu0 0.0
    %689 = vmatprep.subr.mxu0 0.0
    %690 = vmatpush2.msra.mxu0 0.0
    %691 = vmatprep.subr.mxu0 0.0
    %692 = vmatpush2.msra.mxu0 0.0
    %693 = vmatprep.subr.mxu0 0.0
    %694 = vmatpush2.msra.mxu0 0.0
    %695 = vmatprep.mubr.f32.mxu0 0.0
    %696 = vmatmul.mubr.f32.gmra.mxu0 %v629
    %v697 = vpop.f32.mrf.mxu0
    %v698 = vadd.f32 0.0, %v697
    %v699 = vpop.f32.mrf.mxu0
    %700 = vdwg.mxu0
    %701 = vrot.lane.b32.xlu0 %v364, 120
    %v702 = vpop.permute.xlu0 %701
    %703 = vrot.lane.b32.xlu0 %v364, 88
    %v704 = vpop.permute.xlu0 %703
    %v705 = vsel %vm375, %v702, 0
    %v707 = vsel %vm375, %v704, 0
    %709 = vmatprep.subr.mxu0 0.0
    %710 = vmatpush1.xpose.msra.mxu0 0.0
    %711 = vmatprep.subr.mxu0 0.0
    %712 = vmatpush1.xpose.msra.mxu0 0.0
    %713 = vmatprep.subr.mxu0 0.0
    %714 = vmatpush1.xpose.msra.mxu0 0.0
    %715 = vmatprep.subr.mxu0 0.0
    %716 = vmatpush1.xpose.msra.mxu0 0.0
    %717 = vmatprep.subr.mxu0 0.0
    %718 = vmatpush1.xpose.msra.mxu0 0.0
    %719 = vmatprep.subr.mxu0 0.0
    %720 = vmatpush1.xpose.msra.mxu0 0.0
    %721 = vmatprep.subr.mxu0 0.0
    %722 = vmatpush1.xpose.msra.mxu0 0.0
    %723 = vmatprep.subr.mxu0 0.0
    %724 = vmatpush1.xpose.msra.mxu0 0.0
    %725 = vmatprep.subr.mxu0 0.0
    %726 = vmatpush1.xpose.msra.mxu0 0.0
    %727 = vmatprep.subr.mxu0 0.0
    %728 = vmatpush1.xpose.msra.mxu0 0.0
    %729 = vmatprep.subr.mxu0 0.0
    %730 = vmatpush1.xpose.msra.mxu0 0.0
    %731 = vmatprep.subr.mxu0 0.0
    %732 = vmatpush1.xpose.msra.mxu0 0.0
    %733 = vmatprep.subr.mxu0 0.0
    %734 = vmatpush1.xpose.msra.mxu0 0.0
    %735 = vmatprep.subr.mxu0 0.0
    %736 = vmatpush1.xpose.msra.mxu0 0.0
    %737 = vmatprep.subr.mxu0 0.0
    %738 = vmatpush1.xpose.msra.mxu0 0.0
    %739 = vmatprep.subr.mxu0 0.0
    %740 = vmatpush1.xpose.msra.mxu0 %v707
    %741 = vmatprep.subr.mxu0 0.0
    %742 = vmatpush2.xpose.msra.mxu0 0.0
    %743 = vmatprep.subr.mxu0 0.0
    %744 = vmatpush2.xpose.msra.mxu0 0.0
    %745 = vmatprep.subr.mxu0 0.0
    %746 = vmatpush2.xpose.msra.mxu0 0.0
    %747 = vmatprep.subr.mxu0 0.0
    %748 = vmatpush2.xpose.msra.mxu0 0.0
    %749 = vmatprep.subr.mxu0 0.0
    %750 = vmatpush2.xpose.msra.mxu0 0.0
    %751 = vmatprep.subr.mxu0 0.0
    %752 = vmatpush2.xpose.msra.mxu0 0.0
    %753 = vmatprep.subr.mxu0 0.0
    %754 = vmatpush2.xpose.msra.mxu0 0.0
    %755 = vmatprep.subr.mxu0 0.0
    %756 = vmatpush2.xpose.msra.mxu0 0.0
    %757 = vmatprep.subr.mxu0 0.0
    %758 = vmatpush2.xpose.msra.mxu0 0.0
    %759 = vmatprep.subr.mxu0 0.0
    %760 = vmatpush2.xpose.msra.mxu0 0.0
    %761 = vmatprep.subr.mxu0 0.0
    %762 = vmatpush2.xpose.msra.mxu0 0.0
    %763 = vmatprep.subr.mxu0 0.0
    %764 = vmatpush2.xpose.msra.mxu0 0.0
    %765 = vmatprep.subr.mxu0 0.0
    %766 = vmatpush2.xpose.msra.mxu0 0.0
    %767 = vmatprep.subr.mxu0 0.0
    %768 = vmatpush2.xpose.msra.mxu0 0.0
    %769 = vmatprep.subr.mxu0 0.0
    %770 = vmatpush2.xpose.msra.mxu0 0.0
    %771 = vmatprep.subr.mxu0 0.0
    %772 = vmatpush2.xpose.msra.mxu0 0.0
    %773 = vmatprep.mubr.f32.mxu0 0.0
    %774 = vmatmul.mubr.f32.gmra.mxu0 %v705
    %v775 = vpop.f32.mrf.mxu0
    %v776 = vadd.f32 0.0, %v775
    %v777 = vpop.f32.mrf.mxu0
    %778 = vdwg.mxu0
    %779 = vrot.lane.b32.xlu0 %v369, 120
    %v780 = vpop.permute.xlu0 %779
    %781 = vrot.lane.b32.xlu0 %v369, 88
    %v782 = vpop.permute.xlu0 %781
    %v783 = vsel %vm375, %v780, 0
    %v785 = vsel %vm375, %v782, 0
    %787 = vmatprep.subr.mxu0 0.0
    %788 = vmatpush1.xpose.msra.mxu0 0.0
    %789 = vmatprep.subr.mxu0 0.0
    %790 = vmatpush1.xpose.msra.mxu0 0.0
    %791 = vmatprep.subr.mxu0 0.0
    %792 = vmatpush1.xpose.msra.mxu0 0.0
    %793 = vmatprep.subr.mxu0 0.0
    %794 = vmatpush1.xpose.msra.mxu0 0.0
    %795 = vmatprep.subr.mxu0 0.0
    %796 = vmatpush1.xpose.msra.mxu0 0.0
    %797 = vmatprep.subr.mxu0 0.0
    %798 = vmatpush1.xpose.msra.mxu0 0.0
    %799 = vmatprep.subr.mxu0 0.0
    %800 = vmatpush1.xpose.msra.mxu0 0.0
    %801 = vmatprep.subr.mxu0 0.0
    %802 = vmatpush1.xpose.msra.mxu0 0.0
    %803 = vmatprep.subr.mxu0 0.0
    %804 = vmatpush1.xpose.msra.mxu0 0.0
    %805 = vmatprep.subr.mxu0 0.0
    %806 = vmatpush1.xpose.msra.mxu0 0.0
    %807 = vmatprep.subr.mxu0 0.0
    %808 = vmatpush1.xpose.msra.mxu0 0.0
    %809 = vmatprep.subr.mxu0 0.0
    %810 = vmatpush1.xpose.msra.mxu0 0.0
    %811 = vmatprep.subr.mxu0 0.0
    %812 = vmatpush1.xpose.msra.mxu0 0.0
    %813 = vmatprep.subr.mxu0 0.0
    %814 = vmatpush1.xpose.msra.mxu0 0.0
    %815 = vmatprep.subr.mxu0 0.0
    %816 = vmatpush1.xpose.msra.mxu0 0.0
    %817 = vmatprep.subr.mxu0 0.0
    %818 = vmatpush1.xpose.msra.mxu0 %v785
    %819 = vmatprep.subr.mxu0 0.0
    %820 = vmatpush2.xpose.msra.mxu0 0.0
    %821 = vmatprep.subr.mxu0 0.0
    %822 = vmatpush2.xpose.msra.mxu0 0.0
    %823 = vmatprep.subr.mxu0 0.0
    %824 = vmatpush2.xpose.msra.mxu0 0.0
    %825 = vmatprep.subr.mxu0 0.0
    %826 = vmatpush2.xpose.msra.mxu0 0.0
    %827 = vmatprep.subr.mxu0 0.0
    %828 = vmatpush2.xpose.msra.mxu0 0.0
    %829 = vmatprep.subr.mxu0 0.0
    %830 = vmatpush2.xpose.msra.mxu0 0.0
    %831 = vmatprep.subr.mxu0 0.0
    %832 = vmatpush2.xpose.msra.mxu0 0.0
    %833 = vmatprep.subr.mxu0 0.0
    %834 = vmatpush2.xpose.msra.mxu0 0.0
    %835 = vmatprep.subr.mxu0 0.0
    %836 = vmatpush2.xpose.msra.mxu0 0.0
    %837 = vmatprep.subr.mxu0 0.0
    %838 = vmatpush2.xpose.msra.mxu0 0.0
    %839 = vmatprep.subr.mxu0 0.0
    %840 = vmatpush2.xpose.msra.mxu0 0.0
    %841 = vmatprep.subr.mxu0 0.0
    %842 = vmatpush2.xpose.msra.mxu0 0.0
    %843 = vmatprep.subr.mxu0 0.0
    %844 = vmatpush2.xpose.msra.mxu0 0.0
    %845 = vmatprep.subr.mxu0 0.0
    %846 = vmatpush2.xpose.msra.mxu0 0.0
    %847 = vmatprep.subr.mxu0 0.0
    %848 = vmatpush2.xpose.msra.mxu0 0.0
    %849 = vmatprep.subr.mxu0 0.0
    %850 = vmatpush2.xpose.msra.mxu0 0.0
    %851 = vmatprep.mubr.f32.mxu0 0.0
    %852 = vmatmul.mubr.f32.gmra.mxu0 %v783
    %v853 = vpop.f32.mrf.mxu0
    %v854 = vadd.f32 0.0, %v853
    %v855 = vpop.f32.mrf.mxu0
    %856 = vdwg.mxu0
    %v857 = vsel %vm375, %v776, -inf
    %858 = vmax.xlane.f32.xlu0 %v857
    %v859 = vpop.xlane.xlu0 %858
    %v860 = vsel %vm375, %v854, -inf
    %861 = vmax.xlane.f32.xlu0 %v860
    %v862 = vpop.xlane.xlu0 %861
    %v863 = vsub.f32 %v776, %v859
    %v864 = vsub.f32 %v854, %v862
    %v865 = vmul.f32 %v863, 1.442695
    %v866 = vpow.pop %v865
    %v867 = vmul.f32 %v864, 1.442695
    %v868 = vpow.pop %v867
    %v869 = vsel %vm375, %v866, 0.0
    %870 = vadd.xlane.f32.xlu0 %v869
    %v871 = vpop.xlane.xlu0 %870
    %v872 = vsel %vm375, %v868, 0.0
    %873 = vadd.xlane.f32.xlu0 %v872
    %v874 = vpop.xlane.xlu0 %873
    %v875 = vrcp.pop %v871
    %v876 = vmul.f32 %v866, %v875
    %v877 = vrcp.pop %v874
    %v878 = vmul.f32 %v868, %v877
    %879 = vrot.lane.b32.xlu0 %v364, 56
    %v880 = vpop.permute.xlu0 %879
    %v883 = vsel %vm375, %v876, 0
    %885 = vmatprep.subr.mxu0 0.0
    %886 = vmatpush1.msra.mxu0 0.0
    %887 = vmatprep.subr.mxu0 0.0
    %888 = vmatpush1.msra.mxu0 0.0
    %889 = vmatprep.subr.mxu0 0.0
    %890 = vmatpush1.msra.mxu0 0.0
    %891 = vmatprep.subr.mxu0 0.0
    %892 = vmatpush1.msra.mxu0 0.0
    %893 = vmatprep.subr.mxu0 0.0
    %894 = vmatpush1.msra.mxu0 0.0
    %895 = vmatprep.subr.mxu0 0.0
    %896 = vmatpush1.msra.mxu0 0.0
    %897 = vmatprep.subr.mxu0 0.0
    %898 = vmatpush1.msra.mxu0 0.0
    %899 = vmatprep.subr.mxu0 0.0
    %900 = vmatpush1.msra.mxu0 0.0
    %901 = vmatprep.subr.mxu0 0.0
    %902 = vmatpush1.msra.mxu0 0.0
    %903 = vmatprep.subr.mxu0 0.0
    %904 = vmatpush1.msra.mxu0 0.0
    %905 = vmatprep.subr.mxu0 0.0
    %906 = vmatpush1.msra.mxu0 0.0
    %907 = vmatprep.subr.mxu0 0.0
    %908 = vmatpush1.msra.mxu0 0.0
    %909 = vmatprep.subr.mxu0 0.0
    %910 = vmatpush1.msra.mxu0 0.0
    %911 = vmatprep.subr.mxu0 0.0
    %912 = vmatpush1.msra.mxu0 0.0
    %913 = vmatprep.subr.mxu0 0.0
    %914 = vmatpush1.msra.mxu0 0.0
    %915 = vmatprep.subr.mxu0 0.0
    %916 = vmatpush1.msra.mxu0 %v880
    %917 = vmatprep.subr.mxu0 0.0
    %918 = vmatpush2.msra.mxu0 0.0
    %919 = vmatprep.subr.mxu0 0.0
    %920 = vmatpush2.msra.mxu0 0.0
    %921 = vmatprep.subr.mxu0 0.0
    %922 = vmatpush2.msra.mxu0 0.0
    %923 = vmatprep.subr.mxu0 0.0
    %924 = vmatpush2.msra.mxu0 0.0
    %925 = vmatprep.subr.mxu0 0.0
    %926 = vmatpush2.msra.mxu0 0.0
    %927 = vmatprep.subr.mxu0 0.0
    %928 = vmatpush2.msra.mxu0 0.0
    %929 = vmatprep.subr.mxu0 0.0
    %930 = vmatpush2.msra.mxu0 0.0
    %931 = vmatprep.subr.mxu0 0.0
    %932 = vmatpush2.msra.mxu0 0.0
    %933 = vmatprep.subr.mxu0 0.0
    %934 = vmatpush2.msra.mxu0 0.0
    %935 = vmatprep.subr.mxu0 0.0
    %936 = vmatpush2.msra.mxu0 0.0
    %937 = vmatprep.subr.mxu0 0.0
    %938 = vmatpush2.msra.mxu0 0.0
    %939 = vmatprep.subr.mxu0 0.0
    %940 = vmatpush2.msra.mxu0 0.0
    %941 = vmatprep.subr.mxu0 0.0
    %942 = vmatpush2.msra.mxu0 0.0
    %943 = vmatprep.subr.mxu0 0.0
    %944 = vmatpush2.msra.mxu0 0.0
    %945 = vmatprep.subr.mxu0 0.0
    %946 = vmatpush2.msra.mxu0 0.0
    %947 = vmatprep.subr.mxu0 0.0
    %948 = vmatpush2.msra.mxu0 0.0
    %949 = vmatprep.mubr.f32.mxu0 0.0
    %950 = vmatmul.mubr.f32.gmra.mxu0 %v883
    %v951 = vpop.f32.mrf.mxu0
    %v952 = vadd.f32 0.0, %v951
    %v953 = vpop.f32.mrf.mxu0
    %954 = vdwg.mxu0
    %955 = vrot.lane.b32.xlu0 %v369, 56
    %v956 = vpop.permute.xlu0 %955
    %v959 = vsel %vm375, %v878, 0
    %961 = vmatprep.subr.mxu0 0.0
    %962 = vmatpush1.msra.mxu0 0.0
    %963 = vmatprep.subr.mxu0 0.0
    %964 = vmatpush1.msra.mxu0 0.0
    %965 = vmatprep.subr.mxu0 0.0
    %966 = vmatpush1.msra.mxu0 0.0
    %967 = vmatprep.subr.mxu0 0.0
    %968 = vmatpush1.msra.mxu0 0.0
    %969 = vmatprep.subr.mxu0 0.0
    %970 = vmatpush1.msra.mxu0 0.0
    %971 = vmatprep.subr.mxu0 0.0
    %972 = vmatpush1.msra.mxu0 0.0
    %973 = vmatprep.subr.mxu0 0.0
    %974 = vmatpush1.msra.mxu0 0.0
    %975 = vmatprep.subr.mxu0 0.0
    %976 = vmatpush1.msra.mxu0 0.0
    %977 = vmatprep.subr.mxu0 0.0
    %978 = vmatpush1.msra.mxu0 0.0
    %979 = vmatprep.subr.mxu0 0.0
    %980 = vmatpush1.msra.mxu0 0.0
    %981 = vmatprep.subr.mxu0 0.0
    %982 = vmatpush1.msra.mxu0 0.0
    %983 = vmatprep.subr.mxu0 0.0
    %984 = vmatpush1.msra.mxu0 0.0
    %985 = vmatprep.subr.mxu0 0.0
    %986 = vmatpush1.msra.mxu0 0.0
    %987 = vmatprep.subr.mxu0 0.0
    %988 = vmatpush1.msra.mxu0 0.0
    %989 = vmatprep.subr.mxu0 0.0
    %990 = vmatpush1.msra.mxu0 0.0
    %991 = vmatprep.subr.mxu0 0.0
    %992 = vmatpush1.msra.mxu0 %v956
    %993 = vmatprep.subr.mxu0 0.0
    %994 = vmatpush2.msra.mxu0 0.0
    %995 = vmatprep.subr.mxu0 0.0
    %996 = vmatpush2.msra.mxu0 0.0
    %997 = vmatprep.subr.mxu0 0.0
    %998 = vmatpush2.msra.mxu0 0.0
    %999 = vmatprep.subr.mxu0 0.0
    %1000 = vmatpush2.msra.mxu0 0.0
    %1001 = vmatprep.subr.mxu0 0.0
    %1002 = vmatpush2.msra.mxu0 0.0
    %1003 = vmatprep.subr.mxu0 0.0
    %1004 = vmatpush2.msra.mxu0 0.0
    %1005 = vmatprep.subr.mxu0 0.0
    %1006 = vmatpush2.msra.mxu0 0.0
    %1007 = vmatprep.subr.mxu0 0.0
    %1008 = vmatpush2.msra.mxu0 0.0
    %1009 = vmatprep.subr.mxu0 0.0
    %1010 = vmatpush2.msra.mxu0 0.0
    %1011 = vmatprep.subr.mxu0 0.0
    %1012 = vmatpush2.msra.mxu0 0.0
    %1013 = vmatprep.subr.mxu0 0.0
    %1014 = vmatpush2.msra.mxu0 0.0
    %1015 = vmatprep.subr.mxu0 0.0
    %1016 = vmatpush2.msra.mxu0 0.0
    %1017 = vmatprep.subr.mxu0 0.0
    %1018 = vmatpush2.msra.mxu0 0.0
    %1019 = vmatprep.subr.mxu0 0.0
    %1020 = vmatpush2.msra.mxu0 0.0
    %1021 = vmatprep.subr.mxu0 0.0
    %1022 = vmatpush2.msra.mxu0 0.0
    %1023 = vmatprep.subr.mxu0 0.0
    %1024 = vmatpush2.msra.mxu0 0.0
    %1025 = vmatprep.mubr.f32.mxu0 0.0
    %1026 = vmatmul.mubr.f32.gmra.mxu0 %v959
    %v1027 = vpop.f32.mrf.mxu0
    %v1028 = vadd.f32 0.0, %v1027
    %v1029 = vpop.f32.mrf.mxu0
    %1030 = vdwg.mxu0
    %1031 = vrot.lane.b32.xlu0 %v364, 112
    %v1032 = vpop.permute.xlu0 %1031
    %1033 = vrot.lane.b32.xlu0 %v364, 80
    %v1034 = vpop.permute.xlu0 %1033
    %v1035 = vsel %vm375, %v1032, 0
    %v1037 = vsel %vm375, %v1034, 0
    %1039 = vmatprep.subr.mxu0 0.0
    %1040 = vmatpush1.xpose.msra.mxu0 0.0
    %1041 = vmatprep.subr.mxu0 0.0
    %1042 = vmatpush1.xpose.msra.mxu0 0.0
    %1043 = vmatprep.subr.mxu0 0.0
    %1044 = vmatpush1.xpose.msra.mxu0 0.0
    %1045 = vmatprep.subr.mxu0 0.0
    %1046 = vmatpush1.xpose.msra.mxu0 0.0
    %1047 = vmatprep.subr.mxu0 0.0
    %1048 = vmatpush1.xpose.msra.mxu0 0.0
    %1049 = vmatprep.subr.mxu0 0.0
    %1050 = vmatpush1.xpose.msra.mxu0 0.0
    %1051 = vmatprep.subr.mxu0 0.0
    %1052 = vmatpush1.xpose.msra.mxu0 0.0
    %1053 = vmatprep.subr.mxu0 0.0
    %1054 = vmatpush1.xpose.msra.mxu0 0.0
    %1055 = vmatprep.subr.mxu0 0.0
    %1056 = vmatpush1.xpose.msra.mxu0 0.0
    %1057 = vmatprep.subr.mxu0 0.0
    %1058 = vmatpush1.xpose.msra.mxu0 0.0
    %1059 = vmatprep.subr.mxu0 0.0
    %1060 = vmatpush1.xpose.msra.mxu0 0.0
    %1061 = vmatprep.subr.mxu0 0.0
    %1062 = vmatpush1.xpose.msra.mxu0 0.0
    %1063 = vmatprep.subr.mxu0 0.0
    %1064 = vmatpush1.xpose.msra.mxu0 0.0
    %1065 = vmatprep.subr.mxu0 0.0
    %1066 = vmatpush1.xpose.msra.mxu0 0.0
    %1067 = vmatprep.subr.mxu0 0.0
    %1068 = vmatpush1.xpose.msra.mxu0 0.0
    %1069 = vmatprep.subr.mxu0 0.0
    %1070 = vmatpush1.xpose.msra.mxu0 %v1037
    %1071 = vmatprep.subr.mxu0 0.0
    %1072 = vmatpush2.xpose.msra.mxu0 0.0
    %1073 = vmatprep.subr.mxu0 0.0
    %1074 = vmatpush2.xpose.msra.mxu0 0.0
    %1075 = vmatprep.subr.mxu0 0.0
    %1076 = vmatpush2.xpose.msra.mxu0 0.0
    %1077 = vmatprep.subr.mxu0 0.0
    %1078 = vmatpush2.xpose.msra.mxu0 0.0
    %1079 = vmatprep.subr.mxu0 0.0
    %1080 = vmatpush2.xpose.msra.mxu0 0.0
    %1081 = vmatprep.subr.mxu0 0.0
    %1082 = vmatpush2.xpose.msra.mxu0 0.0
    %1083 = vmatprep.subr.mxu0 0.0
    %1084 = vmatpush2.xpose.msra.mxu0 0.0
    %1085 = vmatprep.subr.mxu0 0.0
    %1086 = vmatpush2.xpose.msra.mxu0 0.0
    %1087 = vmatprep.subr.mxu0 0.0
    %1088 = vmatpush2.xpose.msra.mxu0 0.0
    %1089 = vmatprep.subr.mxu0 0.0
    %1090 = vmatpush2.xpose.msra.mxu0 0.0
    %1091 = vmatprep.subr.mxu0 0.0
    %1092 = vmatpush2.xpose.msra.mxu0 0.0
    %1093 = vmatprep.subr.mxu0 0.0
    %1094 = vmatpush2.xpose.msra.mxu0 0.0
    %1095 = vmatprep.subr.mxu0 0.0
    %1096 = vmatpush2.xpose.msra.mxu0 0.0
    %1097 = vmatprep.subr.mxu0 0.0
    %1098 = vmatpush2.xpose.msra.mxu0 0.0
    %1099 = vmatprep.subr.mxu0 0.0
    %1100 = vmatpush2.xpose.msra.mxu0 0.0
    %1101 = vmatprep.subr.mxu0 0.0
    %1102 = vmatpush2.xpose.msra.mxu0 0.0
    %1103 = vmatprep.mubr.f32.mxu0 0.0
    %1104 = vmatmul.mubr.f32.gmra.mxu0 %v1035
    %v1105 = vpop.f32.mrf.mxu0
    %v1106 = vadd.f32 0.0, %v1105
    %v1107 = vpop.f32.mrf.mxu0
    %1108 = vdwg.mxu0
    %1109 = vrot.lane.b32.xlu0 %v369, 112
    %v1110 = vpop.permute.xlu0 %1109
    %1111 = vrot.lane.b32.xlu0 %v369, 80
    %v1112 = vpop.permute.xlu0 %1111
    %v1113 = vsel %vm375, %v1110, 0
    %v1115 = vsel %vm375, %v1112, 0
    %1117 = vmatprep.subr.mxu0 0.0
    %1118 = vmatpush1.xpose.msra.mxu0 0.0
    %1119 = vmatprep.subr.mxu0 0.0
    %1120 = vmatpush1.xpose.msra.mxu0 0.0
    %1121 = vmatprep.subr.mxu0 0.0
    %1122 = vmatpush1.xpose.msra.mxu0 0.0
    %1123 = vmatprep.subr.mxu0 0.0
    %1124 = vmatpush1.xpose.msra.mxu0 0.0
    %1125 = vmatprep.subr.mxu0 0.0
    %1126 = vmatpush1.xpose.msra.mxu0 0.0
    %1127 = vmatprep.subr.mxu0 0.0
    %1128 = vmatpush1.xpose.msra.mxu0 0.0
    %1129 = vmatprep.subr.mxu0 0.0
    %1130 = vmatpush1.xpose.msra.mxu0 0.0
    %1131 = vmatprep.subr.mxu0 0.0
    %1132 = vmatpush1.xpose.msra.mxu0 0.0
    %1133 = vmatprep.subr.mxu0 0.0
    %1134 = vmatpush1.xpose.msra.mxu0 0.0
    %1135 = vmatprep.subr.mxu0 0.0
    %1136 = vmatpush1.xpose.msra.mxu0 0.0
    %1137 = vmatprep.subr.mxu0 0.0
    %1138 = vmatpush1.xpose.msra.mxu0 0.0
    %1139 = vmatprep.subr.mxu0 0.0
    %1140 = vmatpush1.xpose.msra.mxu0 0.0
    %1141 = vmatprep.subr.mxu0 0.0
    %1142 = vmatpush1.xpose.msra.mxu0 0.0
    %1143 = vmatprep.subr.mxu0 0.0
    %1144 = vmatpush1.xpose.msra.mxu0 0.0
    %1145 = vmatprep.subr.mxu0 0.0
    %1146 = vmatpush1.xpose.msra.mxu0 0.0
    %1147 = vmatprep.subr.mxu0 0.0
    %1148 = vmatpush1.xpose.msra.mxu0 %v1115
    %1149 = vmatprep.subr.mxu0 0.0
    %1150 = vmatpush2.xpose.msra.mxu0 0.0
    %1151 = vmatprep.subr.mxu0 0.0
    %1152 = vmatpush2.xpose.msra.mxu0 0.0
    %1153 = vmatprep.subr.mxu0 0.0
    %1154 = vmatpush2.xpose.msra.mxu0 0.0
    %1155 = vmatprep.subr.mxu0 0.0
    %1156 = vmatpush2.xpose.msra.mxu0 0.0
    %1157 = vmatprep.subr.mxu0 0.0
    %1158 = vmatpush2.xpose.msra.mxu0 0.0
    %1159 = vmatprep.subr.mxu0 0.0
    %1160 = vmatpush2.xpose.msra.mxu0 0.0
    %1161 = vmatprep.subr.mxu0 0.0
    %1162 = vmatpush2.xpose.msra.mxu0 0.0
    %1163 = vmatprep.subr.mxu0 0.0
    %1164 = vmatpush2.xpose.msra.mxu0 0.0
    %1165 = vmatprep.subr.mxu0 0.0
    %1166 = vmatpush2.xpose.msra.mxu0 0.0
    %1167 = vmatprep.subr.mxu0 0.0
    %1168 = vmatpush2.xpose.msra.mxu0 0.0
    %1169 = vmatprep.subr.mxu0 0.0
    %1170 = vmatpush2.xpose.msra.mxu0 0.0
    %1171 = vmatprep.subr.mxu0 0.0
    %1172 = vmatpush2.xpose.msra.mxu0 0.0
    %1173 = vmatprep.subr.mxu0 0.0
    %1174 = vmatpush2.xpose.msra.mxu0 0.0
    %1175 = vmatprep.subr.mxu0 0.0
    %1176 = vmatpush2.xpose.msra.mxu0 0.0
    %1177 = vmatprep.subr.mxu0 0.0
    %1178 = vmatpush2.xpose.msra.mxu0 0.0
    %1179 = vmatprep.subr.mxu0 0.0
    %1180 = vmatpush2.xpose.msra.mxu0 0.0
    %1181 = vmatprep.mubr.f32.mxu0 0.0
    %1182 = vmatmul.mubr.f32.gmra.mxu0 %v1113
    %v1183 = vpop.f32.mrf.mxu0
    %v1184 = vadd.f32 0.0, %v1183
    %v1185 = vpop.f32.mrf.mxu0
    %1186 = vdwg.mxu0
    %v1187 = vsel %vm375, %v1106, -inf
    %1188 = vmax.xlane.f32.xlu0 %v1187
    %v1189 = vpop.xlane.xlu0 %1188
    %v1190 = vsel %vm375, %v1184, -inf
    %1191 = vmax.xlane.f32.xlu0 %v1190
    %v1192 = vpop.xlane.xlu0 %1191
    %v1193 = vsub.f32 %v1106, %v1189
    %v1194 = vsub.f32 %v1184, %v1192
    %v1195 = vmul.f32 %v1193, 1.442695
    %v1196 = vpow.pop %v1195
    %v1197 = vmul.f32 %v1194, 1.442695
    %v1198 = vpow.pop %v1197
    %v1199 = vsel %vm375, %v1196, 0.0
    %1200 = vadd.xlane.f32.xlu0 %v1199
    %v1201 = vpop.xlane.xlu0 %1200
    %v1202 = vsel %vm375, %v1198, 0.0
    %1203 = vadd.xlane.f32.xlu0 %v1202
    %v1204 = vpop.xlane.xlu0 %1203
    %v1205 = vrcp.pop %v1201
    %v1206 = vmul.f32 %v1196, %v1205
    %v1207 = vrcp.pop %v1204
    %v1208 = vmul.f32 %v1198, %v1207
    %1209 = vrot.lane.b32.xlu0 %v364, 48
    %v1210 = vpop.permute.xlu0 %1209
    %v1213 = vsel %vm375, %v1206, 0
    %1215 = vmatprep.subr.mxu0 0.0
    %1216 = vmatpush1.msra.mxu0 0.0
    %1217 = vmatprep.subr.mxu0 0.0
    %1218 = vmatpush1.msra.mxu0 0.0
    %1219 = vmatprep.subr.mxu0 0.0
    %1220 = vmatpush1.msra.mxu0 0.0
    %1221 = vmatprep.subr.mxu0 0.0
    %1222 = vmatpush1.msra.mxu0 0.0
    %1223 = vmatprep.subr.mxu0 0.0
    %1224 = vmatpush1.msra.mxu0 0.0
    %1225 = vmatprep.subr.mxu0 0.0
    %1226 = vmatpush1.msra.mxu0 0.0
    %1227 = vmatprep.subr.mxu0 0.0
    %1228 = vmatpush1.msra.mxu0 0.0
    %1229 = vmatprep.subr.mxu0 0.0
    %1230 = vmatpush1.msra.mxu0 0.0
    %1231 = vmatprep.subr.mxu0 0.0
    %1232 = vmatpush1.msra.mxu0 0.0
    %1233 = vmatprep.subr.mxu0 0.0
    %1234 = vmatpush1.msra.mxu0 0.0
    %1235 = vmatprep.subr.mxu0 0.0
    %1236 = vmatpush1.msra.mxu0 0.0
    %1237 = vmatprep.subr.mxu0 0.0
    %1238 = vmatpush1.msra.mxu0 0.0
    %1239 = vmatprep.subr.mxu0 0.0
    %1240 = vmatpush1.msra.mxu0 0.0
    %1241 = vmatprep.subr.mxu0 0.0
    %1242 = vmatpush1.msra.mxu0 0.0
    %1243 = vmatprep.subr.mxu0 0.0
    %1244 = vmatpush1.msra.mxu0 0.0
    %1245 = vmatprep.subr.mxu0 0.0
    %1246 = vmatpush1.msra.mxu0 %v1210
    %1247 = vmatprep.subr.mxu0 0.0
    %1248 = vmatpush2.msra.mxu0 0.0
    %1249 = vmatprep.subr.mxu0 0.0
    %1250 = vmatpush2.msra.mxu0 0.0
    %1251 = vmatprep.subr.mxu0 0.0
    %1252 = vmatpush2.msra.mxu0 0.0
    %1253 = vmatprep.subr.mxu0 0.0
    %1254 = vmatpush2.msra.mxu0 0.0
    %1255 = vmatprep.subr.mxu0 0.0
    %1256 = vmatpush2.msra.mxu0 0.0
    %1257 = vmatprep.subr.mxu0 0.0
    %1258 = vmatpush2.msra.mxu0 0.0
    %1259 = vmatprep.subr.mxu0 0.0
    %1260 = vmatpush2.msra.mxu0 0.0
    %1261 = vmatprep.subr.mxu0 0.0
    %1262 = vmatpush2.msra.mxu0 0.0
    %1263 = vmatprep.subr.mxu0 0.0
    %1264 = vmatpush2.msra.mxu0 0.0
    %1265 = vmatprep.subr.mxu0 0.0
    %1266 = vmatpush2.msra.mxu0 0.0
    %1267 = vmatprep.subr.mxu0 0.0
    %1268 = vmatpush2.msra.mxu0 0.0
    %1269 = vmatprep.subr.mxu0 0.0
    %1270 = vmatpush2.msra.mxu0 0.0
    %1271 = vmatprep.subr.mxu0 0.0
    %1272 = vmatpush2.msra.mxu0 0.0
    %1273 = vmatprep.subr.mxu0 0.0
    %1274 = vmatpush2.msra.mxu0 0.0
    %1275 = vmatprep.subr.mxu0 0.0
    %1276 = vmatpush2.msra.mxu0 0.0
    %1277 = vmatprep.subr.mxu0 0.0
    %1278 = vmatpush2.msra.mxu0 0.0
    %1279 = vmatprep.mubr.f32.mxu0 0.0
    %1280 = vmatmul.mubr.f32.gmra.mxu0 %v1213
    %v1281 = vpop.f32.mrf.mxu0
    %v1282 = vadd.f32 0.0, %v1281
    %v1283 = vpop.f32.mrf.mxu0
    %1284 = vdwg.mxu0
    %1285 = vrot.lane.b32.xlu0 %v369, 48
    %v1286 = vpop.permute.xlu0 %1285
    %v1289 = vsel %vm375, %v1208, 0
    %1291 = vmatprep.subr.mxu0 0.0
    %1292 = vmatpush1.msra.mxu0 0.0
    %1293 = vmatprep.subr.mxu0 0.0
    %1294 = vmatpush1.msra.mxu0 0.0
    %1295 = vmatprep.subr.mxu0 0.0
    %1296 = vmatpush1.msra.mxu0 0.0
    %1297 = vmatprep.subr.mxu0 0.0
    %1298 = vmatpush1.msra.mxu0 0.0
    %1299 = vmatprep.subr.mxu0 0.0
    %1300 = vmatpush1.msra.mxu0 0.0
    %1301 = vmatprep.subr.mxu0 0.0
    %1302 = vmatpush1.msra.mxu0 0.0
    %1303 = vmatprep.subr.mxu0 0.0
    %1304 = vmatpush1.msra.mxu0 0.0
    %1305 = vmatprep.subr.mxu0 0.0
    %1306 = vmatpush1.msra.mxu0 0.0
    %1307 = vmatprep.subr.mxu0 0.0
    %1308 = vmatpush1.msra.mxu0 0.0
    %1309 = vmatprep.subr.mxu0 0.0
    %1310 = vmatpush1.msra.mxu0 0.0
    %1311 = vmatprep.subr.mxu0 0.0
    %1312 = vmatpush1.msra.mxu0 0.0
    %1313 = vmatprep.subr.mxu0 0.0
    %1314 = vmatpush1.msra.mxu0 0.0
    %1315 = vmatprep.subr.mxu0 0.0
    %1316 = vmatpush1.msra.mxu0 0.0
    %1317 = vmatprep.subr.mxu0 0.0
    %1318 = vmatpush1.msra.mxu0 0.0
    %1319 = vmatprep.subr.mxu0 0.0
    %1320 = vmatpush1.msra.mxu0 0.0
    %1321 = vmatprep.subr.mxu0 0.0
    %1322 = vmatpush1.msra.mxu0 %v1286
    %1323 = vmatprep.subr.mxu0 0.0
    %1324 = vmatpush2.msra.mxu0 0.0
    %1325 = vmatprep.subr.mxu0 0.0
    %1326 = vmatpush2.msra.mxu0 0.0
    %1327 = vmatprep.subr.mxu0 0.0
    %1328 = vmatpush2.msra.mxu0 0.0
    %1329 = vmatprep.subr.mxu0 0.0
    %1330 = vmatpush2.msra.mxu0 0.0
    %1331 = vmatprep.subr.mxu0 0.0
    %1332 = vmatpush2.msra.mxu0 0.0
    %1333 = vmatprep.subr.mxu0 0.0
    %1334 = vmatpush2.msra.mxu0 0.0
    %1335 = vmatprep.subr.mxu0 0.0
    %1336 = vmatpush2.msra.mxu0 0.0
    %1337 = vmatprep.subr.mxu0 0.0
    %1338 = vmatpush2.msra.mxu0 0.0
    %1339 = vmatprep.subr.mxu0 0.0
    %1340 = vmatpush2.msra.mxu0 0.0
    %1341 = vmatprep.subr.mxu0 0.0
    %1342 = vmatpush2.msra.mxu0 0.0
    %1343 = vmatprep.subr.mxu0 0.0
    %1344 = vmatpush2.msra.mxu0 0.0
    %1345 = vmatprep.subr.mxu0 0.0
    %1346 = vmatpush2.msra.mxu0 0.0
    %1347 = vmatprep.subr.mxu0 0.0
    %1348 = vmatpush2.msra.mxu0 0.0
    %1349 = vmatprep.subr.mxu0 0.0
    %1350 = vmatpush2.msra.mxu0 0.0
    %1351 = vmatprep.subr.mxu0 0.0
    %1352 = vmatpush2.msra.mxu0 0.0
    %1353 = vmatprep.subr.mxu0 0.0
    %1354 = vmatpush2.msra.mxu0 0.0
    %1355 = vmatprep.mubr.f32.mxu0 0.0
    %1356 = vmatmul.mubr.f32.gmra.mxu0 %v1289
    %v1357 = vpop.f32.mrf.mxu0
    %v1358 = vadd.f32 0.0, %v1357
    %v1359 = vpop.f32.mrf.mxu0
    %1360 = vdwg.mxu0
    %1361 = vrot.lane.b32.xlu0 %v364, 104
    %v1362 = vpop.permute.xlu0 %1361
    %1363 = vrot.lane.b32.xlu0 %v364, 72
    %v1364 = vpop.permute.xlu0 %1363
    %v1365 = vsel %vm375, %v1362, 0
    %v1367 = vsel %vm375, %v1364, 0
    %1369 = vmatprep.subr.mxu0 0.0
    %1370 = vmatpush1.xpose.msra.mxu0 0.0
    %1371 = vmatprep.subr.mxu0 0.0
    %1372 = vmatpush1.xpose.msra.mxu0 0.0
    %1373 = vmatprep.subr.mxu0 0.0
    %1374 = vmatpush1.xpose.msra.mxu0 0.0
    %1375 = vmatprep.subr.mxu0 0.0
    %1376 = vmatpush1.xpose.msra.mxu0 0.0
    %1377 = vmatprep.subr.mxu0 0.0
    %1378 = vmatpush1.xpose.msra.mxu0 0.0
    %1379 = vmatprep.subr.mxu0 0.0
    %1380 = vmatpush1.xpose.msra.mxu0 0.0
    %1381 = vmatprep.subr.mxu0 0.0
    %1382 = vmatpush1.xpose.msra.mxu0 0.0
    %1383 = vmatprep.subr.mxu0 0.0
    %1384 = vmatpush1.xpose.msra.mxu0 0.0
    %1385 = vmatprep.subr.mxu0 0.0
    %1386 = vmatpush1.xpose.msra.mxu0 0.0
    %1387 = vmatprep.subr.mxu0 0.0
    %1388 = vmatpush1.xpose.msra.mxu0 0.0
    %1389 = vmatprep.subr.mxu0 0.0
    %1390 = vmatpush1.xpose.msra.mxu0 0.0
    %1391 = vmatprep.subr.mxu0 0.0
    %1392 = vmatpush1.xpose.msra.mxu0 0.0
    %1393 = vmatprep.subr.mxu0 0.0
    %1394 = vmatpush1.xpose.msra.mxu0 0.0
    %1395 = vmatprep.subr.mxu0 0.0
    %1396 = vmatpush1.xpose.msra.mxu0 0.0
    %1397 = vmatprep.subr.mxu0 0.0
    %1398 = vmatpush1.xpose.msra.mxu0 0.0
    %1399 = vmatprep.subr.mxu0 0.0
    %1400 = vmatpush1.xpose.msra.mxu0 %v1367
    %1401 = vmatprep.subr.mxu0 0.0
    %1402 = vmatpush2.xpose.msra.mxu0 0.0
    %1403 = vmatprep.subr.mxu0 0.0
    %1404 = vmatpush2.xpose.msra.mxu0 0.0
    %1405 = vmatprep.subr.mxu0 0.0
    %1406 = vmatpush2.xpose.msra.mxu0 0.0
    %1407 = vmatprep.subr.mxu0 0.0
    %1408 = vmatpush2.xpose.msra.mxu0 0.0
    %1409 = vmatprep.subr.mxu0 0.0
    %1410 = vmatpush2.xpose.msra.mxu0 0.0
    %1411 = vmatprep.subr.mxu0 0.0
    %1412 = vmatpush2.xpose.msra.mxu0 0.0
    %1413 = vmatprep.subr.mxu0 0.0
    %1414 = vmatpush2.xpose.msra.mxu0 0.0
    %1415 = vmatprep.subr.mxu0 0.0
    %1416 = vmatpush2.xpose.msra.mxu0 0.0
    %1417 = vmatprep.subr.mxu0 0.0
    %1418 = vmatpush2.xpose.msra.mxu0 0.0
    %1419 = vmatprep.subr.mxu0 0.0
    %1420 = vmatpush2.xpose.msra.mxu0 0.0
    %1421 = vmatprep.subr.mxu0 0.0
    %1422 = vmatpush2.xpose.msra.mxu0 0.0
    %1423 = vmatprep.subr.mxu0 0.0
    %1424 = vmatpush2.xpose.msra.mxu0 0.0
    %1425 = vmatprep.subr.mxu0 0.0
    %1426 = vmatpush2.xpose.msra.mxu0 0.0
    %1427 = vmatprep.subr.mxu0 0.0
    %1428 = vmatpush2.xpose.msra.mxu0 0.0
    %1429 = vmatprep.subr.mxu0 0.0
    %1430 = vmatpush2.xpose.msra.mxu0 0.0
    %1431 = vmatprep.subr.mxu0 0.0
    %1432 = vmatpush2.xpose.msra.mxu0 0.0
    %1433 = vmatprep.mubr.f32.mxu0 0.0
    %1434 = vmatmul.mubr.f32.gmra.mxu0 %v1365
    %v1435 = vpop.f32.mrf.mxu0
    %v1436 = vadd.f32 0.0, %v1435
    %v1437 = vpop.f32.mrf.mxu0
    %1438 = vdwg.mxu0
    %1439 = vrot.lane.b32.xlu0 %v369, 104
    %v1440 = vpop.permute.xlu0 %1439
    %1441 = vrot.lane.b32.xlu0 %v369, 72
    %v1442 = vpop.permute.xlu0 %1441
    %v1443 = vsel %vm375, %v1440, 0
    %v1445 = vsel %vm375, %v1442, 0
    %1447 = vmatprep.subr.mxu0 0.0
    %1448 = vmatpush1.xpose.msra.mxu0 0.0
    %1449 = vmatprep.subr.mxu0 0.0
    %1450 = vmatpush1.xpose.msra.mxu0 0.0
    %1451 = vmatprep.subr.mxu0 0.0
    %1452 = vmatpush1.xpose.msra.mxu0 0.0
    %1453 = vmatprep.subr.mxu0 0.0
    %1454 = vmatpush1.xpose.msra.mxu0 0.0
    %1455 = vmatprep.subr.mxu0 0.0
    %1456 = vmatpush1.xpose.msra.mxu0 0.0
    %1457 = vmatprep.subr.mxu0 0.0
    %1458 = vmatpush1.xpose.msra.mxu0 0.0
    %1459 = vmatprep.subr.mxu0 0.0
    %1460 = vmatpush1.xpose.msra.mxu0 0.0
    %1461 = vmatprep.subr.mxu0 0.0
    %1462 = vmatpush1.xpose.msra.mxu0 0.0
    %1463 = vmatprep.subr.mxu0 0.0
    %1464 = vmatpush1.xpose.msra.mxu0 0.0
    %1465 = vmatprep.subr.mxu0 0.0
    %1466 = vmatpush1.xpose.msra.mxu0 0.0
    %1467 = vmatprep.subr.mxu0 0.0
    %1468 = vmatpush1.xpose.msra.mxu0 0.0
    %1469 = vmatprep.subr.mxu0 0.0
    %1470 = vmatpush1.xpose.msra.mxu0 0.0
    %1471 = vmatprep.subr.mxu0 0.0
    %1472 = vmatpush1.xpose.msra.mxu0 0.0
    %1473 = vmatprep.subr.mxu0 0.0
    %1474 = vmatpush1.xpose.msra.mxu0 0.0
    %1475 = vmatprep.subr.mxu0 0.0
    %1476 = vmatpush1.xpose.msra.mxu0 0.0
    %1477 = vmatprep.subr.mxu0 0.0
    %1478 = vmatpush1.xpose.msra.mxu0 %v1445
    %1479 = vmatprep.subr.mxu0 0.0
    %1480 = vmatpush2.xpose.msra.mxu0 0.0
    %1481 = vmatprep.subr.mxu0 0.0
    %1482 = vmatpush2.xpose.msra.mxu0 0.0
    %1483 = vmatprep.subr.mxu0 0.0
    %1484 = vmatpush2.xpose.msra.mxu0 0.0
    %1485 = vmatprep.subr.mxu0 0.0
    %1486 = vmatpush2.xpose.msra.mxu0 0.0
    %1487 = vmatprep.subr.mxu0 0.0
    %1488 = vmatpush2.xpose.msra.mxu0 0.0
    %1489 = vmatprep.subr.mxu0 0.0
    %1490 = vmatpush2.xpose.msra.mxu0 0.0
    %1491 = vmatprep.subr.mxu0 0.0
    %1492 = vmatpush2.xpose.msra.mxu0 0.0
    %1493 = vmatprep.subr.mxu0 0.0
    %1494 = vmatpush2.xpose.msra.mxu0 0.0
    %1495 = vmatprep.subr.mxu0 0.0
    %1496 = vmatpush2.xpose.msra.mxu0 0.0
    %1497 = vmatprep.subr.mxu0 0.0
    %1498 = vmatpush2.xpose.msra.mxu0 0.0
    %1499 = vmatprep.subr.mxu0 0.0
    %1500 = vmatpush2.xpose.msra.mxu0 0.0
    %1501 = vmatprep.subr.mxu0 0.0
    %1502 = vmatpush2.xpose.msra.mxu0 0.0
    %1503 = vmatprep.subr.mxu0 0.0
    %1504 = vmatpush2.xpose.msra.mxu0 0.0
    %1505 = vmatprep.subr.mxu0 0.0
    %1506 = vmatpush2.xpose.msra.mxu0 0.0
    %1507 = vmatprep.subr.mxu0 0.0
    %1508 = vmatpush2.xpose.msra.mxu0 0.0
    %1509 = vmatprep.subr.mxu0 0.0
    %1510 = vmatpush2.xpose.msra.mxu0 0.0
    %1511 = vmatprep.mubr.f32.mxu0 0.0
    %1512 = vmatmul.mubr.f32.gmra.mxu0 %v1443
    %v1513 = vpop.f32.mrf.mxu0
    %v1514 = vadd.f32 0.0, %v1513
    %v1515 = vpop.f32.mrf.mxu0
    %1516 = vdwg.mxu0
    %v1517 = vsel %vm375, %v1436, -inf
    %1518 = vmax.xlane.f32.xlu0 %v1517
    %v1519 = vpop.xlane.xlu0 %1518
    %v1520 = vsel %vm375, %v1514, -inf
    %1521 = vmax.xlane.f32.xlu0 %v1520
    %v1522 = vpop.xlane.xlu0 %1521
    %v1523 = vsub.f32 %v1436, %v1519
    %v1524 = vsub.f32 %v1514, %v1522
    %v1525 = vmul.f32 %v1523, 1.442695
    %v1526 = vpow.pop %v1525
    %v1527 = vmul.f32 %v1524, 1.442695
    %v1528 = vpow.pop %v1527
    %v1529 = vsel %vm375, %v1526, 0.0
    %1530 = vadd.xlane.f32.xlu0 %v1529
    %v1531 = vpop.xlane.xlu0 %1530
    %v1532 = vsel %vm375, %v1528, 0.0
    %1533 = vadd.xlane.f32.xlu0 %v1532
    %v1534 = vpop.xlane.xlu0 %1533
    %v1535 = vrcp.pop %v1531
    %v1536 = vmul.f32 %v1526, %v1535
    %v1537 = vrcp.pop %v1534
    %v1538 = vmul.f32 %v1528, %v1537
    %1539 = vrot.lane.b32.xlu0 %v364, 40
    %v1540 = vpop.permute.xlu0 %1539
    %v1543 = vsel %vm375, %v1536, 0
    %1545 = vmatprep.subr.mxu0 0.0
    %1546 = vmatpush1.msra.mxu0 0.0
    %1547 = vmatprep.subr.mxu0 0.0
    %1548 = vmatpush1.msra.mxu0 0.0
    %1549 = vmatprep.subr.mxu0 0.0
    %1550 = vmatpush1.msra.mxu0 0.0
    %1551 = vmatprep.subr.mxu0 0.0
    %1552 = vmatpush1.msra.mxu0 0.0
    %1553 = vmatprep.subr.mxu0 0.0
    %1554 = vmatpush1.msra.mxu0 0.0
    %1555 = vmatprep.subr.mxu0 0.0
    %1556 = vmatpush1.msra.mxu0 0.0
    %1557 = vmatprep.subr.mxu0 0.0
    %1558 = vmatpush1.msra.mxu0 0.0
    %1559 = vmatprep.subr.mxu0 0.0
    %1560 = vmatpush1.msra.mxu0 0.0
    %1561 = vmatprep.subr.mxu0 0.0
    %1562 = vmatpush1.msra.mxu0 0.0
    %1563 = vmatprep.subr.mxu0 0.0
    %1564 = vmatpush1.msra.mxu0 0.0
    %1565 = vmatprep.subr.mxu0 0.0
    %1566 = vmatpush1.msra.mxu0 0.0
    %1567 = vmatprep.subr.mxu0 0.0
    %1568 = vmatpush1.msra.mxu0 0.0
    %1569 = vmatprep.subr.mxu0 0.0
    %1570 = vmatpush1.msra.mxu0 0.0
    %1571 = vmatprep.subr.mxu0 0.0
    %1572 = vmatpush1.msra.mxu0 0.0
    %1573 = vmatprep.subr.mxu0 0.0
    %1574 = vmatpush1.msra.mxu0 0.0
    %1575 = vmatprep.subr.mxu0 0.0
    %1576 = vmatpush1.msra.mxu0 %v1540
    %1577 = vmatprep.subr.mxu0 0.0
    %1578 = vmatpush2.msra.mxu0 0.0
    %1579 = vmatprep.subr.mxu0 0.0
    %1580 = vmatpush2.msra.mxu0 0.0
    %1581 = vmatprep.subr.mxu0 0.0
    %1582 = vmatpush2.msra.mxu0 0.0
    %1583 = vmatprep.subr.mxu0 0.0
    %1584 = vmatpush2.msra.mxu0 0.0
    %1585 = vmatprep.subr.mxu0 0.0
    %1586 = vmatpush2.msra.mxu0 0.0
    %1587 = vmatprep.subr.mxu0 0.0
    %1588 = vmatpush2.msra.mxu0 0.0
    %1589 = vmatprep.subr.mxu0 0.0
    %1590 = vmatpush2.msra.mxu0 0.0
    %1591 = vmatprep.subr.mxu0 0.0
    %1592 = vmatpush2.msra.mxu0 0.0
    %1593 = vmatprep.subr.mxu0 0.0
    %1594 = vmatpush2.msra.mxu0 0.0
    %1595 = vmatprep.subr.mxu0 0.0
    %1596 = vmatpush2.msra.mxu0 0.0
    %1597 = vmatprep.subr.mxu0 0.0
    %1598 = vmatpush2.msra.mxu0 0.0
    %1599 = vmatprep.subr.mxu0 0.0
    %1600 = vmatpush2.msra.mxu0 0.0
    %1601 = vmatprep.subr.mxu0 0.0
    %1602 = vmatpush2.msra.mxu0 0.0
    %1603 = vmatprep.subr.mxu0 0.0
    %1604 = vmatpush2.msra.mxu0 0.0
    %1605 = vmatprep.subr.mxu0 0.0
    %1606 = vmatpush2.msra.mxu0 0.0
    %1607 = vmatprep.subr.mxu0 0.0
    %1608 = vmatpush2.msra.mxu0 0.0
    %1609 = vmatprep.mubr.f32.mxu0 0.0
    %1610 = vmatmul.mubr.f32.gmra.mxu0 %v1543
    %v1611 = vpop.f32.mrf.mxu0
    %v1612 = vadd.f32 0.0, %v1611
    %v1613 = vpop.f32.mrf.mxu0
    %1614 = vdwg.mxu0
    %1615 = vrot.lane.b32.xlu0 %v369, 40
    %v1616 = vpop.permute.xlu0 %1615
    %v1619 = vsel %vm375, %v1538, 0
    %1621 = vmatprep.subr.mxu0 0.0
    %1622 = vmatpush1.msra.mxu0 0.0
    %1623 = vmatprep.subr.mxu0 0.0
    %1624 = vmatpush1.msra.mxu0 0.0
    %1625 = vmatprep.subr.mxu0 0.0
    %1626 = vmatpush1.msra.mxu0 0.0
    %1627 = vmatprep.subr.mxu0 0.0
    %1628 = vmatpush1.msra.mxu0 0.0
    %1629 = vmatprep.subr.mxu0 0.0
    %1630 = vmatpush1.msra.mxu0 0.0
    %1631 = vmatprep.subr.mxu0 0.0
    %1632 = vmatpush1.msra.mxu0 0.0
    %1633 = vmatprep.subr.mxu0 0.0
    %1634 = vmatpush1.msra.mxu0 0.0
    %1635 = vmatprep.subr.mxu0 0.0
    %1636 = vmatpush1.msra.mxu0 0.0
    %1637 = vmatprep.subr.mxu0 0.0
    %1638 = vmatpush1.msra.mxu0 0.0
    %1639 = vmatprep.subr.mxu0 0.0
    %1640 = vmatpush1.msra.mxu0 0.0
    %1641 = vmatprep.subr.mxu0 0.0
    %1642 = vmatpush1.msra.mxu0 0.0
    %1643 = vmatprep.subr.mxu0 0.0
    %1644 = vmatpush1.msra.mxu0 0.0
    %1645 = vmatprep.subr.mxu0 0.0
    %1646 = vmatpush1.msra.mxu0 0.0
    %1647 = vmatprep.subr.mxu0 0.0
    %1648 = vmatpush1.msra.mxu0 0.0
    %1649 = vmatprep.subr.mxu0 0.0
    %1650 = vmatpush1.msra.mxu0 0.0
    %1651 = vmatprep.subr.mxu0 0.0
    %1652 = vmatpush1.msra.mxu0 %v1616
    %1653 = vmatprep.subr.mxu0 0.0
    %1654 = vmatpush2.msra.mxu0 0.0
    %1655 = vmatprep.subr.mxu0 0.0
    %1656 = vmatpush2.msra.mxu0 0.0
    %1657 = vmatprep.subr.mxu0 0.0
    %1658 = vmatpush2.msra.mxu0 0.0
    %1659 = vmatprep.subr.mxu0 0.0
    %1660 = vmatpush2.msra.mxu0 0.0
    %1661 = vmatprep.subr.mxu0 0.0
    %1662 = vmatpush2.msra.mxu0 0.0
    %1663 = vmatprep.subr.mxu0 0.0
    %1664 = vmatpush2.msra.mxu0 0.0
    %1665 = vmatprep.subr.mxu0 0.0
    %1666 = vmatpush2.msra.mxu0 0.0
    %1667 = vmatprep.subr.mxu0 0.0
    %1668 = vmatpush2.msra.mxu0 0.0
    %1669 = vmatprep.subr.mxu0 0.0
    %1670 = vmatpush2.msra.mxu0 0.0
    %1671 = vmatprep.subr.mxu0 0.0
    %1672 = vmatpush2.msra.mxu0 0.0
    %1673 = vmatprep.subr.mxu0 0.0
    %1674 = vmatpush2.msra.mxu0 0.0
    %1675 = vmatprep.subr.mxu0 0.0
    %1676 = vmatpush2.msra.mxu0 0.0
    %1677 = vmatprep.subr.mxu0 0.0
    %1678 = vmatpush2.msra.mxu0 0.0
    %1679 = vmatprep.subr.mxu0 0.0
    %1680 = vmatpush2.msra.mxu0 0.0
    %1681 = vmatprep.subr.mxu0 0.0
    %1682 = vmatpush2.msra.mxu0 0.0
    %1683 = vmatprep.subr.mxu0 0.0
    %1684 = vmatpush2.msra.mxu0 0.0
    %1685 = vmatprep.mubr.f32.mxu0 0.0
    %1686 = vmatmul.mubr.f32.gmra.mxu0 %v1619
    %v1687 = vpop.f32.mrf.mxu0
    %v1688 = vadd.f32 0.0, %v1687
    %v1689 = vpop.f32.mrf.mxu0
    %1690 = vdwg.mxu0
    %1693 = vrot.lane.b32.xlu0 %v952, 8
    %v1694 = vpop.permute.xlu0 %1693
    %1695 = vrot.lane.b32.xlu0 %v1028, 8
    %v1696 = vpop.permute.xlu0 %1695
    %1701 = vrot.lane.b32.xlu0 %v1282, 16
    %v1702 = vpop.permute.xlu0 %1701
    %1703 = vrot.lane.b32.xlu0 %v1358, 16
    %v1704 = vpop.permute.xlu0 %1703
    %1709 = vrot.lane.b32.xlu0 %v1612, 24
    %v1710 = vpop.permute.xlu0 %1709
    %1711 = vrot.lane.b32.xlu0 %v1688, 24
    %v1712 = vpop.permute.xlu0 %1711
    %v1715 = vsel %vm375, %v622, %v1694
    %v1716 = vsel %vm375, %v698, %v1696
    %v1717 = vsel %vm150, %v1715, %v1702
    %v1718 = vsel %vm150, %v1716, %v1704
    %vm1719 = vcmask 195584
    %v1720 = vsel %vm1719, %v1717, %v1710
    %v1721 = vsel %vm1719, %v1718, %v1712
    %v1722 = vld [vmem:[%s5] sm:$0xff]
    %v1723 = vld [vmem:[%s5 + $0x8] sm:$0xff]
    %v1724 = vld [vmem:[%s5 + $0x10] sm:$0xff]
    %v1725 = vld [vmem:[%s5 + $0x18] sm:$0xff]
    %v1726 = vld [vmem:[%s6] sm:$0x1]
    %v1728 = vlaneseq
    %v1729 = vshrl.u32 %v1728, 7
    %v1730 = vsub.s32 0, %v1729
    %v1731 = vrot.slane %v1726, %v1730
    %v1734 = vsel %vm236, %v1720, 0
    %v1737 = vsel %vm236, %v1721, 0
    %1739 = vmatprep.subr.mxu0 0.0
    %1740 = vmatpush1.msra.mxu0 0.0
    %1741 = vmatprep.subr.mxu0 0.0
    %1742 = vmatpush1.msra.mxu0 0.0
    %1743 = vmatprep.subr.mxu0 0.0
    %1744 = vmatpush1.msra.mxu0 0.0
    %1745 = vmatprep.subr.mxu0 0.0
    %1746 = vmatpush1.msra.mxu0 0.0
    %1747 = vmatprep.subr.mxu0 0.0
    %1748 = vmatpush1.msra.mxu0 0.0
    %1749 = vmatprep.subr.mxu0 0.0
    %1750 = vmatpush1.msra.mxu0 0.0
    %1751 = vmatprep.subr.mxu0 0.0
    %1752 = vmatpush1.msra.mxu0 0.0
    %1753 = vmatprep.subr.mxu0 0.0
    %1754 = vmatpush1.msra.mxu0 0.0
    %1755 = vmatprep.subr.mxu0 0.0
    %1756 = vmatpush1.msra.mxu0 0.0
    %1757 = vmatprep.subr.mxu0 0.0
    %1758 = vmatpush1.msra.mxu0 0.0
    %1759 = vmatprep.subr.mxu0 0.0
    %1760 = vmatpush1.msra.mxu0 0.0
    %1761 = vmatprep.subr.mxu0 0.0
    %1762 = vmatpush1.msra.mxu0 0.0
    %1763 = vmatprep.subr.mxu0 0.0
    %1764 = vmatpush1.msra.mxu0 %v1725
    %1765 = vmatprep.subr.mxu0 0.0
    %1766 = vmatpush1.msra.mxu0 %v1724
    %1767 = vmatprep.subr.mxu0 0.0
    %1768 = vmatpush1.msra.mxu0 %v1723
    %1769 = vmatprep.subr.mxu0 0.0
    %1770 = vmatpush1.msra.mxu0 %v1722
    %1771 = vmatprep.subr.mxu0 0.0
    %1772 = vmatpush2.msra.mxu0 0.0
    %1773 = vmatprep.subr.mxu0 0.0
    %1774 = vmatpush2.msra.mxu0 0.0
    %1775 = vmatprep.subr.mxu0 0.0
    %1776 = vmatpush2.msra.mxu0 0.0
    %1777 = vmatprep.subr.mxu0 0.0
    %1778 = vmatpush2.msra.mxu0 0.0
    %1779 = vmatprep.subr.mxu0 0.0
    %1780 = vmatpush2.msra.mxu0 0.0
    %1781 = vmatprep.subr.mxu0 0.0
    %1782 = vmatpush2.msra.mxu0 0.0
    %1783 = vmatprep.subr.mxu0 0.0
    %1784 = vmatpush2.msra.mxu0 0.0
    %1785 = vmatprep.subr.mxu0 0.0
    %1786 = vmatpush2.msra.mxu0 0.0
    %1787 = vmatprep.subr.mxu0 0.0
    %1788 = vmatpush2.msra.mxu0 0.0
    %1789 = vmatprep.subr.mxu0 0.0
    %1790 = vmatpush2.msra.mxu0 0.0
    %1791 = vmatprep.subr.mxu0 0.0
    %1792 = vmatpush2.msra.mxu0 0.0
    %1793 = vmatprep.subr.mxu0 0.0
    %1794 = vmatpush2.msra.mxu0 0.0
    %1795 = vmatprep.subr.mxu0 0.0
    %1796 = vmatpush2.msra.mxu0 0.0
    %1797 = vmatprep.subr.mxu0 0.0
    %1798 = vmatpush2.msra.mxu0 0.0
    %1799 = vmatprep.subr.mxu0 0.0
    %1800 = vmatpush2.msra.mxu0 0.0
    %1801 = vmatprep.subr.mxu0 0.0
    %1802 = vmatpush2.msra.mxu0 0.0
    %1803 = vmatprep.mubr.f32.mxu0 0.0
    %1804 = vmatmul.mubr.f32.gmra.mxu0 %v1734
    %v1805 = vpop.f32.mrf.mxu0
    %v1806 = vadd.f32 %v1731, %v1805
    %v1807 = vpop.f32.mrf.mxu0
    %1808 = vmatprep.mubr.f32.mxu0 0.0
    %1809 = vmatmul.mubr.f32.gmra.mxu0 %v1737
    %v1810 = vpop.f32.mrf.mxu0
    %v1811 = vadd.f32 %v1731, %v1810
    %v1812 = vpop.f32.mrf.mxu0
    %1813 = vdwg.mxu0
    %v1814 = vld [vmem:[#allocation8] sm:$0x1]
    %v1815 = vld [vmem:[#allocation10] sm:$0x1]
    %v1816 = vsel %vm236, %v1806, 0.0
    %1817 = vadd.xlane.f32.xlu0 %v1816
    %v1818 = vpop.xlane.xlu0 %1817
    %v1819 = vsel %vm236, %v1811, 0.0
    %1820 = vadd.xlane.f32.xlu0 %v1819
    %v1821 = vpop.xlane.xlu0 %1820
    %v1822 = vmul.f32 %v1818, %v243
    %v1823 = vmul.f32 %v1821, %v243
    %v1824 = vsub.f32 %v1806, %v1822
    %v1825 = vsub.f32 %v1811, %v1823
    %v1826 = vmul.f32 %v1824, %v1824
    %v1827 = vmul.f32 %v1825, %v1825
    %v1828 = vsel %vm236, %v1826, 0.0
    %1829 = vadd.xlane.f32.xlu0 %v1828
    %v1830 = vpop.xlane.xlu0 %1829
    %v1831 = vsel %vm236, %v1827, 0.0
    %1832 = vadd.xlane.f32.xlu0 %v1831
    %v1833 = vpop.xlane.xlu0 %1832
    %v1834 = vmul.f32 %v1830, %v243
    %v1835 = vmul.f32 %v1833, %v243
    %v1836 = vadd.f32 %v1834, 1e-05
    %v1837 = vadd.f32 %v1835, 1e-05
    %v1838 = vrsqrt.pop %v1836
    %v1839 = vrsqrt.pop %v1837
    %v1840 = vmul.f32 %v1824, %v1838
    %v1841 = vmul.f32 %v1825, %v1839
    %v1843 = vlaneseq
    %v1844 = vshrl.u32 %v1843, 7
    %v1845 = vsub.s32 0, %v1844
    %v1846 = vrot.slane %v1814, %v1845
    %v1848 = vmul.f32 %v1840, %v1846
    %v1849 = vmul.f32 %v1841, %v1846
    %v1851 = vlaneseq
    %v1852 = vshrl.u32 %v1851, 7
    %v1853 = vsub.s32 0, %v1852
    %v1854 = vrot.slane %v1815, %v1853
    %v1856 = vadd.f32 %v1848, %v1854
    %v1857 = vadd.f32 %v1849, %v1854
    %v1858 = vld [vmem:[%s11] sm:$0xff]
    %v1859 = vld [vmem:[%s11 + $0x8] sm:$0xff]
    %v1860 = vld [vmem:[%s11 + $0x10] sm:$0xff]
    %v1861 = vld [vmem:[%s11 + $0x18] sm:$0xff]
    %v1862 = vld [vmem:[#allocation11] sm:$0x1]
    %v1864 = vlaneseq
    %v1865 = vshrl.u32 %v1864, 7
    %v1866 = vsub.s32 0, %v1865
    %v1867 = vrot.slane %v1862, %v1866
    %v1870 = vsel %vm236, %v1856, 0
    %v1873 = vsel %vm236, %v1857, 0
    %1875 = vmatprep.subr.mxu0 0.0
    %1876 = vmatpush1.msra.mxu0 0.0
    %1877 = vmatprep.subr.mxu0 0.0
    %1878 = vmatpush1.msra.mxu0 0.0
    %1879 = vmatprep.subr.mxu0 0.0
    %1880 = vmatpush1.msra.mxu0 0.0
    %1881 = vmatprep.subr.mxu0 0.0
    %1882 = vmatpush1.msra.mxu0 0.0
    %1883 = vmatprep.subr.mxu0 0.0
    %1884 = vmatpush1.msra.mxu0 0.0
    %1885 = vmatprep.subr.mxu0 0.0
    %1886 = vmatpush1.msra.mxu0 0.0
    %1887 = vmatprep.subr.mxu0 0.0
    %1888 = vmatpush1.msra.mxu0 0.0
    %1889 = vmatprep.subr.mxu0 0.0
    %1890 = vmatpush1.msra.mxu0 0.0
    %1891 = vmatprep.subr.mxu0 0.0
    %1892 = vmatpush1.msra.mxu0 0.0
    %1893 = vmatprep.subr.mxu0 0.0
    %1894 = vmatpush1.msra.mxu0 0.0
    %1895 = vmatprep.subr.mxu0 0.0
    %1896 = vmatpush1.msra.mxu0 0.0
    %1897 = vmatprep.subr.mxu0 0.0
    %1898 = vmatpush1.msra.mxu0 0.0
    %1899 = vmatprep.subr.mxu0 0.0
    %1900 = vmatpush1.msra.mxu0 %v1861
    %1901 = vmatprep.subr.mxu0 0.0
    %1902 = vmatpush1.msra.mxu0 %v1860
    %1903 = vmatprep.subr.mxu0 0.0
    %1904 = vmatpush1.msra.mxu0 %v1859
    %1905 = vmatprep.subr.mxu0 0.0
    %1906 = vmatpush1.msra.mxu0 %v1858
    %1907 = vmatprep.subr.mxu0 0.0
    %1908 = vmatpush2.msra.mxu0 0.0
    %1909 = vmatprep.subr.mxu0 0.0
    %1910 = vmatpush2.msra.mxu0 0.0
    %1911 = vmatprep.subr.mxu0 0.0
    %1912 = vmatpush2.msra.mxu0 0.0
    %1913 = vmatprep.subr.mxu0 0.0
    %1914 = vmatpush2.msra.mxu0 0.0
    %1915 = vmatprep.subr.mxu0 0.0
    %1916 = vmatpush2.msra.mxu0 0.0
    %1917 = vmatprep.subr.mxu0 0.0
    %1918 = vmatpush2.msra.mxu0 0.0
    %1919 = vmatprep.subr.mxu0 0.0
    %1920 = vmatpush2.msra.mxu0 0.0
    %1921 = vmatprep.subr.mxu0 0.0
    %1922 = vmatpush2.msra.mxu0 0.0
    %1923 = vmatprep.subr.mxu0 0.0
    %1924 = vmatpush2.msra.mxu0 0.0
    %1925 = vmatprep.subr.mxu0 0.0
    %1926 = vmatpush2.msra.mxu0 0.0
    %1927 = vmatprep.subr.mxu0 0.0
    %1928 = vmatpush2.msra.mxu0 0.0
    %1929 = vmatprep.subr.mxu0 0.0
    %1930 = vmatpush2.msra.mxu0 0.0
    %1931 = vmatprep.subr.mxu0 0.0
    %1932 = vmatpush2.msra.mxu0 0.0
    %1933 = vmatprep.subr.mxu0 0.0
    %1934 = vmatpush2.msra.mxu0 0.0
    %1935 = vmatprep.subr.mxu0 0.0
    %1936 = vmatpush2.msra.mxu0 0.0
    %1937 = vmatprep.subr.mxu0 0.0
    %1938 = vmatpush2.msra.mxu0 0.0
    %1939 = vmatprep.mubr.f32.mxu0 0.0
    %1940 = vmatmul.mubr.f32.gmra.mxu0 %v1870
    %v1941 = vpop.f32.mrf.mxu0
    %v1942 = vadd.f32 %v1867, %v1941
    %v1943 = vpop.f32.mrf.mxu0
    %1944 = vmatprep.mubr.f32.mxu0 0.0
    %1945 = vmatmul.mubr.f32.gmra.mxu0 %v1873
    %v1946 = vpop.f32.mrf.mxu0
    %v1947 = vadd.f32 %v1867, %v1946
    %v1948 = vpop.f32.mrf.mxu0
    %1949 = vdwg.mxu0
    %v1950 = vld [vmem:[%s13] sm:$0xff]
    %v1951 = vld [vmem:[%s13 + $0x8] sm:$0xff]
    %v1952 = vld [vmem:[%s13 + $0x10] sm:$0xff]
    %v1953 = vld [vmem:[%s13 + $0x18] sm:$0xff]
    %v1954 = vld [vmem:[%s13 + $0x20] sm:$0xff]
    %v1955 = vld [vmem:[%s13 + $0x28] sm:$0xff]
    %v1956 = vld [vmem:[%s13 + $0x30] sm:$0xff]
    %v1957 = vld [vmem:[%s13 + $0x38] sm:$0xff]
    %v1958 = vld [vmem:[%s14] sm:$0x1]
    %v1960 = vlaneseq
    %v1961 = vshrl.u32 %v1960, 7
    %v1962 = vsub.s32 0, %v1961
    %v1963 = vrot.slane %v1958, %v1962
    %vm1965 = vcmask 523264
    %v1967 = vsel %vm1965, %v1942, 0
    %v1970 = vsel %vm1965, %v1947, 0
    %1972 = vmatprep.subr.mxu0 0.0
    %1973 = vmatpush1.msra.mxu0 0.0
    %1974 = vmatprep.subr.mxu0 0.0
    %1975 = vmatpush1.msra.mxu0 0.0
    %1976 = vmatprep.subr.mxu0 0.0
    %1977 = vmatpush1.msra.mxu0 0.0
    %1978 = vmatprep.subr.mxu0 0.0
    %1979 = vmatpush1.msra.mxu0 0.0
    %1980 = vmatprep.subr.mxu0 0.0
    %1981 = vmatpush1.msra.mxu0 0.0
    %1982 = vmatprep.subr.mxu0 0.0
    %1983 = vmatpush1.msra.mxu0 0.0
    %1984 = vmatprep.subr.mxu0 0.0
    %1985 = vmatpush1.msra.mxu0 0.0
    %1986 = vmatprep.subr.mxu0 0.0
    %1987 = vmatpush1.msra.mxu0 0.0
    %1988 = vmatprep.subr.mxu0 0.0
    %1989 = vmatpush1.msra.mxu0 %v1957
    %1990 = vmatprep.subr.mxu0 0.0
    %1991 = vmatpush1.msra.mxu0 %v1956
    %1992 = vmatprep.subr.mxu0 0.0
    %1993 = vmatpush1.msra.mxu0 %v1955
    %1994 = vmatprep.subr.mxu0 0.0
    %1995 = vmatpush1.msra.mxu0 %v1954
    %1996 = vmatprep.subr.mxu0 0.0
    %1997 = vmatpush1.msra.mxu0 %v1953
    %1998 = vmatprep.subr.mxu0 0.0
    %1999 = vmatpush1.msra.mxu0 %v1952
    %2000 = vmatprep.subr.mxu0 0.0
    %2001 = vmatpush1.msra.mxu0 %v1951
    %2002 = vmatprep.subr.mxu0 0.0
    %2003 = vmatpush1.msra.mxu0 %v1950
    %2004 = vmatprep.subr.mxu0 0.0
    %2005 = vmatpush2.msra.mxu0 0.0
    %2006 = vmatprep.subr.mxu0 0.0
    %2007 = vmatpush2.msra.mxu0 0.0
    %2008 = vmatprep.subr.mxu0 0.0
    %2009 = vmatpush2.msra.mxu0 0.0
    %2010 = vmatprep.subr.mxu0 0.0
    %2011 = vmatpush2.msra.mxu0 0.0
    %2012 = vmatprep.subr.mxu0 0.0
    %2013 = vmatpush2.msra.mxu0 0.0
    %2014 = vmatprep.subr.mxu0 0.0
    %2015 = vmatpush2.msra.mxu0 0.0
    %2016 = vmatprep.subr.mxu0 0.0
    %2017 = vmatpush2.msra.mxu0 0.0
    %2018 = vmatprep.subr.mxu0 0.0
    %2019 = vmatpush2.msra.mxu0 0.0
    %2020 = vmatprep.subr.mxu0 0.0
    %2021 = vmatpush2.msra.mxu0 0.0
    %2022 = vmatprep.subr.mxu0 0.0
    %2023 = vmatpush2.msra.mxu0 0.0
    %2024 = vmatprep.subr.mxu0 0.0
    %2025 = vmatpush2.msra.mxu0 0.0
    %2026 = vmatprep.subr.mxu0 0.0
    %2027 = vmatpush2.msra.mxu0 0.0
    %2028 = vmatprep.subr.mxu0 0.0
    %2029 = vmatpush2.msra.mxu0 0.0
    %2030 = vmatprep.subr.mxu0 0.0
    %2031 = vmatpush2.msra.mxu0 0.0
    %2032 = vmatprep.subr.mxu0 0.0
    %2033 = vmatpush2.msra.mxu0 0.0
    %2034 = vmatprep.subr.mxu0 0.0
    %2035 = vmatpush2.msra.mxu0 0.0
    %2036 = vmatprep.mubr.f32.mxu0 0.0
    %2037 = vmatmul.mubr.f32.gmra.mxu0 %v1967
    %v2038 = vpop.f32.mrf.mxu0
    %v2039 = vadd.f32 %v1963, %v2038
    %v2040 = vpop.f32.mrf.mxu0
    %2041 = vmatprep.mubr.f32.mxu0 0.0
    %2042 = vmatmul.mubr.f32.gmra.mxu0 %v1970
    %v2043 = vpop.f32.mrf.mxu0
    %v2044 = vadd.f32 %v1963, %v2043
    %v2045 = vpop.f32.mrf.mxu0
    %2046 = vdwg.mxu0
    %v2047 = vmax.f32 %v2039, 0.0
    %v2048 = vmax.f32 %v2044, 0.0
    %s2049 = scalar_lea.vmem %s7, 1
    %v2050 = vld [vmem:[%s2049] sm:$0x1]
    %s2051 = scalar_lea.vmem [#allocation7], 1
    %v2052 = vld [vmem:[%s2051] sm:$0x1]
    %v2053 = vsel %vm236, %v2047, 0.0
    %2054 = vadd.xlane.f32.xlu0 %v2053
    %v2055 = vpop.xlane.xlu0 %2054
    %v2056 = vsel %vm236, %v2048, 0.0
    %2057 = vadd.xlane.f32.xlu0 %v2056
    %v2058 = vpop.xlane.xlu0 %2057
    %v2059 = vmul.f32 %v2055, %v243
    %v2060 = vmul.f32 %v2058, %v243
    %v2061 = vsub.f32 %v2047, %v2059
    %v2062 = vsub.f32 %v2048, %v2060
    %v2063 = vmul.f32 %v2061, %v2061
    %v2064 = vmul.f32 %v2062, %v2062
    %v2065 = vsel %vm236, %v2063, 0.0
    %2066 = vadd.xlane.f32.xlu0 %v2065
    %v2067 = vpop.xlane.xlu0 %2066
    %v2068 = vsel %vm236, %v2064, 0.0
    %2069 = vadd.xlane.f32.xlu0 %v2068
    %v2070 = vpop.xlane.xlu0 %2069
    %v2071 = vmul.f32 %v2067, %v243
    %v2072 = vmul.f32 %v2070, %v243
    %v2073 = vadd.f32 %v2071, 1e-05
    %v2074 = vadd.f32 %v2072, 1e-05
    %v2075 = vrsqrt.pop %v2073
    %v2076 = vrsqrt.pop %v2074
    %v2077 = vmul.f32 %v2061, %v2075
    %v2078 = vmul.f32 %v2062, %v2076
    %v2080 = vlaneseq
    %v2081 = vshrl.u32 %v2080, 7
    %v2082 = vsub.s32 0, %v2081
    %v2083 = vrot.slane %v2050, %v2082
    %v2085 = vmul.f32 %v2077, %v2083
    %v2086 = vmul.f32 %v2078, %v2083
    %v2088 = vlaneseq
    %v2089 = vshrl.u32 %v2088, 7
    %v2090 = vsub.s32 0, %v2089
    %v2091 = vrot.slane %v2052, %v2090
    %v2093 = vadd.f32 %v2085, %v2091
    %v2094 = vadd.f32 %v2086, %v2091
    %s2095 = scalar_lea.vmem %s3, 32
    %v2096 = vld [vmem:[%s2095] sm:$0xff]
    %v2097 = vld [vmem:[%s2095 + $0x8] sm:$0xff]
    %v2098 = vld [vmem:[%s2095 + $0x10] sm:$0xff]
    %v2099 = vld [vmem:[%s2095 + $0x18] sm:$0xff]
    %s2100 = scalar_lea.vmem %s4, 1
    %v2101 = vld [vmem:[%s2100] sm:$0x1]
    %v2103 = vlaneseq
    %v2104 = vshrl.u32 %v2103, 7
    %v2105 = vsub.s32 0, %v2104
    %v2106 = vrot.slane %v2101, %v2105
    %v2109 = vsel %vm236, %v2093, 0
    %v2112 = vsel %vm236, %v2094, 0
    %2114 = vmatprep.subr.mxu0 0.0
    %2115 = vmatpush1.msra.mxu0 0.0
    %2116 = vmatprep.subr.mxu0 0.0
    %2117 = vmatpush1.msra.mxu0 0.0
    %2118 = vmatprep.subr.mxu0 0.0
    %2119 = vmatpush1.msra.mxu0 0.0
    %2120 = vmatprep.subr.mxu0 0.0
    %2121 = vmatpush1.msra.mxu0 0.0
    %2122 = vmatprep.subr.mxu0 0.0
    %2123 = vmatpush1.msra.mxu0 0.0
    %2124 = vmatprep.subr.mxu0 0.0
    %2125 = vmatpush1.msra.mxu0 0.0
    %2126 = vmatprep.subr.mxu0 0.0
    %2127 = vmatpush1.msra.mxu0 0.0
    %2128 = vmatprep.subr.mxu0 0.0
    %2129 = vmatpush1.msra.mxu0 0.0
    %2130 = vmatprep.subr.mxu0 0.0
    %2131 = vmatpush1.msra.mxu0 0.0
    %2132 = vmatprep.subr.mxu0 0.0
    %2133 = vmatpush1.msra.mxu0 0.0
    %2134 = vmatprep.subr.mxu0 0.0
    %2135 = vmatpush1.msra.mxu0 0.0
    %2136 = vmatprep.subr.mxu0 0.0
    %2137 = vmatpush1.msra.mxu0 0.0
    %2138 = vmatprep.subr.mxu0 0.0
    %2139 = vmatpush1.msra.mxu0 %v2099
    %2140 = vmatprep.subr.mxu0 0.0
    %2141 = vmatpush1.msra.mxu0 %v2098
    %2142 = vmatprep.subr.mxu0 0.0
    %2143 = vmatpush1.msra.mxu0 %v2097
    %2144 = vmatprep.subr.mxu0 0.0
    %2145 = vmatpush1.msra.mxu0 %v2096
    %2146 = vmatprep.subr.mxu0 0.0
    %2147 = vmatpush2.msra.mxu0 0.0
    %2148 = vmatprep.subr.mxu0 0.0
    %2149 = vmatpush2.msra.mxu0 0.0
    %2150 = vmatprep.subr.mxu0 0.0
    %2151 = vmatpush2.msra.mxu0 0.0
    %2152 = vmatprep.subr.mxu0 0.0
    %2153 = vmatpush2.msra.mxu0 0.0
    %2154 = vmatprep.subr.mxu0 0.0
    %2155 = vmatpush2.msra.mxu0 0.0
    %2156 = vmatprep.subr.mxu0 0.0
    %2157 = vmatpush2.msra.mxu0 0.0
    %2158 = vmatprep.subr.mxu0 0.0
    %2159 = vmatpush2.msra.mxu0 0.0
    %2160 = vmatprep.subr.mxu0 0.0
    %2161 = vmatpush2.msra.mxu0 0.0
    %2162 = vmatprep.subr.mxu0 0.0
    %2163 = vmatpush2.msra.mxu0 0.0
    %2164 = vmatprep.subr.mxu0 0.0
    %2165 = vmatpush2.msra.mxu0 0.0
    %2166 = vmatprep.subr.mxu0 0.0
    %2167 = vmatpush2.msra.mxu0 0.0
    %2168 = vmatprep.subr.mxu0 0.0
    %2169 = vmatpush2.msra.mxu0 0.0
    %2170 = vmatprep.subr.mxu0 0.0
    %2171 = vmatpush2.msra.mxu0 0.0
    %2172 = vmatprep.subr.mxu0 0.0
    %2173 = vmatpush2.msra.mxu0 0.0
    %2174 = vmatprep.subr.mxu0 0.0
    %2175 = vmatpush2.msra.mxu0 0.0
    %2176 = vmatprep.subr.mxu0 0.0
    %2177 = vmatpush2.msra.mxu0 0.0
    %2178 = vmatprep.mubr.f32.mxu0 0.0
    %2179 = vmatmul.mubr.f32.gmra.mxu0 %v2109
    %v2180 = vpop.f32.mrf.mxu0
    %v2181 = vadd.f32 %v2106, %v2180
    %v2182 = vpop.f32.mrf.mxu0
    %2183 = vmatprep.mubr.f32.mxu0 0.0
    %2184 = vmatmul.mubr.f32.gmra.mxu0 %v2112
    %v2185 = vpop.f32.mrf.mxu0
    %v2186 = vadd.f32 %v2106, %v2185
    %v2187 = vpop.f32.mrf.mxu0
    %2188 = vdwg.mxu0
    %2190 = vrot.lane.b32.xlu0 %v2181, 96
    %v2191 = vpop.permute.xlu0 %2190
    %v2192 = vsel %vm375, %v2181, 0
    %v2194 = vsel %vm375, %v2191, 0
    %2196 = vmatprep.subr.mxu0 0.0
    %2197 = vmatpush1.xpose.msra.mxu0 0.0
    %2198 = vmatprep.subr.mxu0 0.0
    %2199 = vmatpush1.xpose.msra.mxu0 0.0
    %2200 = vmatprep.subr.mxu0 0.0
    %2201 = vmatpush1.xpose.msra.mxu0 0.0
    %2202 = vmatprep.subr.mxu0 0.0
    %2203 = vmatpush1.xpose.msra.mxu0 0.0
    %2204 = vmatprep.subr.mxu0 0.0
    %2205 = vmatpush1.xpose.msra.mxu0 0.0
    %2206 = vmatprep.subr.mxu0 0.0
    %2207 = vmatpush1.xpose.msra.mxu0 0.0
    %2208 = vmatprep.subr.mxu0 0.0
    %2209 = vmatpush1.xpose.msra.mxu0 0.0
    %2210 = vmatprep.subr.mxu0 0.0
    %2211 = vmatpush1.xpose.msra.mxu0 0.0
    %2212 = vmatprep.subr.mxu0 0.0
    %2213 = vmatpush1.xpose.msra.mxu0 0.0
    %2214 = vmatprep.subr.mxu0 0.0
    %2215 = vmatpush1.xpose.msra.mxu0 0.0
    %2216 = vmatprep.subr.mxu0 0.0
    %2217 = vmatpush1.xpose.msra.mxu0 0.0
    %2218 = vmatprep.subr.mxu0 0.0
    %2219 = vmatpush1.xpose.msra.mxu0 0.0
    %2220 = vmatprep.subr.mxu0 0.0
    %2221 = vmatpush1.xpose.msra.mxu0 0.0
    %2222 = vmatprep.subr.mxu0 0.0
    %2223 = vmatpush1.xpose.msra.mxu0 0.0
    %2224 = vmatprep.subr.mxu0 0.0
    %2225 = vmatpush1.xpose.msra.mxu0 0.0
    %2226 = vmatprep.subr.mxu0 0.0
    %2227 = vmatpush1.xpose.msra.mxu0 %v2194
    %2228 = vmatprep.subr.mxu0 0.0
    %2229 = vmatpush2.xpose.msra.mxu0 0.0
    %2230 = vmatprep.subr.mxu0 0.0
    %2231 = vmatpush2.xpose.msra.mxu0 0.0
    %2232 = vmatprep.subr.mxu0 0.0
    %2233 = vmatpush2.xpose.msra.mxu0 0.0
    %2234 = vmatprep.subr.mxu0 0.0
    %2235 = vmatpush2.xpose.msra.mxu0 0.0
    %2236 = vmatprep.subr.mxu0 0.0
    %2237 = vmatpush2.xpose.msra.mxu0 0.0
    %2238 = vmatprep.subr.mxu0 0.0
    %2239 = vmatpush2.xpose.msra.mxu0 0.0
    %2240 = vmatprep.subr.mxu0 0.0
    %2241 = vmatpush2.xpose.msra.mxu0 0.0
    %2242 = vmatprep.subr.mxu0 0.0
    %2243 = vmatpush2.xpose.msra.mxu0 0.0
    %2244 = vmatprep.subr.mxu0 0.0
    %2245 = vmatpush2.xpose.msra.mxu0 0.0
    %2246 = vmatprep.subr.mxu0 0.0
    %2247 = vmatpush2.xpose.msra.mxu0 0.0
    %2248 = vmatprep.subr.mxu0 0.0
    %2249 = vmatpush2.xpose.msra.mxu0 0.0
    %2250 = vmatprep.subr.mxu0 0.0
    %2251 = vmatpush2.xpose.msra.mxu0 0.0
    %2252 = vmatprep.subr.mxu0 0.0
    %2253 = vmatpush2.xpose.msra.mxu0 0.0
    %2254 = vmatprep.subr.mxu0 0.0
    %2255 = vmatpush2.xpose.msra.mxu0 0.0
    %2256 = vmatprep.subr.mxu0 0.0
    %2257 = vmatpush2.xpose.msra.mxu0 0.0
    %2258 = vmatprep.subr.mxu0 0.0
    %2259 = vmatpush2.xpose.msra.mxu0 0.0
    %2260 = vmatprep.mubr.f32.mxu0 0.0
    %2261 = vmatmul.mubr.f32.gmra.mxu0 %v2192
    %v2262 = vpop.f32.mrf.mxu0
    %v2263 = vadd.f32 0.0, %v2262
    %v2264 = vpop.f32.mrf.mxu0
    %2265 = vdwg.mxu0
    %2267 = vrot.lane.b32.xlu0 %v2186, 96
    %v2268 = vpop.permute.xlu0 %2267
    %v2269 = vsel %vm375, %v2186, 0
    %v2271 = vsel %vm375, %v2268, 0
    %2273 = vmatprep.subr.mxu0 0.0
    %2274 = vmatpush1.xpose.msra.mxu0 0.0
    %2275 = vmatprep.subr.mxu0 0.0
    %2276 = vmatpush1.xpose.msra.mxu0 0.0
    %2277 = vmatprep.subr.mxu0 0.0
    %2278 = vmatpush1.xpose.msra.mxu0 0.0
    %2279 = vmatprep.subr.mxu0 0.0
    %2280 = vmatpush1.xpose.msra.mxu0 0.0
    %2281 = vmatprep.subr.mxu0 0.0
    %2282 = vmatpush1.xpose.msra.mxu0 0.0
    %2283 = vmatprep.subr.mxu0 0.0
    %2284 = vmatpush1.xpose.msra.mxu0 0.0
    %2285 = vmatprep.subr.mxu0 0.0
    %2286 = vmatpush1.xpose.msra.mxu0 0.0
    %2287 = vmatprep.subr.mxu0 0.0
    %2288 = vmatpush1.xpose.msra.mxu0 0.0
    %2289 = vmatprep.subr.mxu0 0.0
    %2290 = vmatpush1.xpose.msra.mxu0 0.0
    %2291 = vmatprep.subr.mxu0 0.0
    %2292 = vmatpush1.xpose.msra.mxu0 0.0
    %2293 = vmatprep.subr.mxu0 0.0
    %2294 = vmatpush1.xpose.msra.mxu0 0.0
    %2295 = vmatprep.subr.mxu0 0.0
    %2296 = vmatpush1.xpose.msra.mxu0 0.0
    %2297 = vmatprep.subr.mxu0 0.0
    %2298 = vmatpush1.xpose.msra.mxu0 0.0
    %2299 = vmatprep.subr.mxu0 0.0
    %2300 = vmatpush1.xpose.msra.mxu0 0.0
    %2301 = vmatprep.subr.mxu0 0.0
    %2302 = vmatpush1.xpose.msra.mxu0 0.0
    %2303 = vmatprep.subr.mxu0 0.0
    %2304 = vmatpush1.xpose.msra.mxu0 %v2271
    %2305 = vmatprep.subr.mxu0 0.0
    %2306 = vmatpush2.xpose.msra.mxu0 0.0
    %2307 = vmatprep.subr.mxu0 0.0
    %2308 = vmatpush2.xpose.msra.mxu0 0.0
    %2309 = vmatprep.subr.mxu0 0.0
    %2310 = vmatpush2.xpose.msra.mxu0 0.0
    %2311 = vmatprep.subr.mxu0 0.0
    %2312 = vmatpush2.xpose.msra.mxu0 0.0
    %2313 = vmatprep.subr.mxu0 0.0
    %2314 = vmatpush2.xpose.msra.mxu0 0.0
    %2315 = vmatprep.subr.mxu0 0.0
    %2316 = vmatpush2.xpose.msra.mxu0 0.0
    %2317 = vmatprep.subr.mxu0 0.0
    %2318 = vmatpush2.xpose.msra.mxu0 0.0
    %2319 = vmatprep.subr.mxu0 0.0
    %2320 = vmatpush2.xpose.msra.mxu0 0.0
    %2321 = vmatprep.subr.mxu0 0.0
    %2322 = vmatpush2.xpose.msra.mxu0 0.0
    %2323 = vmatprep.subr.mxu0 0.0
    %2324 = vmatpush2.xpose.msra.mxu0 0.0
    %2325 = vmatprep.subr.mxu0 0.0
    %2326 = vmatpush2.xpose.msra.mxu0 0.0
    %2327 = vmatprep.subr.mxu0 0.0
    %2328 = vmatpush2.xpose.msra.mxu0 0.0
    %2329 = vmatprep.subr.mxu0 0.0
    %2330 = vmatpush2.xpose.msra.mxu0 0.0
    %2331 = vmatprep.subr.mxu0 0.0
    %2332 = vmatpush2.xpose.msra.mxu0 0.0
    %2333 = vmatprep.subr.mxu0 0.0
    %2334 = vmatpush2.xpose.msra.mxu0 0.0
    %2335 = vmatprep.subr.mxu0 0.0
    %2336 = vmatpush2.xpose.msra.mxu0 0.0
    %2337 = vmatprep.mubr.f32.mxu0 0.0
    %2338 = vmatmul.mubr.f32.gmra.mxu0 %v2269
    %v2339 = vpop.f32.mrf.mxu0
    %v2340 = vadd.f32 0.0, %v2339
    %v2341 = vpop.f32.mrf.mxu0
    %2342 = vdwg.mxu0
    %v2343 = vsel %vm375, %v2263, -inf
    %2344 = vmax.xlane.f32.xlu0 %v2343
    %v2345 = vpop.xlane.xlu0 %2344
    %v2346 = vsel %vm375, %v2340, -inf
    %2347 = vmax.xlane.f32.xlu0 %v2346
    %v2348 = vpop.xlane.xlu0 %2347
    %v2349 = vsub.f32 %v2263, %v2345
    %v2350 = vsub.f32 %v2340, %v2348
    %v2351 = vmul.f32 %v2349, 1.442695
    %v2352 = vpow.pop %v2351
    %v2353 = vmul.f32 %v2350, 1.442695
    %v2354 = vpow.pop %v2353
    %v2355 = vsel %vm375, %v2352, 0.0
    %2356 = vadd.xlane.f32.xlu0 %v2355
    %v2357 = vpop.xlane.xlu0 %2356
    %v2358 = vsel %vm375, %v2354, 0.0
    %2359 = vadd.xlane.f32.xlu0 %v2358
    %v2360 = vpop.xlane.xlu0 %2359
    %v2361 = vrcp.pop %v2357
    %v2362 = vmul.f32 %v2352, %v2361
    %v2363 = vrcp.pop %v2360
    %v2364 = vmul.f32 %v2354, %v2363
    %2365 = vrot.lane.b32.xlu0 %v2181, 64
    %v2366 = vpop.permute.xlu0 %2365
    %v2369 = vsel %vm375, %v2362, 0
    %2371 = vmatprep.subr.mxu0 0.0
    %2372 = vmatpush1.msra.mxu0 0.0
    %2373 = vmatprep.subr.mxu0 0.0
    %2374 = vmatpush1.msra.mxu0 0.0
    %2375 = vmatprep.subr.mxu0 0.0
    %2376 = vmatpush1.msra.mxu0 0.0
    %2377 = vmatprep.subr.mxu0 0.0
    %2378 = vmatpush1.msra.mxu0 0.0
    %2379 = vmatprep.subr.mxu0 0.0
    %2380 = vmatpush1.msra.mxu0 0.0
    %2381 = vmatprep.subr.mxu0 0.0
    %2382 = vmatpush1.msra.mxu0 0.0
    %2383 = vmatprep.subr.mxu0 0.0
    %2384 = vmatpush1.msra.mxu0 0.0
    %2385 = vmatprep.subr.mxu0 0.0
    %2386 = vmatpush1.msra.mxu0 0.0
    %2387 = vmatprep.subr.mxu0 0.0
    %2388 = vmatpush1.msra.mxu0 0.0
    %2389 = vmatprep.subr.mxu0 0.0
    %2390 = vmatpush1.msra.mxu0 0.0
    %2391 = vmatprep.subr.mxu0 0.0
    %2392 = vmatpush1.msra.mxu0 0.0
    %2393 = vmatprep.subr.mxu0 0.0
    %2394 = vmatpush1.msra.mxu0 0.0
    %2395 = vmatprep.subr.mxu0 0.0
    %2396 = vmatpush1.msra.mxu0 0.0
    %2397 = vmatprep.subr.mxu0 0.0
    %2398 = vmatpush1.msra.mxu0 0.0
    %2399 = vmatprep.subr.mxu0 0.0
    %2400 = vmatpush1.msra.mxu0 0.0
    %2401 = vmatprep.subr.mxu0 0.0
    %2402 = vmatpush1.msra.mxu0 %v2366
    %2403 = vmatprep.subr.mxu0 0.0
    %2404 = vmatpush2.msra.mxu0 0.0
    %2405 = vmatprep.subr.mxu0 0.0
    %2406 = vmatpush2.msra.mxu0 0.0
    %2407 = vmatprep.subr.mxu0 0.0
    %2408 = vmatpush2.msra.mxu0 0.0
    %2409 = vmatprep.subr.mxu0 0.0
    %2410 = vmatpush2.msra.mxu0 0.0
    %2411 = vmatprep.subr.mxu0 0.0
    %2412 = vmatpush2.msra.mxu0 0.0
    %2413 = vmatprep.subr.mxu0 0.0
    %2414 = vmatpush2.msra.mxu0 0.0
    %2415 = vmatprep.subr.mxu0 0.0
    %2416 = vmatpush2.msra.mxu0 0.0
    %2417 = vmatprep.subr.mxu0 0.0
    %2418 = vmatpush2.msra.mxu0 0.0
    %2419 = vmatprep.subr.mxu0 0.0
    %2420 = vmatpush2.msra.mxu0 0.0
    %2421 = vmatprep.subr.mxu0 0.0
    %2422 = vmatpush2.msra.mxu0 0.0
    %2423 = vmatprep.subr.mxu0 0.0
    %2424 = vmatpush2.msra.mxu0 0.0
    %2425 = vmatprep.subr.mxu0 0.0
    %2426 = vmatpush2.msra.mxu0 0.0
    %2427 = vmatprep.subr.mxu0 0.0
    %2428 = vmatpush2.msra.mxu0 0.0
    %2429 = vmatprep.subr.mxu0 0.0
    %2430 = vmatpush2.msra.mxu0 0.0
    %2431 = vmatprep.subr.mxu0 0.0
    %2432 = vmatpush2.msra.mxu0 0.0
    %2433 = vmatprep.subr.mxu0 0.0
    %2434 = vmatpush2.msra.mxu0 0.0
    %2435 = vmatprep.mubr.f32.mxu0 0.0
    %2436 = vmatmul.mubr.f32.gmra.mxu0 %v2369
    %v2437 = vpop.f32.mrf.mxu0
    %v2438 = vadd.f32 0.0, %v2437
    %v2439 = vpop.f32.mrf.mxu0
    %2440 = vdwg.mxu0
    %2441 = vrot.lane.b32.xlu0 %v2186, 64
    %v2442 = vpop.permute.xlu0 %2441
    %v2445 = vsel %vm375, %v2364, 0
    %2447 = vmatprep.subr.mxu0 0.0
    %2448 = vmatpush1.msra.mxu0 0.0
    %2449 = vmatprep.subr.mxu0 0.0
    %2450 = vmatpush1.msra.mxu0 0.0
    %2451 = vmatprep.subr.mxu0 0.0
    %2452 = vmatpush1.msra.mxu0 0.0
    %2453 = vmatprep.subr.mxu0 0.0
    %2454 = vmatpush1.msra.mxu0 0.0
    %2455 = vmatprep.subr.mxu0 0.0
    %2456 = vmatpush1.msra.mxu0 0.0
    %2457 = vmatprep.subr.mxu0 0.0
    %2458 = vmatpush1.msra.mxu0 0.0
    %2459 = vmatprep.subr.mxu0 0.0
    %2460 = vmatpush1.msra.mxu0 0.0
    %2461 = vmatprep.subr.mxu0 0.0
    %2462 = vmatpush1.msra.mxu0 0.0
    %2463 = vmatprep.subr.mxu0 0.0
    %2464 = vmatpush1.msra.mxu0 0.0
    %2465 = vmatprep.subr.mxu0 0.0
    %2466 = vmatpush1.msra.mxu0 0.0
    %2467 = vmatprep.subr.mxu0 0.0
    %2468 = vmatpush1.msra.mxu0 0.0
    %2469 = vmatprep.subr.mxu0 0.0
    %2470 = vmatpush1.msra.mxu0 0.0
    %2471 = vmatprep.subr.mxu0 0.0
    %2472 = vmatpush1.msra.mxu0 0.0
    %2473 = vmatprep.subr.mxu0 0.0
    %2474 = vmatpush1.msra.mxu0 0.0
    %2475 = vmatprep.subr.mxu0 0.0
    %2476 = vmatpush1.msra.mxu0 0.0
    %2477 = vmatprep.subr.mxu0 0.0
    %2478 = vmatpush1.msra.mxu0 %v2442
    %2479 = vmatprep.subr.mxu0 0.0
    %2480 = vmatpush2.msra.mxu0 0.0
    %2481 = vmatprep.subr.mxu0 0.0
    %2482 = vmatpush2.msra.mxu0 0.0
    %2483 = vmatprep.subr.mxu0 0.0
    %2484 = vmatpush2.msra.mxu0 0.0
    %2485 = vmatprep.subr.mxu0 0.0
    %2486 = vmatpush2.msra.mxu0 0.0
    %2487 = vmatprep.subr.mxu0 0.0
    %2488 = vmatpush2.msra.mxu0 0.0
    %2489 = vmatprep.subr.mxu0 0.0
    %2490 = vmatpush2.msra.mxu0 0.0
    %2491 = vmatprep.subr.mxu0 0.0
    %2492 = vmatpush2.msra.mxu0 0.0
    %2493 = vmatprep.subr.mxu0 0.0
    %2494 = vmatpush2.msra.mxu0 0.0
    %2495 = vmatprep.subr.mxu0 0.0
    %2496 = vmatpush2.msra.mxu0 0.0
    %2497 = vmatprep.subr.mxu0 0.0
    %2498 = vmatpush2.msra.mxu0 0.0
    %2499 = vmatprep.subr.mxu0 0.0
    %2500 = vmatpush2.msra.mxu0 0.0
    %2501 = vmatprep.subr.mxu0 0.0
    %2502 = vmatpush2.msra.mxu0 0.0
    %2503 = vmatprep.subr.mxu0 0.0
    %2504 = vmatpush2.msra.mxu0 0.0
    %2505 = vmatprep.subr.mxu0 0.0
    %2506 = vmatpush2.msra.mxu0 0.0
    %2507 = vmatprep.subr.mxu0 0.0
    %2508 = vmatpush2.msra.mxu0 0.0
    %2509 = vmatprep.subr.mxu0 0.0
    %2510 = vmatpush2.msra.mxu0 0.0
    %2511 = vmatprep.mubr.f32.mxu0 0.0
    %2512 = vmatmul.mubr.f32.gmra.mxu0 %v2445
    %v2513 = vpop.f32.mrf.mxu0
    %v2514 = vadd.f32 0.0, %v2513
    %v2515 = vpop.f32.mrf.mxu0
    %2516 = vdwg.mxu0
    %2517 = vrot.lane.b32.xlu0 %v2181, 120
    %v2518 = vpop.permute.xlu0 %2517
    %2519 = vrot.lane.b32.xlu0 %v2181, 88
    %v2520 = vpop.permute.xlu0 %2519
    %v2521 = vsel %vm375, %v2518, 0
    %v2523 = vsel %vm375, %v2520, 0
    %2525 = vmatprep.subr.mxu0 0.0
    %2526 = vmatpush1.xpose.msra.mxu0 0.0
    %2527 = vmatprep.subr.mxu0 0.0
    %2528 = vmatpush1.xpose.msra.mxu0 0.0
    %2529 = vmatprep.subr.mxu0 0.0
    %2530 = vmatpush1.xpose.msra.mxu0 0.0
    %2531 = vmatprep.subr.mxu0 0.0
    %2532 = vmatpush1.xpose.msra.mxu0 0.0
    %2533 = vmatprep.subr.mxu0 0.0
    %2534 = vmatpush1.xpose.msra.mxu0 0.0
    %2535 = vmatprep.subr.mxu0 0.0
    %2536 = vmatpush1.xpose.msra.mxu0 0.0
    %2537 = vmatprep.subr.mxu0 0.0
    %2538 = vmatpush1.xpose.msra.mxu0 0.0
    %2539 = vmatprep.subr.mxu0 0.0
    %2540 = vmatpush1.xpose.msra.mxu0 0.0
    %2541 = vmatprep.subr.mxu0 0.0
    %2542 = vmatpush1.xpose.msra.mxu0 0.0
    %2543 = vmatprep.subr.mxu0 0.0
    %2544 = vmatpush1.xpose.msra.mxu0 0.0
    %2545 = vmatprep.subr.mxu0 0.0
    %2546 = vmatpush1.xpose.msra.mxu0 0.0
    %2547 = vmatprep.subr.mxu0 0.0
    %2548 = vmatpush1.xpose.msra.mxu0 0.0
    %2549 = vmatprep.subr.mxu0 0.0
    %2550 = vmatpush1.xpose.msra.mxu0 0.0
    %2551 = vmatprep.subr.mxu0 0.0
    %2552 = vmatpush1.xpose.msra.mxu0 0.0
    %2553 = vmatprep.subr.mxu0 0.0
    %2554 = vmatpush1.xpose.msra.mxu0 0.0
    %2555 = vmatprep.subr.mxu0 0.0
    %2556 = vmatpush1.xpose.msra.mxu0 %v2523
    %2557 = vmatprep.subr.mxu0 0.0
    %2558 = vmatpush2.xpose.msra.mxu0 0.0
    %2559 = vmatprep.subr.mxu0 0.0
    %2560 = vmatpush2.xpose.msra.mxu0 0.0
    %2561 = vmatprep.subr.mxu0 0.0
    %2562 = vmatpush2.xpose.msra.mxu0 0.0
    %2563 = vmatprep.subr.mxu0 0.0
    %2564 = vmatpush2.xpose.msra.mxu0 0.0
    %2565 = vmatprep.subr.mxu0 0.0
    %2566 = vmatpush2.xpose.msra.mxu0 0.0
    %2567 = vmatprep.subr.mxu0 0.0
    %2568 = vmatpush2.xpose.msra.mxu0 0.0
    %2569 = vmatprep.subr.mxu0 0.0
    %2570 = vmatpush2.xpose.msra.mxu0 0.0
    %2571 = vmatprep.subr.mxu0 0.0
    %2572 = vmatpush2.xpose.msra.mxu0 0.0
    %2573 = vmatprep.subr.mxu0 0.0
    %2574 = vmatpush2.xpose.msra.mxu0 0.0
    %2575 = vmatprep.subr.mxu0 0.0
    %2576 = vmatpush2.xpose.msra.mxu0 0.0
    %2577 = vmatprep.subr.mxu0 0.0
    %2578 = vmatpush2.xpose.msra.mxu0 0.0
    %2579 = vmatprep.subr.mxu0 0.0
    %2580 = vmatpush2.xpose.msra.mxu0 0.0
    %2581 = vmatprep.subr.mxu0 0.0
    %2582 = vmatpush2.xpose.msra.mxu0 0.0
    %2583 = vmatprep.subr.mxu0 0.0
    %2584 = vmatpush2.xpose.msra.mxu0 0.0
    %2585 = vmatprep.subr.mxu0 0.0
    %2586 = vmatpush2.xpose.msra.mxu0 0.0
    %2587 = vmatprep.subr.mxu0 0.0
    %2588 = vmatpush2.xpose.msra.mxu0 0.0
    %2589 = vmatprep.mubr.f32.mxu0 0.0
    %2590 = vmatmul.mubr.f32.gmra.mxu0 %v2521
    %v2591 = vpop.f32.mrf.mxu0
    %v2592 = vadd.f32 0.0, %v2591
    %v2593 = vpop.f32.mrf.mxu0
    %2594 = vdwg.mxu0
    %2595 = vrot.lane.b32.xlu0 %v2186, 120
    %v2596 = vpop.permute.xlu0 %2595
    %2597 = vrot.lane.b32.xlu0 %v2186, 88
    %v2598 = vpop.permute.xlu0 %2597
    %v2599 = vsel %vm375, %v2596, 0
    %v2601 = vsel %vm375, %v2598, 0
    %2603 = vmatprep.subr.mxu0 0.0
    %2604 = vmatpush1.xpose.msra.mxu0 0.0
    %2605 = vmatprep.subr.mxu0 0.0
    %2606 = vmatpush1.xpose.msra.mxu0 0.0
    %2607 = vmatprep.subr.mxu0 0.0
    %2608 = vmatpush1.xpose.msra.mxu0 0.0
    %2609 = vmatprep.subr.mxu0 0.0
    %2610 = vmatpush1.xpose.msra.mxu0 0.0
    %2611 = vmatprep.subr.mxu0 0.0
    %2612 = vmatpush1.xpose.msra.mxu0 0.0
    %2613 = vmatprep.subr.mxu0 0.0
    %2614 = vmatpush1.xpose.msra.mxu0 0.0
    %2615 = vmatprep.subr.mxu0 0.0
    %2616 = vmatpush1.xpose.msra.mxu0 0.0
    %2617 = vmatprep.subr.mxu0 0.0
    %2618 = vmatpush1.xpose.msra.mxu0 0.0
    %2619 = vmatprep.subr.mxu0 0.0
    %2620 = vmatpush1.xpose.msra.mxu0 0.0
    %2621 = vmatprep.subr.mxu0 0.0
    %2622 = vmatpush1.xpose.msra.mxu0 0.0
    %2623 = vmatprep.subr.mxu0 0.0
    %2624 = vmatpush1.xpose.msra.mxu0 0.0
    %2625 = vmatprep.subr.mxu0 0.0
    %2626 = vmatpush1.xpose.msra.mxu0 0.0
    %2627 = vmatprep.subr.mxu0 0.0
    %2628 = vmatpush1.xpose.msra.mxu0 0.0
    %2629 = vmatprep.subr.mxu0 0.0
    %2630 = vmatpush1.xpose.msra.mxu0 0.0
    %2631 = vmatprep.subr.mxu0 0.0
    %2632 = vmatpush1.xpose.msra.mxu0 0.0
    %2633 = vmatprep.subr.mxu0 0.0
    %2634 = vmatpush1.xpose.msra.mxu0 %v2601
    %2635 = vmatprep.subr.mxu0 0.0
    %2636 = vmatpush2.xpose.msra.mxu0 0.0
    %2637 = vmatprep.subr.mxu0 0.0
    %2638 = vmatpush2.xpose.msra.mxu0 0.0
    %2639 = vmatprep.subr.mxu0 0.0
    %2640 = vmatpush2.xpose.msra.mxu0 0.0
    %2641 = vmatprep.subr.mxu0 0.0
    %2642 = vmatpush2.xpose.msra.mxu0 0.0
    %2643 = vmatprep.subr.mxu0 0.0
    %2644 = vmatpush2.xpose.msra.mxu0 0.0
    %2645 = vmatprep.subr.mxu0 0.0
    %2646 = vmatpush2.xpose.msra.mxu0 0.0
    %2647 = vmatprep.subr.mxu0 0.0
    %2648 = vmatpush2.xpose.msra.mxu0 0.0
    %2649 = vmatprep.subr.mxu0 0.0
    %2650 = vmatpush2.xpose.msra.mxu0 0.0
    %2651 = vmatprep.subr.mxu0 0.0
    %2652 = vmatpush2.xpose.msra.mxu0 0.0
    %2653 = vmatprep.subr.mxu0 0.0
    %2654 = vmatpush2.xpose.msra.mxu0 0.0
    %2655 = vmatprep.subr.mxu0 0.0
    %2656 = vmatpush2.xpose.msra.mxu0 0.0
    %2657 = vmatprep.subr.mxu0 0.0
    %2658 = vmatpush2.xpose.msra.mxu0 0.0
    %2659 = vmatprep.subr.mxu0 0.0
    %2660 = vmatpush2.xpose.msra.mxu0 0.0
    %2661 = vmatprep.subr.mxu0 0.0
    %2662 = vmatpush2.xpose.msra.mxu0 0.0
    %2663 = vmatprep.subr.mxu0 0.0
    %2664 = vmatpush2.xpose.msra.mxu0 0.0
    %2665 = vmatprep.subr.mxu0 0.0
    %2666 = vmatpush2.xpose.msra.mxu0 0.0
    %2667 = vmatprep.mubr.f32.mxu0 0.0
    %2668 = vmatmul.mubr.f32.gmra.mxu0 %v2599
    %v2669 = vpop.f32.mrf.mxu0
    %v2670 = vadd.f32 0.0, %v2669
    %v2671 = vpop.f32.mrf.mxu0
    %2672 = vdwg.mxu0
    %v2673 = vsel %vm375, %v2592, -inf
    %2674 = vmax.xlane.f32.xlu0 %v2673
    %v2675 = vpop.xlane.xlu0 %2674
    %v2676 = vsel %vm375, %v2670, -inf
    %2677 = vmax.xlane.f32.xlu0 %v2676
    %v2678 = vpop.xlane.xlu0 %2677
    %v2679 = vsub.f32 %v2592, %v2675
    %v2680 = vsub.f32 %v2670, %v2678
    %v2681 = vmul.f32 %v2679, 1.442695
    %v2682 = vpow.pop %v2681
    %v2683 = vmul.f32 %v2680, 1.442695
    %v2684 = vpow.pop %v2683
    %v2685 = vsel %vm375, %v2682, 0.0
    %2686 = vadd.xlane.f32.xlu0 %v2685
    %v2687 = vpop.xlane.xlu0 %2686
    %v2688 = vsel %vm375, %v2684, 0.0
    %2689 = vadd.xlane.f32.xlu0 %v2688
    %v2690 = vpop.xlane.xlu0 %2689
    %v2691 = vrcp.pop %v2687
    %v2692 = vmul.f32 %v2682, %v2691
    %v2693 = vrcp.pop %v2690
    %v2694 = vmul.f32 %v2684, %v2693
    %2695 = vrot.lane.b32.xlu0 %v2181, 56
    %v2696 = vpop.permute.xlu0 %2695
    %v2699 = vsel %vm375, %v2692, 0
    %2701 = vmatprep.subr.mxu0 0.0
    %2702 = vmatpush1.msra.mxu0 0.0
    %2703 = vmatprep.subr.mxu0 0.0
    %2704 = vmatpush1.msra.mxu0 0.0
    %2705 = vmatprep.subr.mxu0 0.0
    %2706 = vmatpush1.msra.mxu0 0.0
    %2707 = vmatprep.subr.mxu0 0.0
    %2708 = vmatpush1.msra.mxu0 0.0
    %2709 = vmatprep.subr.mxu0 0.0
    %2710 = vmatpush1.msra.mxu0 0.0
    %2711 = vmatprep.subr.mxu0 0.0
    %2712 = vmatpush1.msra.mxu0 0.0
    %2713 = vmatprep.subr.mxu0 0.0
    %2714 = vmatpush1.msra.mxu0 0.0
    %2715 = vmatprep.subr.mxu0 0.0
    %2716 = vmatpush1.msra.mxu0 0.0
    %2717 = vmatprep.subr.mxu0 0.0
    %2718 = vmatpush1.msra.mxu0 0.0
    %2719 = vmatprep.subr.mxu0 0.0
    %2720 = vmatpush1.msra.mxu0 0.0
    %2721 = vmatprep.subr.mxu0 0.0
    %2722 = vmatpush1.msra.mxu0 0.0
    %2723 = vmatprep.subr.mxu0 0.0
    %2724 = vmatpush1.msra.mxu0 0.0
    %2725 = vmatprep.subr.mxu0 0.0
    %2726 = vmatpush1.msra.mxu0 0.0
    %2727 = vmatprep.subr.mxu0 0.0
    %2728 = vmatpush1.msra.mxu0 0.0
    %2729 = vmatprep.subr.mxu0 0.0
    %2730 = vmatpush1.msra.mxu0 0.0
    %2731 = vmatprep.subr.mxu0 0.0
    %2732 = vmatpush1.msra.mxu0 %v2696
    %2733 = vmatprep.subr.mxu0 0.0
    %2734 = vmatpush2.msra.mxu0 0.0
    %2735 = vmatprep.subr.mxu0 0.0
    %2736 = vmatpush2.msra.mxu0 0.0
    %2737 = vmatprep.subr.mxu0 0.0
    %2738 = vmatpush2.msra.mxu0 0.0
    %2739 = vmatprep.subr.mxu0 0.0
    %2740 = vmatpush2.msra.mxu0 0.0
    %2741 = vmatprep.subr.mxu0 0.0
    %2742 = vmatpush2.msra.mxu0 0.0
    %2743 = vmatprep.subr.mxu0 0.0
    %2744 = vmatpush2.msra.mxu0 0.0
    %2745 = vmatprep.subr.mxu0 0.0
    %2746 = vmatpush2.msra.mxu0 0.0
    %2747 = vmatprep.subr.mxu0 0.0
    %2748 = vmatpush2.msra.mxu0 0.0
    %2749 = vmatprep.subr.mxu0 0.0
    %2750 = vmatpush2.msra.mxu0 0.0
    %2751 = vmatprep.subr.mxu0 0.0
    %2752 = vmatpush2.msra.mxu0 0.0
    %2753 = vmatprep.subr.mxu0 0.0
    %2754 = vmatpush2.msra.mxu0 0.0
    %2755 = vmatprep.subr.mxu0 0.0
    %2756 = vmatpush2.msra.mxu0 0.0
    %2757 = vmatprep.subr.mxu0 0.0
    %2758 = vmatpush2.msra.mxu0 0.0
    %2759 = vmatprep.subr.mxu0 0.0
    %2760 = vmatpush2.msra.mxu0 0.0
    %2761 = vmatprep.subr.mxu0 0.0
    %2762 = vmatpush2.msra.mxu0 0.0
    %2763 = vmatprep.subr.mxu0 0.0
    %2764 = vmatpush2.msra.mxu0 0.0
    %2765 = vmatprep.mubr.f32.mxu0 0.0
    %2766 = vmatmul.mubr.f32.gmra.mxu0 %v2699
    %v2767 = vpop.f32.mrf.mxu0
    %v2768 = vadd.f32 0.0, %v2767
    %v2769 = vpop.f32.mrf.mxu0
    %2770 = vdwg.mxu0
    %2771 = vrot.lane.b32.xlu0 %v2186, 56
    %v2772 = vpop.permute.xlu0 %2771
    %v2775 = vsel %vm375, %v2694, 0
    %2777 = vmatprep.subr.mxu0 0.0
    %2778 = vmatpush1.msra.mxu0 0.0
    %2779 = vmatprep.subr.mxu0 0.0
    %2780 = vmatpush1.msra.mxu0 0.0
    %2781 = vmatprep.subr.mxu0 0.0
    %2782 = vmatpush1.msra.mxu0 0.0
    %2783 = vmatprep.subr.mxu0 0.0
    %2784 = vmatpush1.msra.mxu0 0.0
    %2785 = vmatprep.subr.mxu0 0.0
    %2786 = vmatpush1.msra.mxu0 0.0
    %2787 = vmatprep.subr.mxu0 0.0
    %2788 = vmatpush1.msra.mxu0 0.0
    %2789 = vmatprep.subr.mxu0 0.0
    %2790 = vmatpush1.msra.mxu0 0.0
    %2791 = vmatprep.subr.mxu0 0.0
    %2792 = vmatpush1.msra.mxu0 0.0
    %2793 = vmatprep.subr.mxu0 0.0
    %2794 = vmatpush1.msra.mxu0 0.0
    %2795 = vmatprep.subr.mxu0 0.0
    %2796 = vmatpush1.msra.mxu0 0.0
    %2797 = vmatprep.subr.mxu0 0.0
    %2798 = vmatpush1.msra.mxu0 0.0
    %2799 = vmatprep.subr.mxu0 0.0
    %2800 = vmatpush1.msra.mxu0 0.0
    %2801 = vmatprep.subr.mxu0 0.0
    %2802 = vmatpush1.msra.mxu0 0.0
    %2803 = vmatprep.subr.mxu0 0.0
    %2804 = vmatpush1.msra.mxu0 0.0
    %2805 = vmatprep.subr.mxu0 0.0
    %2806 = vmatpush1.msra.mxu0 0.0
    %2807 = vmatprep.subr.mxu0 0.0
    %2808 = vmatpush1.msra.mxu0 %v2772
    %2809 = vmatprep.subr.mxu0 0.0
    %2810 = vmatpush2.msra.mxu0 0.0
    %2811 = vmatprep.subr.mxu0 0.0
    %2812 = vmatpush2.msra.mxu0 0.0
    %2813 = vmatprep.subr.mxu0 0.0
    %2814 = vmatpush2.msra.mxu0 0.0
    %2815 = vmatprep.subr.mxu0 0.0
    %2816 = vmatpush2.msra.mxu0 0.0
    %2817 = vmatprep.subr.mxu0 0.0
    %2818 = vmatpush2.msra.mxu0 0.0
    %2819 = vmatprep.subr.mxu0 0.0
    %2820 = vmatpush2.msra.mxu0 0.0
    %2821 = vmatprep.subr.mxu0 0.0
    %2822 = vmatpush2.msra.mxu0 0.0
    %2823 = vmatprep.subr.mxu0 0.0
    %2824 = vmatpush2.msra.mxu0 0.0
    %2825 = vmatprep.subr.mxu0 0.0
    %2826 = vmatpush2.msra.mxu0 0.0
    %2827 = vmatprep.subr.mxu0 0.0
    %2828 = vmatpush2.msra.mxu0 0.0
    %2829 = vmatprep.subr.mxu0 0.0
    %2830 = vmatpush2.msra.mxu0 0.0
    %2831 = vmatprep.subr.mxu0 0.0
    %2832 = vmatpush2.msra.mxu0 0.0
    %2833 = vmatprep.subr.mxu0 0.0
    %2834 = vmatpush2.msra.mxu0 0.0
    %2835 = vmatprep.subr.mxu0 0.0
    %2836 = vmatpush2.msra.mxu0 0.0
    %2837 = vmatprep.subr.mxu0 0.0
    %2838 = vmatpush2.msra.mxu0 0.0
    %2839 = vmatprep.subr.mxu0 0.0
    %2840 = vmatpush2.msra.mxu0 0.0
    %2841 = vmatprep.mubr.f32.mxu0 0.0
    %2842 = vmatmul.mubr.f32.gmra.mxu0 %v2775
    %v2843 = vpop.f32.mrf.mxu0
    %v2844 = vadd.f32 0.0, %v2843
    %v2845 = vpop.f32.mrf.mxu0
    %2846 = vdwg.mxu0
    %2847 = vrot.lane.b32.xlu0 %v2181, 112
    %v2848 = vpop.permute.xlu0 %2847
    %2849 = vrot.lane.b32.xlu0 %v2181, 80
    %v2850 = vpop.permute.xlu0 %2849
    %v2851 = vsel %vm375, %v2848, 0
    %v2853 = vsel %vm375, %v2850, 0
    %2855 = vmatprep.subr.mxu0 0.0
    %2856 = vmatpush1.xpose.msra.mxu0 0.0
    %2857 = vmatprep.subr.mxu0 0.0
    %2858 = vmatpush1.xpose.msra.mxu0 0.0
    %2859 = vmatprep.subr.mxu0 0.0
    %2860 = vmatpush1.xpose.msra.mxu0 0.0
    %2861 = vmatprep.subr.mxu0 0.0
    %2862 = vmatpush1.xpose.msra.mxu0 0.0
    %2863 = vmatprep.subr.mxu0 0.0
    %2864 = vmatpush1.xpose.msra.mxu0 0.0
    %2865 = vmatprep.subr.mxu0 0.0
    %2866 = vmatpush1.xpose.msra.mxu0 0.0
    %2867 = vmatprep.subr.mxu0 0.0
    %2868 = vmatpush1.xpose.msra.mxu0 0.0
    %2869 = vmatprep.subr.mxu0 0.0
    %2870 = vmatpush1.xpose.msra.mxu0 0.0
    %2871 = vmatprep.subr.mxu0 0.0
    %2872 = vmatpush1.xpose.msra.mxu0 0.0
    %2873 = vmatprep.subr.mxu0 0.0
    %2874 = vmatpush1.xpose.msra.mxu0 0.0
    %2875 = vmatprep.subr.mxu0 0.0
    %2876 = vmatpush1.xpose.msra.mxu0 0.0
    %2877 = vmatprep.subr.mxu0 0.0
    %2878 = vmatpush1.xpose.msra.mxu0 0.0
    %2879 = vmatprep.subr.mxu0 0.0
    %2880 = vmatpush1.xpose.msra.mxu0 0.0
    %2881 = vmatprep.subr.mxu0 0.0
    %2882 = vmatpush1.xpose.msra.mxu0 0.0
    %2883 = vmatprep.subr.mxu0 0.0
    %2884 = vmatpush1.xpose.msra.mxu0 0.0
    %2885 = vmatprep.subr.mxu0 0.0
    %2886 = vmatpush1.xpose.msra.mxu0 %v2853
    %2887 = vmatprep.subr.mxu0 0.0
    %2888 = vmatpush2.xpose.msra.mxu0 0.0
    %2889 = vmatprep.subr.mxu0 0.0
    %2890 = vmatpush2.xpose.msra.mxu0 0.0
    %2891 = vmatprep.subr.mxu0 0.0
    %2892 = vmatpush2.xpose.msra.mxu0 0.0
    %2893 = vmatprep.subr.mxu0 0.0
    %2894 = vmatpush2.xpose.msra.mxu0 0.0
    %2895 = vmatprep.subr.mxu0 0.0
    %2896 = vmatpush2.xpose.msra.mxu0 0.0
    %2897 = vmatprep.subr.mxu0 0.0
    %2898 = vmatpush2.xpose.msra.mxu0 0.0
    %2899 = vmatprep.subr.mxu0 0.0
    %2900 = vmatpush2.xpose.msra.mxu0 0.0
    %2901 = vmatprep.subr.mxu0 0.0
    %2902 = vmatpush2.xpose.msra.mxu0 0.0
    %2903 = vmatprep.subr.mxu0 0.0
    %2904 = vmatpush2.xpose.msra.mxu0 0.0
    %2905 = vmatprep.subr.mxu0 0.0
    %2906 = vmatpush2.xpose.msra.mxu0 0.0
    %2907 = vmatprep.subr.mxu0 0.0
    %2908 = vmatpush2.xpose.msra.mxu0 0.0
    %2909 = vmatprep.subr.mxu0 0.0
    %2910 = vmatpush2.xpose.msra.mxu0 0.0
    %2911 = vmatprep.subr.mxu0 0.0
    %2912 = vmatpush2.xpose.msra.mxu0 0.0
    %2913 = vmatprep.subr.mxu0 0.0
    %2914 = vmatpush2.xpose.msra.mxu0 0.0
    %2915 = vmatprep.subr.mxu0 0.0
    %2916 = vmatpush2.xpose.msra.mxu0 0.0
    %2917 = vmatprep.subr.mxu0 0.0
    %2918 = vmatpush2.xpose.msra.mxu0 0.0
    %2919 = vmatprep.mubr.f32.mxu0 0.0
    %2920 = vmatmul.mubr.f32.gmra.mxu0 %v2851
    %v2921 = vpop.f32.mrf.mxu0
    %v2922 = vadd.f32 0.0, %v2921
    %v2923 = vpop.f32.mrf.mxu0
    %2924 = vdwg.mxu0
    %2925 = vrot.lane.b32.xlu0 %v2186, 112
    %v2926 = vpop.permute.xlu0 %2925
    %2927 = vrot.lane.b32.xlu0 %v2186, 80
    %v2928 = vpop.permute.xlu0 %2927
    %v2929 = vsel %vm375, %v2926, 0
    %v2931 = vsel %vm375, %v2928, 0
    %2933 = vmatprep.subr.mxu0 0.0
    %2934 = vmatpush1.xpose.msra.mxu0 0.0
    %2935 = vmatprep.subr.mxu0 0.0
    %2936 = vmatpush1.xpose.msra.mxu0 0.0
    %2937 = vmatprep.subr.mxu0 0.0
    %2938 = vmatpush1.xpose.msra.mxu0 0.0
    %2939 = vmatprep.subr.mxu0 0.0
    %2940 = vmatpush1.xpose.msra.mxu0 0.0
    %2941 = vmatprep.subr.mxu0 0.0
    %2942 = vmatpush1.xpose.msra.mxu0 0.0
    %2943 = vmatprep.subr.mxu0 0.0
    %2944 = vmatpush1.xpose.msra.mxu0 0.0
    %2945 = vmatprep.subr.mxu0 0.0
    %2946 = vmatpush1.xpose.msra.mxu0 0.0
    %2947 = vmatprep.subr.mxu0 0.0
    %2948 = vmatpush1.xpose.msra.mxu0 0.0
    %2949 = vmatprep.subr.mxu0 0.0
    %2950 = vmatpush1.xpose.msra.mxu0 0.0
    %2951 = vmatprep.subr.mxu0 0.0
    %2952 = vmatpush1.xpose.msra.mxu0 0.0
    %2953 = vmatprep.subr.mxu0 0.0
    %2954 = vmatpush1.xpose.msra.mxu0 0.0
    %2955 = vmatprep.subr.mxu0 0.0
    %2956 = vmatpush1.xpose.msra.mxu0 0.0
    %2957 = vmatprep.subr.mxu0 0.0
    %2958 = vmatpush1.xpose.msra.mxu0 0.0
    %2959 = vmatprep.subr.mxu0 0.0
    %2960 = vmatpush1.xpose.msra.mxu0 0.0
    %2961 = vmatprep.subr.mxu0 0.0
    %2962 = vmatpush1.xpose.msra.mxu0 0.0
    %2963 = vmatprep.subr.mxu0 0.0
    %2964 = vmatpush1.xpose.msra.mxu0 %v2931
    %2965 = vmatprep.subr.mxu0 0.0
    %2966 = vmatpush2.xpose.msra.mxu0 0.0
    %2967 = vmatprep.subr.mxu0 0.0
    %2968 = vmatpush2.xpose.msra.mxu0 0.0
    %2969 = vmatprep.subr.mxu0 0.0
    %2970 = vmatpush2.xpose.msra.mxu0 0.0
    %2971 = vmatprep.subr.mxu0 0.0
    %2972 = vmatpush2.xpose.msra.mxu0 0.0
    %2973 = vmatprep.subr.mxu0 0.0
    %2974 = vmatpush2.xpose.msra.mxu0 0.0
    %2975 = vmatprep.subr.mxu0 0.0
    %2976 = vmatpush2.xpose.msra.mxu0 0.0
    %2977 = vmatprep.subr.mxu0 0.0
    %2978 = vmatpush2.xpose.msra.mxu0 0.0
    %2979 = vmatprep.subr.mxu0 0.0
    %2980 = vmatpush2.xpose.msra.mxu0 0.0
    %2981 = vmatprep.subr.mxu0 0.0
    %2982 = vmatpush2.xpose.msra.mxu0 0.0
    %2983 = vmatprep.subr.mxu0 0.0
    %2984 = vmatpush2.xpose.msra.mxu0 0.0
    %2985 = vmatprep.subr.mxu0 0.0
    %2986 = vmatpush2.xpose.msra.mxu0 0.0
    %2987 = vmatprep.subr.mxu0 0.0
    %2988 = vmatpush2.xpose.msra.mxu0 0.0
    %2989 = vmatprep.subr.mxu0 0.0
    %2990 = vmatpush2.xpose.msra.mxu0 0.0
    %2991 = vmatprep.subr.mxu0 0.0
    %2992 = vmatpush2.xpose.msra.mxu0 0.0
    %2993 = vmatprep.subr.mxu0 0.0
    %2994 = vmatpush2.xpose.msra.mxu0 0.0
    %2995 = vmatprep.subr.mxu0 0.0
    %2996 = vmatpush2.xpose.msra.mxu0 0.0
    %2997 = vmatprep.mubr.f32.mxu0 0.0
    %2998 = vmatmul.mubr.f32.gmra.mxu0 %v2929
    %v2999 = vpop.f32.mrf.mxu0
    %v3000 = vadd.f32 0.0, %v2999
    %v3001 = vpop.f32.mrf.mxu0
    %3002 = vdwg.mxu0
    %v3003 = vsel %vm375, %v2922, -inf
    %3004 = vmax.xlane.f32.xlu0 %v3003
    %v3005 = vpop.xlane.xlu0 %3004
    %v3006 = vsel %vm375, %v3000, -inf
    %3007 = vmax.xlane.f32.xlu0 %v3006
    %v3008 = vpop.xlane.xlu0 %3007
    %v3009 = vsub.f32 %v2922, %v3005
    %v3010 = vsub.f32 %v3000, %v3008
    %v3011 = vmul.f32 %v3009, 1.442695
    %v3012 = vpow.pop %v3011
    %v3013 = vmul.f32 %v3010, 1.442695
    %v3014 = vpow.pop %v3013
    %v3015 = vsel %vm375, %v3012, 0.0
    %3016 = vadd.xlane.f32.xlu0 %v3015
    %v3017 = vpop.xlane.xlu0 %3016
    %v3018 = vsel %vm375, %v3014, 0.0
    %3019 = vadd.xlane.f32.xlu0 %v3018
    %v3020 = vpop.xlane.xlu0 %3019
    %v3021 = vrcp.pop %v3017
    %v3022 = vmul.f32 %v3012, %v3021
    %v3023 = vrcp.pop %v3020
    %v3024 = vmul.f32 %v3014, %v3023
    %3025 = vrot.lane.b32.xlu0 %v2181, 48
    %v3026 = vpop.permute.xlu0 %3025
    %v3029 = vsel %vm375, %v3022, 0
    %3031 = vmatprep.subr.mxu0 0.0
    %3032 = vmatpush1.msra.mxu0 0.0
    %3033 = vmatprep.subr.mxu0 0.0
    %3034 = vmatpush1.msra.mxu0 0.0
    %3035 = vmatprep.subr.mxu0 0.0
    %3036 = vmatpush1.msra.mxu0 0.0
    %3037 = vmatprep.subr.mxu0 0.0
    %3038 = vmatpush1.msra.mxu0 0.0
    %3039 = vmatprep.subr.mxu0 0.0
    %3040 = vmatpush1.msra.mxu0 0.0
    %3041 = vmatprep.subr.mxu0 0.0
    %3042 = vmatpush1.msra.mxu0 0.0
    %3043 = vmatprep.subr.mxu0 0.0
    %3044 = vmatpush1.msra.mxu0 0.0
    %3045 = vmatprep.subr.mxu0 0.0
    %3046 = vmatpush1.msra.mxu0 0.0
    %3047 = vmatprep.subr.mxu0 0.0
    %3048 = vmatpush1.msra.mxu0 0.0
    %3049 = vmatprep.subr.mxu0 0.0
    %3050 = vmatpush1.msra.mxu0 0.0
    %3051 = vmatprep.subr.mxu0 0.0
    %3052 = vmatpush1.msra.mxu0 0.0
    %3053 = vmatprep.subr.mxu0 0.0
    %3054 = vmatpush1.msra.mxu0 0.0
    %3055 = vmatprep.subr.mxu0 0.0
    %3056 = vmatpush1.msra.mxu0 0.0
    %3057 = vmatprep.subr.mxu0 0.0
    %3058 = vmatpush1.msra.mxu0 0.0
    %3059 = vmatprep.subr.mxu0 0.0
    %3060 = vmatpush1.msra.mxu0 0.0
    %3061 = vmatprep.subr.mxu0 0.0
    %3062 = vmatpush1.msra.mxu0 %v3026
    %3063 = vmatprep.subr.mxu0 0.0
    %3064 = vmatpush2.msra.mxu0 0.0
    %3065 = vmatprep.subr.mxu0 0.0
    %3066 = vmatpush2.msra.mxu0 0.0
    %3067 = vmatprep.subr.mxu0 0.0
    %3068 = vmatpush2.msra.mxu0 0.0
    %3069 = vmatprep.subr.mxu0 0.0
    %3070 = vmatpush2.msra.mxu0 0.0
    %3071 = vmatprep.subr.mxu0 0.0
    %3072 = vmatpush2.msra.mxu0 0.0
    %3073 = vmatprep.subr.mxu0 0.0
    %3074 = vmatpush2.msra.mxu0 0.0
    %3075 = vmatprep.subr.mxu0 0.0
    %3076 = vmatpush2.msra.mxu0 0.0
    %3077 = vmatprep.subr.mxu0 0.0
    %3078 = vmatpush2.msra.mxu0 0.0
    %3079 = vmatprep.subr.mxu0 0.0
    %3080 = vmatpush2.msra.mxu0 0.0
    %3081 = vmatprep.subr.mxu0 0.0
    %3082 = vmatpush2.msra.mxu0 0.0
    %3083 = vmatprep.subr.mxu0 0.0
    %3084 = vmatpush2.msra.mxu0 0.0
    %3085 = vmatprep.subr.mxu0 0.0
    %3086 = vmatpush2.msra.mxu0 0.0
    %3087 = vmatprep.subr.mxu0 0.0
    %3088 = vmatpush2.msra.mxu0 0.0
    %3089 = vmatprep.subr.mxu0 0.0
    %3090 = vmatpush2.msra.mxu0 0.0
    %3091 = vmatprep.subr.mxu0 0.0
    %3092 = vmatpush2.msra.mxu0 0.0
    %3093 = vmatprep.subr.mxu0 0.0
    %3094 = vmatpush2.msra.mxu0 0.0
    %3095 = vmatprep.mubr.f32.mxu0 0.0
    %3096 = vmatmul.mubr.f32.gmra.mxu0 %v3029
    %v3097 = vpop.f32.mrf.mxu0
    %v3098 = vadd.f32 0.0, %v3097
    %v3099 = vpop.f32.mrf.mxu0
    %3100 = vdwg.mxu0
    %3101 = vrot.lane.b32.xlu0 %v2186, 48
    %v3102 = vpop.permute.xlu0 %3101
    %v3105 = vsel %vm375, %v3024, 0
    %3107 = vmatprep.subr.mxu0 0.0
    %3108 = vmatpush1.msra.mxu0 0.0
    %3109 = vmatprep.subr.mxu0 0.0
    %3110 = vmatpush1.msra.mxu0 0.0
    %3111 = vmatprep.subr.mxu0 0.0
    %3112 = vmatpush1.msra.mxu0 0.0
    %3113 = vmatprep.subr.mxu0 0.0
    %3114 = vmatpush1.msra.mxu0 0.0
    %3115 = vmatprep.subr.mxu0 0.0
    %3116 = vmatpush1.msra.mxu0 0.0
    %3117 = vmatprep.subr.mxu0 0.0
    %3118 = vmatpush1.msra.mxu0 0.0
    %3119 = vmatprep.subr.mxu0 0.0
    %3120 = vmatpush1.msra.mxu0 0.0
    %3121 = vmatprep.subr.mxu0 0.0
    %3122 = vmatpush1.msra.mxu0 0.0
    %3123 = vmatprep.subr.mxu0 0.0
    %3124 = vmatpush1.msra.mxu0 0.0
    %3125 = vmatprep.subr.mxu0 0.0
    %3126 = vmatpush1.msra.mxu0 0.0
    %3127 = vmatprep.subr.mxu0 0.0
    %3128 = vmatpush1.msra.mxu0 0.0
    %3129 = vmatprep.subr.mxu0 0.0
    %3130 = vmatpush1.msra.mxu0 0.0
    %3131 = vmatprep.subr.mxu0 0.0
    %3132 = vmatpush1.msra.mxu0 0.0
    %3133 = vmatprep.subr.mxu0 0.0
    %3134 = vmatpush1.msra.mxu0 0.0
    %3135 = vmatprep.subr.mxu0 0.0
    %3136 = vmatpush1.msra.mxu0 0.0
    %3137 = vmatprep.subr.mxu0 0.0
    %3138 = vmatpush1.msra.mxu0 %v3102
    %3139 = vmatprep.subr.mxu0 0.0
    %3140 = vmatpush2.msra.mxu0 0.0
    %3141 = vmatprep.subr.mxu0 0.0
    %3142 = vmatpush2.msra.mxu0 0.0
    %3143 = vmatprep.subr.mxu0 0.0
    %3144 = vmatpush2.msra.mxu0 0.0
    %3145 = vmatprep.subr.mxu0 0.0
    %3146 = vmatpush2.msra.mxu0 0.0
    %3147 = vmatprep.subr.mxu0 0.0
    %3148 = vmatpush2.msra.mxu0 0.0
    %3149 = vmatprep.subr.mxu0 0.0
    %3150 = vmatpush2.msra.mxu0 0.0
    %3151 = vmatprep.subr.mxu0 0.0
    %3152 = vmatpush2.msra.mxu0 0.0
    %3153 = vmatprep.subr.mxu0 0.0
    %3154 = vmatpush2.msra.mxu0 0.0
    %3155 = vmatprep.subr.mxu0 0.0
    %3156 = vmatpush2.msra.mxu0 0.0
    %3157 = vmatprep.subr.mxu0 0.0
    %3158 = vmatpush2.msra.mxu0 0.0
    %3159 = vmatprep.subr.mxu0 0.0
    %3160 = vmatpush2.msra.mxu0 0.0
    %3161 = vmatprep.subr.mxu0 0.0
    %3162 = vmatpush2.msra.mxu0 0.0
    %3163 = vmatprep.subr.mxu0 0.0
    %3164 = vmatpush2.msra.mxu0 0.0
    %3165 = vmatprep.subr.mxu0 0.0
    %3166 = vmatpush2.msra.mxu0 0.0
    %3167 = vmatprep.subr.mxu0 0.0
    %3168 = vmatpush2.msra.mxu0 0.0
    %3169 = vmatprep.subr.mxu0 0.0
    %3170 = vmatpush2.msra.mxu0 0.0
    %3171 = vmatprep.mubr.f32.mxu0 0.0
    %3172 = vmatmul.mubr.f32.gmra.mxu0 %v3105
    %v3173 = vpop.f32.mrf.mxu0
    %v3174 = vadd.f32 0.0, %v3173
    %v3175 = vpop.f32.mrf.mxu0
    %3176 = vdwg.mxu0
    %3177 = vrot.lane.b32.xlu0 %v2181, 104
    %v3178 = vpop.permute.xlu0 %3177
    %3179 = vrot.lane.b32.xlu0 %v2181, 72
    %v3180 = vpop.permute.xlu0 %3179
    %v3181 = vsel %vm375, %v3178, 0
    %v3183 = vsel %vm375, %v3180, 0
    %3185 = vmatprep.subr.mxu0 0.0
    %3186 = vmatpush1.xpose.msra.mxu0 0.0
    %3187 = vmatprep.subr.mxu0 0.0
    %3188 = vmatpush1.xpose.msra.mxu0 0.0
    %3189 = vmatprep.subr.mxu0 0.0
    %3190 = vmatpush1.xpose.msra.mxu0 0.0
    %3191 = vmatprep.subr.mxu0 0.0
    %3192 = vmatpush1.xpose.msra.mxu0 0.0
    %3193 = vmatprep.subr.mxu0 0.0
    %3194 = vmatpush1.xpose.msra.mxu0 0.0
    %3195 = vmatprep.subr.mxu0 0.0
    %3196 = vmatpush1.xpose.msra.mxu0 0.0
    %3197 = vmatprep.subr.mxu0 0.0
    %3198 = vmatpush1.xpose.msra.mxu0 0.0
    %3199 = vmatprep.subr.mxu0 0.0
    %3200 = vmatpush1.xpose.msra.mxu0 0.0
    %3201 = vmatprep.subr.mxu0 0.0
    %3202 = vmatpush1.xpose.msra.mxu0 0.0
    %3203 = vmatprep.subr.mxu0 0.0
    %3204 = vmatpush1.xpose.msra.mxu0 0.0
    %3205 = vmatprep.subr.mxu0 0.0
    %3206 = vmatpush1.xpose.msra.mxu0 0.0
    %3207 = vmatprep.subr.mxu0 0.0
    %3208 = vmatpush1.xpose.msra.mxu0 0.0
    %3209 = vmatprep.subr.mxu0 0.0
    %3210 = vmatpush1.xpose.msra.mxu0 0.0
    %3211 = vmatprep.subr.mxu0 0.0
    %3212 = vmatpush1.xpose.msra.mxu0 0.0
    %3213 = vmatprep.subr.mxu0 0.0
    %3214 = vmatpush1.xpose.msra.mxu0 0.0
    %3215 = vmatprep.subr.mxu0 0.0
    %3216 = vmatpush1.xpose.msra.mxu0 %v3183
    %3217 = vmatprep.subr.mxu0 0.0
    %3218 = vmatpush2.xpose.msra.mxu0 0.0
    %3219 = vmatprep.subr.mxu0 0.0
    %3220 = vmatpush2.xpose.msra.mxu0 0.0
    %3221 = vmatprep.subr.mxu0 0.0
    %3222 = vmatpush2.xpose.msra.mxu0 0.0
    %3223 = vmatprep.subr.mxu0 0.0
    %3224 = vmatpush2.xpose.msra.mxu0 0.0
    %3225 = vmatprep.subr.mxu0 0.0
    %3226 = vmatpush2.xpose.msra.mxu0 0.0
    %3227 = vmatprep.subr.mxu0 0.0
    %3228 = vmatpush2.xpose.msra.mxu0 0.0
    %3229 = vmatprep.subr.mxu0 0.0
    %3230 = vmatpush2.xpose.msra.mxu0 0.0
    %3231 = vmatprep.subr.mxu0 0.0
    %3232 = vmatpush2.xpose.msra.mxu0 0.0
    %3233 = vmatprep.subr.mxu0 0.0
    %3234 = vmatpush2.xpose.msra.mxu0 0.0
    %3235 = vmatprep.subr.mxu0 0.0
    %3236 = vmatpush2.xpose.msra.mxu0 0.0
    %3237 = vmatprep.subr.mxu0 0.0
    %3238 = vmatpush2.xpose.msra.mxu0 0.0
    %3239 = vmatprep.subr.mxu0 0.0
    %3240 = vmatpush2.xpose.msra.mxu0 0.0
    %3241 = vmatprep.subr.mxu0 0.0
    %3242 = vmatpush2.xpose.msra.mxu0 0.0
    %3243 = vmatprep.subr.mxu0 0.0
    %3244 = vmatpush2.xpose.msra.mxu0 0.0
    %3245 = vmatprep.subr.mxu0 0.0
    %3246 = vmatpush2.xpose.msra.mxu0 0.0
    %3247 = vmatprep.subr.mxu0 0.0
    %3248 = vmatpush2.xpose.msra.mxu0 0.0
    %3249 = vmatprep.mubr.f32.mxu0 0.0
    %3250 = vmatmul.mubr.f32.gmra.mxu0 %v3181
    %v3251 = vpop.f32.mrf.mxu0
    %v3252 = vadd.f32 0.0, %v3251
    %v3253 = vpop.f32.mrf.mxu0
    %3254 = vdwg.mxu0
    %3255 = vrot.lane.b32.xlu0 %v2186, 104
    %v3256 = vpop.permute.xlu0 %3255
    %3257 = vrot.lane.b32.xlu0 %v2186, 72
    %v3258 = vpop.permute.xlu0 %3257
    %v3259 = vsel %vm375, %v3256, 0
    %v3261 = vsel %vm375, %v3258, 0
    %3263 = vmatprep.subr.mxu0 0.0
    %3264 = vmatpush1.xpose.msra.mxu0 0.0
    %3265 = vmatprep.subr.mxu0 0.0
    %3266 = vmatpush1.xpose.msra.mxu0 0.0
    %3267 = vmatprep.subr.mxu0 0.0
    %3268 = vmatpush1.xpose.msra.mxu0 0.0
    %3269 = vmatprep.subr.mxu0 0.0
    %3270 = vmatpush1.xpose.msra.mxu0 0.0
    %3271 = vmatprep.subr.mxu0 0.0
    %3272 = vmatpush1.xpose.msra.mxu0 0.0
    %3273 = vmatprep.subr.mxu0 0.0
    %3274 = vmatpush1.xpose.msra.mxu0 0.0
    %3275 = vmatprep.subr.mxu0 0.0
    %3276 = vmatpush1.xpose.msra.mxu0 0.0
    %3277 = vmatprep.subr.mxu0 0.0
    %3278 = vmatpush1.xpose.msra.mxu0 0.0
    %3279 = vmatprep.subr.mxu0 0.0
    %3280 = vmatpush1.xpose.msra.mxu0 0.0
    %3281 = vmatprep.subr.mxu0 0.0
    %3282 = vmatpush1.xpose.msra.mxu0 0.0
    %3283 = vmatprep.subr.mxu0 0.0
    %3284 = vmatpush1.xpose.msra.mxu0 0.0
    %3285 = vmatprep.subr.mxu0 0.0
    %3286 = vmatpush1.xpose.msra.mxu0 0.0
    %3287 = vmatprep.subr.mxu0 0.0
    %3288 = vmatpush1.xpose.msra.mxu0 0.0
    %3289 = vmatprep.subr.mxu0 0.0
    %3290 = vmatpush1.xpose.msra.mxu0 0.0
    %3291 = vmatprep.subr.mxu0 0.0
    %3292 = vmatpush1.xpose.msra.mxu0 0.0
    %3293 = vmatprep.subr.mxu0 0.0
    %3294 = vmatpush1.xpose.msra.mxu0 %v3261
    %3295 = vmatprep.subr.mxu0 0.0
    %3296 = vmatpush2.xpose.msra.mxu0 0.0
    %3297 = vmatprep.subr.mxu0 0.0
    %3298 = vmatpush2.xpose.msra.mxu0 0.0
    %3299 = vmatprep.subr.mxu0 0.0
    %3300 = vmatpush2.xpose.msra.mxu0 0.0
    %3301 = vmatprep.subr.mxu0 0.0
    %3302 = vmatpush2.xpose.msra.mxu0 0.0
    %3303 = vmatprep.subr.mxu0 0.0
    %3304 = vmatpush2.xpose.msra.mxu0 0.0
    %3305 = vmatprep.subr.mxu0 0.0
    %3306 = vmatpush2.xpose.msra.mxu0 0.0
    %3307 = vmatprep.subr.mxu0 0.0
    %3308 = vmatpush2.xpose.msra.mxu0 0.0
    %3309 = vmatprep.subr.mxu0 0.0
    %3310 = vmatpush2.xpose.msra.mxu0 0.0
    %3311 = vmatprep.subr.mxu0 0.0
    %3312 = vmatpush2.xpose.msra.mxu0 0.0
    %3313 = vmatprep.subr.mxu0 0.0
    %3314 = vmatpush2.xpose.msra.mxu0 0.0
    %3315 = vmatprep.subr.mxu0 0.0
    %3316 = vmatpush2.xpose.msra.mxu0 0.0
    %3317 = vmatprep.subr.mxu0 0.0
    %3318 = vmatpush2.xpose.msra.mxu0 0.0
    %3319 = vmatprep.subr.mxu0 0.0
    %3320 = vmatpush2.xpose.msra.mxu0 0.0
    %3321 = vmatprep.subr.mxu0 0.0
    %3322 = vmatpush2.xpose.msra.mxu0 0.0
    %3323 = vmatprep.subr.mxu0 0.0
    %3324 = vmatpush2.xpose.msra.mxu0 0.0
    %3325 = vmatprep.subr.mxu0 0.0
    %3326 = vmatpush2.xpose.msra.mxu0 0.0
    %3327 = vmatprep.mubr.f32.mxu0 0.0
    %3328 = vmatmul.mubr.f32.gmra.mxu0 %v3259
    %v3329 = vpop.f32.mrf.mxu0
    %v3330 = vadd.f32 0.0, %v3329
    %v3331 = vpop.f32.mrf.mxu0
    %3332 = vdwg.mxu0
    %v3333 = vsel %vm375, %v3252, -inf
    %3334 = vmax.xlane.f32.xlu0 %v3333
    %v3335 = vpop.xlane.xlu0 %3334
    %v3336 = vsel %vm375, %v3330, -inf
    %3337 = vmax.xlane.f32.xlu0 %v3336
    %v3338 = vpop.xlane.xlu0 %3337
    %v3339 = vsub.f32 %v3252, %v3335
    %v3340 = vsub.f32 %v3330, %v3338
    %v3341 = vmul.f32 %v3339, 1.442695
    %v3342 = vpow.pop %v3341
    %v3343 = vmul.f32 %v3340, 1.442695
    %v3344 = vpow.pop %v3343
    %v3345 = vsel %vm375, %v3342, 0.0
    %3346 = vadd.xlane.f32.xlu0 %v3345
    %v3347 = vpop.xlane.xlu0 %3346
    %v3348 = vsel %vm375, %v3344, 0.0
    %3349 = vadd.xlane.f32.xlu0 %v3348
    %v3350 = vpop.xlane.xlu0 %3349
    %v3351 = vrcp.pop %v3347
    %v3352 = vmul.f32 %v3342, %v3351
    %v3353 = vrcp.pop %v3350
    %v3354 = vmul.f32 %v3344, %v3353
    %3355 = vrot.lane.b32.xlu0 %v2181, 40
    %v3356 = vpop.permute.xlu0 %3355
    %v3359 = vsel %vm375, %v3352, 0
    %3361 = vmatprep.subr.mxu0 0.0
    %3362 = vmatpush1.msra.mxu0 0.0
    %3363 = vmatprep.subr.mxu0 0.0
    %3364 = vmatpush1.msra.mxu0 0.0
    %3365 = vmatprep.subr.mxu0 0.0
    %3366 = vmatpush1.msra.mxu0 0.0
    %3367 = vmatprep.subr.mxu0 0.0
    %3368 = vmatpush1.msra.mxu0 0.0
    %3369 = vmatprep.subr.mxu0 0.0
    %3370 = vmatpush1.msra.mxu0 0.0
    %3371 = vmatprep.subr.mxu0 0.0
    %3372 = vmatpush1.msra.mxu0 0.0
    %3373 = vmatprep.subr.mxu0 0.0
    %3374 = vmatpush1.msra.mxu0 0.0
    %3375 = vmatprep.subr.mxu0 0.0
    %3376 = vmatpush1.msra.mxu0 0.0
    %3377 = vmatprep.subr.mxu0 0.0
    %3378 = vmatpush1.msra.mxu0 0.0
    %3379 = vmatprep.subr.mxu0 0.0
    %3380 = vmatpush1.msra.mxu0 0.0
    %3381 = vmatprep.subr.mxu0 0.0
    %3382 = vmatpush1.msra.mxu0 0.0
    %3383 = vmatprep.subr.mxu0 0.0
    %3384 = vmatpush1.msra.mxu0 0.0
    %3385 = vmatprep.subr.mxu0 0.0
    %3386 = vmatpush1.msra.mxu0 0.0
    %3387 = vmatprep.subr.mxu0 0.0
    %3388 = vmatpush1.msra.mxu0 0.0
    %3389 = vmatprep.subr.mxu0 0.0
    %3390 = vmatpush1.msra.mxu0 0.0
    %3391 = vmatprep.subr.mxu0 0.0
    %3392 = vmatpush1.msra.mxu0 %v3356
    %3393 = vmatprep.subr.mxu0 0.0
    %3394 = vmatpush2.msra.mxu0 0.0
    %3395 = vmatprep.subr.mxu0 0.0
    %3396 = vmatpush2.msra.mxu0 0.0
    %3397 = vmatprep.subr.mxu0 0.0
    %3398 = vmatpush2.msra.mxu0 0.0
    %3399 = vmatprep.subr.mxu0 0.0
    %3400 = vmatpush2.msra.mxu0 0.0
    %3401 = vmatprep.subr.mxu0 0.0
    %3402 = vmatpush2.msra.mxu0 0.0
    %3403 = vmatprep.subr.mxu0 0.0
    %3404 = vmatpush2.msra.mxu0 0.0
    %3405 = vmatprep.subr.mxu0 0.0
    %3406 = vmatpush2.msra.mxu0 0.0
    %3407 = vmatprep.subr.mxu0 0.0
    %3408 = vmatpush2.msra.mxu0 0.0
    %3409 = vmatprep.subr.mxu0 0.0
    %3410 = vmatpush2.msra.mxu0 0.0
    %3411 = vmatprep.subr.mxu0 0.0
    %3412 = vmatpush2.msra.mxu0 0.0
    %3413 = vmatprep.subr.mxu0 0.0
    %3414 = vmatpush2.msra.mxu0 0.0
    %3415 = vmatprep.subr.mxu0 0.0
    %3416 = vmatpush2.msra.mxu0 0.0
    %3417 = vmatprep.subr.mxu0 0.0
    %3418 = vmatpush2.msra.mxu0 0.0
    %3419 = vmatprep.subr.mxu0 0.0
    %3420 = vmatpush2.msra.mxu0 0.0
    %3421 = vmatprep.subr.mxu0 0.0
    %3422 = vmatpush2.msra.mxu0 0.0
    %3423 = vmatprep.subr.mxu0 0.0
    %3424 = vmatpush2.msra.mxu0 0.0
    %3425 = vmatprep.mubr.f32.mxu0 0.0
    %3426 = vmatmul.mubr.f32.gmra.mxu0 %v3359
    %v3427 = vpop.f32.mrf.mxu0
    %v3428 = vadd.f32 0.0, %v3427
    %v3429 = vpop.f32.mrf.mxu0
    %3430 = vdwg.mxu0
    %3431 = vrot.lane.b32.xlu0 %v2186, 40
    %v3432 = vpop.permute.xlu0 %3431
    %v3435 = vsel %vm375, %v3354, 0
    %3437 = vmatprep.subr.mxu0 0.0
    %3438 = vmatpush1.msra.mxu0 0.0
    %3439 = vmatprep.subr.mxu0 0.0
    %3440 = vmatpush1.msra.mxu0 0.0
    %3441 = vmatprep.subr.mxu0 0.0
    %3442 = vmatpush1.msra.mxu0 0.0
    %3443 = vmatprep.subr.mxu0 0.0
    %3444 = vmatpush1.msra.mxu0 0.0
    %3445 = vmatprep.subr.mxu0 0.0
    %3446 = vmatpush1.msra.mxu0 0.0
    %3447 = vmatprep.subr.mxu0 0.0
    %3448 = vmatpush1.msra.mxu0 0.0
    %3449 = vmatprep.subr.mxu0 0.0
    %3450 = vmatpush1.msra.mxu0 0.0
    %3451 = vmatprep.subr.mxu0 0.0
    %3452 = vmatpush1.msra.mxu0 0.0
    %3453 = vmatprep.subr.mxu0 0.0
    %3454 = vmatpush1.msra.mxu0 0.0
    %3455 = vmatprep.subr.mxu0 0.0
    %3456 = vmatpush1.msra.mxu0 0.0
    %3457 = vmatprep.subr.mxu0 0.0
    %3458 = vmatpush1.msra.mxu0 0.0
    %3459 = vmatprep.subr.mxu0 0.0
    %3460 = vmatpush1.msra.mxu0 0.0
    %3461 = vmatprep.subr.mxu0 0.0
    %3462 = vmatpush1.msra.mxu0 0.0
    %3463 = vmatprep.subr.mxu0 0.0
    %3464 = vmatpush1.msra.mxu0 0.0
    %3465 = vmatprep.subr.mxu0 0.0
    %3466 = vmatpush1.msra.mxu0 0.0
    %3467 = vmatprep.subr.mxu0 0.0
    %3468 = vmatpush1.msra.mxu0 %v3432
    %3469 = vmatprep.subr.mxu0 0.0
    %3470 = vmatpush2.msra.mxu0 0.0
    %3471 = vmatprep.subr.mxu0 0.0
    %3472 = vmatpush2.msra.mxu0 0.0
    %3473 = vmatprep.subr.mxu0 0.0
    %3474 = vmatpush2.msra.mxu0 0.0
    %3475 = vmatprep.subr.mxu0 0.0
    %3476 = vmatpush2.msra.mxu0 0.0
    %3477 = vmatprep.subr.mxu0 0.0
    %3478 = vmatpush2.msra.mxu0 0.0
    %3479 = vmatprep.subr.mxu0 0.0
    %3480 = vmatpush2.msra.mxu0 0.0
    %3481 = vmatprep.subr.mxu0 0.0
    %3482 = vmatpush2.msra.mxu0 0.0
    %3483 = vmatprep.subr.mxu0 0.0
    %3484 = vmatpush2.msra.mxu0 0.0
    %3485 = vmatprep.subr.mxu0 0.0
    %3486 = vmatpush2.msra.mxu0 0.0
    %3487 = vmatprep.subr.mxu0 0.0
    %3488 = vmatpush2.msra.mxu0 0.0
    %3489 = vmatprep.subr.mxu0 0.0
    %3490 = vmatpush2.msra.mxu0 0.0
    %3491 = vmatprep.subr.mxu0 0.0
    %3492 = vmatpush2.msra.mxu0 0.0
    %3493 = vmatprep.subr.mxu0 0.0
    %3494 = vmatpush2.msra.mxu0 0.0
    %3495 = vmatprep.subr.mxu0 0.0
    %3496 = vmatpush2.msra.mxu0 0.0
    %3497 = vmatprep.subr.mxu0 0.0
    %3498 = vmatpush2.msra.mxu0 0.0
    %3499 = vmatprep.subr.mxu0 0.0
    %3500 = vmatpush2.msra.mxu0 0.0
    %3501 = vmatprep.mubr.f32.mxu0 0.0
    %3502 = vmatmul.mubr.f32.gmra.mxu0 %v3435
    %v3503 = vpop.f32.mrf.mxu0
    %v3504 = vadd.f32 0.0, %v3503
    %v3505 = vpop.f32.mrf.mxu0
    %3506 = vdwg.mxu0
    %3509 = vrot.lane.b32.xlu0 %v2768, 8
    %v3510 = vpop.permute.xlu0 %3509
    %3511 = vrot.lane.b32.xlu0 %v2844, 8
    %v3512 = vpop.permute.xlu0 %3511
    %3517 = vrot.lane.b32.xlu0 %v3098, 16
    %v3518 = vpop.permute.xlu0 %3517
    %3519 = vrot.lane.b32.xlu0 %v3174, 16
    %v3520 = vpop.permute.xlu0 %3519
    %3525 = vrot.lane.b32.xlu0 %v3428, 24
    %v3526 = vpop.permute.xlu0 %3525
    %3527 = vrot.lane.b32.xlu0 %v3504, 24
    %v3528 = vpop.permute.xlu0 %3527
    %v3531 = vsel %vm375, %v2438, %v3510
    %v3532 = vsel %vm375, %v2514, %v3512
    %v3533 = vsel %vm150, %v3531, %v3518
    %v3534 = vsel %vm150, %v3532, %v3520
    %v3535 = vsel %vm1719, %v3533, %v3526
    %v3536 = vsel %vm1719, %v3534, %v3528
    %s3537 = scalar_lea.vmem %s5, 32
    %v3538 = vld [vmem:[%s3537] sm:$0xff]
    %v3539 = vld [vmem:[%s3537 + $0x8] sm:$0xff]
    %v3540 = vld [vmem:[%s3537 + $0x10] sm:$0xff]
    %v3541 = vld [vmem:[%s3537 + $0x18] sm:$0xff]
    %s3542 = scalar_lea.vmem %s6, 1
    %v3543 = vld [vmem:[%s3542] sm:$0x1]
    %v3545 = vlaneseq
    %v3546 = vshrl.u32 %v3545, 7
    %v3547 = vsub.s32 0, %v3546
    %v3548 = vrot.slane %v3543, %v3547
    %v3551 = vsel %vm236, %v3535, 0
    %v3554 = vsel %vm236, %v3536, 0
    %3556 = vmatprep.subr.mxu0 0.0
    %3557 = vmatpush1.msra.mxu0 0.0
    %3558 = vmatprep.subr.mxu0 0.0
    %3559 = vmatpush1.msra.mxu0 0.0
    %3560 = vmatprep.subr.mxu0 0.0
    %3561 = vmatpush1.msra.mxu0 0.0
    %3562 = vmatprep.subr.mxu0 0.0
    %3563 = vmatpush1.msra.mxu0 0.0
    %3564 = vmatprep.subr.mxu0 0.0
    %3565 = vmatpush1.msra.mxu0 0.0
    %3566 = vmatprep.subr.mxu0 0.0
    %3567 = vmatpush1.msra.mxu0 0.0
    %3568 = vmatprep.subr.mxu0 0.0
    %3569 = vmatpush1.msra.mxu0 0.0
    %3570 = vmatprep.subr.mxu0 0.0
    %3571 = vmatpush1.msra.mxu0 0.0
    %3572 = vmatprep.subr.mxu0 0.0
    %3573 = vmatpush1.msra.mxu0 0.0
    %3574 = vmatprep.subr.mxu0 0.0
    %3575 = vmatpush1.msra.mxu0 0.0
    %3576 = vmatprep.subr.mxu0 0.0
    %3577 = vmatpush1.msra.mxu0 0.0
    %3578 = vmatprep.subr.mxu0 0.0
    %3579 = vmatpush1.msra.mxu0 0.0
    %3580 = vmatprep.subr.mxu0 0.0
    %3581 = vmatpush1.msra.mxu0 %v3541
    %3582 = vmatprep.subr.mxu0 0.0
    %3583 = vmatpush1.msra.mxu0 %v3540
    %3584 = vmatprep.subr.mxu0 0.0
    %3585 = vmatpush1.msra.mxu0 %v3539
    %3586 = vmatprep.subr.mxu0 0.0
    %3587 = vmatpush1.msra.mxu0 %v3538
    %3588 = vmatprep.subr.mxu0 0.0
    %3589 = vmatpush2.msra.mxu0 0.0
    %3590 = vmatprep.subr.mxu0 0.0
    %3591 = vmatpush2.msra.mxu0 0.0
    %3592 = vmatprep.subr.mxu0 0.0
    %3593 = vmatpush2.msra.mxu0 0.0
    %3594 = vmatprep.subr.mxu0 0.0
    %3595 = vmatpush2.msra.mxu0 0.0
    %3596 = vmatprep.subr.mxu0 0.0
    %3597 = vmatpush2.msra.mxu0 0.0
    %3598 = vmatprep.subr.mxu0 0.0
    %3599 = vmatpush2.msra.mxu0 0.0
    %3600 = vmatprep.subr.mxu0 0.0
    %3601 = vmatpush2.msra.mxu0 0.0
    %3602 = vmatprep.subr.mxu0 0.0
    %3603 = vmatpush2.msra.mxu0 0.0
    %3604 = vmatprep.subr.mxu0 0.0
    %3605 = vmatpush2.msra.mxu0 0.0
    %3606 = vmatprep.subr.mxu0 0.0
    %3607 = vmatpush2.msra.mxu0 0.0
    %3608 = vmatprep.subr.mxu0 0.0
    %3609 = vmatpush2.msra.mxu0 0.0
    %3610 = vmatprep.subr.mxu0 0.0
    %3611 = vmatpush2.msra.mxu0 0.0
    %3612 = vmatprep.subr.mxu0 0.0
    %3613 = vmatpush2.msra.mxu0 0.0
    %3614 = vmatprep.subr.mxu0 0.0
    %3615 = vmatpush2.msra.mxu0 0.0
    %3616 = vmatprep.subr.mxu0 0.0
    %3617 = vmatpush2.msra.mxu0 0.0
    %3618 = vmatprep.subr.mxu0 0.0
    %3619 = vmatpush2.msra.mxu0 0.0
    %3620 = vmatprep.mubr.f32.mxu0 0.0
    %3621 = vmatmul.mubr.f32.gmra.mxu0 %v3551
    %v3622 = vpop.f32.mrf.mxu0
    %v3623 = vadd.f32 %v3548, %v3622
    %v3624 = vpop.f32.mrf.mxu0
    %3625 = vmatprep.mubr.f32.mxu0 0.0
    %3626 = vmatmul.mubr.f32.gmra.mxu0 %v3554
    %v3627 = vpop.f32.mrf.mxu0
    %v3628 = vadd.f32 %v3548, %v3627
    %v3629 = vpop.f32.mrf.mxu0
    %3630 = vdwg.mxu0
    %s3631 = scalar_lea.vmem [#allocation8], 1
    %v3632 = vld [vmem:[%s3631] sm:$0x1]
    %s3633 = scalar_lea.vmem [#allocation10], 1
    %v3634 = vld [vmem:[%s3633] sm:$0x1]
    %v3635 = vsel %vm236, %v3623, 0.0
    %3636 = vadd.xlane.f32.xlu0 %v3635
    %v3637 = vpop.xlane.xlu0 %3636
    %v3638 = vsel %vm236, %v3628, 0.0
    %3639 = vadd.xlane.f32.xlu0 %v3638
    %v3640 = vpop.xlane.xlu0 %3639
    %v3641 = vmul.f32 %v3637, %v243
    %v3642 = vmul.f32 %v3640, %v243
    %v3643 = vsub.f32 %v3623, %v3641
    %v3644 = vsub.f32 %v3628, %v3642
    %v3645 = vmul.f32 %v3643, %v3643
    %v3646 = vmul.f32 %v3644, %v3644
    %v3647 = vsel %vm236, %v3645, 0.0
    %3648 = vadd.xlane.f32.xlu0 %v3647
    %v3649 = vpop.xlane.xlu0 %3648
    %v3650 = vsel %vm236, %v3646, 0.0
    %3651 = vadd.xlane.f32.xlu0 %v3650
    %v3652 = vpop.xlane.xlu0 %3651
    %v3653 = vmul.f32 %v3649, %v243
    %v3654 = vmul.f32 %v3652, %v243
    %v3655 = vadd.f32 %v3653, 1e-05
    %v3656 = vadd.f32 %v3654, 1e-05
    %v3657 = vrsqrt.pop %v3655
    %v3658 = vrsqrt.pop %v3656
    %v3659 = vmul.f32 %v3643, %v3657
    %v3660 = vmul.f32 %v3644, %v3658
    %v3662 = vlaneseq
    %v3663 = vshrl.u32 %v3662, 7
    %v3664 = vsub.s32 0, %v3663
    %v3665 = vrot.slane %v3632, %v3664
    %v3667 = vmul.f32 %v3659, %v3665
    %v3668 = vmul.f32 %v3660, %v3665
    %v3670 = vlaneseq
    %v3671 = vshrl.u32 %v3670, 7
    %v3672 = vsub.s32 0, %v3671
    %v3673 = vrot.slane %v3634, %v3672
    %v3675 = vadd.f32 %v3667, %v3673
    %v3676 = vadd.f32 %v3668, %v3673
    %s3677 = scalar_lea.vmem %s11, 32
    %v3678 = vld [vmem:[%s3677] sm:$0xff]
    %v3679 = vld [vmem:[%s3677 + $0x8] sm:$0xff]
    %v3680 = vld [vmem:[%s3677 + $0x10] sm:$0xff]
    %v3681 = vld [vmem:[%s3677 + $0x18] sm:$0xff]
    %s3682 = scalar_lea.vmem [#allocation11], 1
    %v3683 = vld [vmem:[%s3682] sm:$0x1]
    %v3685 = vlaneseq
    %v3686 = vshrl.u32 %v3685, 7
    %v3687 = vsub.s32 0, %v3686
    %v3688 = vrot.slane %v3683, %v3687
    %v3691 = vsel %vm236, %v3675, 0
    %v3694 = vsel %vm236, %v3676, 0
    %3696 = vmatprep.subr.mxu0 0.0
    %3697 = vmatpush1.msra.mxu0 0.0
    %3698 = vmatprep.subr.mxu0 0.0
    %3699 = vmatpush1.msra.mxu0 0.0
    %3700 = vmatprep.subr.mxu0 0.0
    %3701 = vmatpush1.msra.mxu0 0.0
    %3702 = vmatprep.subr.mxu0 0.0
    %3703 = vmatpush1.msra.mxu0 0.0
    %3704 = vmatprep.subr.mxu0 0.0
    %3705 = vmatpush1.msra.mxu0 0.0
    %3706 = vmatprep.subr.mxu0 0.0
    %3707 = vmatpush1.msra.mxu0 0.0
    %3708 = vmatprep.subr.mxu0 0.0
    %3709 = vmatpush1.msra.mxu0 0.0
    %3710 = vmatprep.subr.mxu0 0.0
    %3711 = vmatpush1.msra.mxu0 0.0
    %3712 = vmatprep.subr.mxu0 0.0
    %3713 = vmatpush1.msra.mxu0 0.0
    %3714 = vmatprep.subr.mxu0 0.0
    %3715 = vmatpush1.msra.mxu0 0.0
    %3716 = vmatprep.subr.mxu0 0.0
    %3717 = vmatpush1.msra.mxu0 0.0
    %3718 = vmatprep.subr.mxu0 0.0
    %3719 = vmatpush1.msra.mxu0 0.0
    %3720 = vmatprep.subr.mxu0 0.0
    %3721 = vmatpush1.msra.mxu0 %v3681
    %3722 = vmatprep.subr.mxu0 0.0
    %3723 = vmatpush1.msra.mxu0 %v3680
    %3724 = vmatprep.subr.mxu0 0.0
    %3725 = vmatpush1.msra.mxu0 %v3679
    %3726 = vmatprep.subr.mxu0 0.0
    %3727 = vmatpush1.msra.mxu0 %v3678
    %3728 = vmatprep.subr.mxu0 0.0
    %3729 = vmatpush2.msra.mxu0 0.0
    %3730 = vmatprep.subr.mxu0 0.0
    %3731 = vmatpush2.msra.mxu0 0.0
    %3732 = vmatprep.subr.mxu0 0.0
    %3733 = vmatpush2.msra.mxu0 0.0
    %3734 = vmatprep.subr.mxu0 0.0
    %3735 = vmatpush2.msra.mxu0 0.0
    %3736 = vmatprep.subr.mxu0 0.0
    %3737 = vmatpush2.msra.mxu0 0.0
    %3738 = vmatprep.subr.mxu0 0.0
    %3739 = vmatpush2.msra.mxu0 0.0
    %3740 = vmatprep.subr.mxu0 0.0
    %3741 = vmatpush2.msra.mxu0 0.0
    %3742 = vmatprep.subr.mxu0 0.0
    %3743 = vmatpush2.msra.mxu0 0.0
    %3744 = vmatprep.subr.mxu0 0.0
    %3745 = vmatpush2.msra.mxu0 0.0
    %3746 = vmatprep.subr.mxu0 0.0
    %3747 = vmatpush2.msra.mxu0 0.0
    %3748 = vmatprep.subr.mxu0 0.0
    %3749 = vmatpush2.msra.mxu0 0.0
    %3750 = vmatprep.subr.mxu0 0.0
    %3751 = vmatpush2.msra.mxu0 0.0
    %3752 = vmatprep.subr.mxu0 0.0
    %3753 = vmatpush2.msra.mxu0 0.0
    %3754 = vmatprep.subr.mxu0 0.0
    %3755 = vmatpush2.msra.mxu0 0.0
    %3756 = vmatprep.subr.mxu0 0.0
    %3757 = vmatpush2.msra.mxu0 0.0
    %3758 = vmatprep.subr.mxu0 0.0
    %3759 = vmatpush2.msra.mxu0 0.0
    %3760 = vmatprep.mubr.f32.mxu0 0.0
    %3761 = vmatmul.mubr.f32.gmra.mxu0 %v3691
    %v3762 = vpop.f32.mrf.mxu0
    %v3763 = vadd.f32 %v3688, %v3762
    %v3764 = vpop.f32.mrf.mxu0
    %3765 = vmatprep.mubr.f32.mxu0 0.0
    %3766 = vmatmul.mubr.f32.gmra.mxu0 %v3694
    %v3767 = vpop.f32.mrf.mxu0
    %v3768 = vadd.f32 %v3688, %v3767
    %v3769 = vpop.f32.mrf.mxu0
    %3770 = vdwg.mxu0
    %s3771 = scalar_lea.vmem %s13, 64
    %v3772 = vld [vmem:[%s3771] sm:$0xff]
    %v3773 = vld [vmem:[%s3771 + $0x8] sm:$0xff]
    %v3774 = vld [vmem:[%s3771 + $0x10] sm:$0xff]
    %v3775 = vld [vmem:[%s3771 + $0x18] sm:$0xff]
    %v3776 = vld [vmem:[%s3771 + $0x20] sm:$0xff]
    %v3777 = vld [vmem:[%s3771 + $0x28] sm:$0xff]
    %v3778 = vld [vmem:[%s3771 + $0x30] sm:$0xff]
    %v3779 = vld [vmem:[%s3771 + $0x38] sm:$0xff]
    %s3780 = scalar_lea.vmem %s14, 1
    %v3781 = vld [vmem:[%s3780] sm:$0x1]
    %v3783 = vlaneseq
    %v3784 = vshrl.u32 %v3783, 7
    %v3785 = vsub.s32 0, %v3784
    %v3786 = vrot.slane %v3781, %v3785
    %v3789 = vsel %vm1965, %v3763, 0
    %v3792 = vsel %vm1965, %v3768, 0
    %3794 = vmatprep.subr.mxu0 0.0
    %3795 = vmatpush1.msra.mxu0 0.0
    %3796 = vmatprep.subr.mxu0 0.0
    %3797 = vmatpush1.msra.mxu0 0.0
    %3798 = vmatprep.subr.mxu0 0.0
    %3799 = vmatpush1.msra.mxu0 0.0
    %3800 = vmatprep.subr.mxu0 0.0
    %3801 = vmatpush1.msra.mxu0 0.0
    %3802 = vmatprep.subr.mxu0 0.0
    %3803 = vmatpush1.msra.mxu0 0.0
    %3804 = vmatprep.subr.mxu0 0.0
    %3805 = vmatpush1.msra.mxu0 0.0
    %3806 = vmatprep.subr.mxu0 0.0
    %3807 = vmatpush1.msra.mxu0 0.0
    %3808 = vmatprep.subr.mxu0 0.0
    %3809 = vmatpush1.msra.mxu0 0.0
    %3810 = vmatprep.subr.mxu0 0.0
    %3811 = vmatpush1.msra.mxu0 %v3779
    %3812 = vmatprep.subr.mxu0 0.0
    %3813 = vmatpush1.msra.mxu0 %v3778
    %3814 = vmatprep.subr.mxu0 0.0
    %3815 = vmatpush1.msra.mxu0 %v3777
    %3816 = vmatprep.subr.mxu0 0.0
    %3817 = vmatpush1.msra.mxu0 %v3776
    %3818 = vmatprep.subr.mxu0 0.0
    %3819 = vmatpush1.msra.mxu0 %v3775
    %3820 = vmatprep.subr.mxu0 0.0
    %3821 = vmatpush1.msra.mxu0 %v3774
    %3822 = vmatprep.subr.mxu0 0.0
    %3823 = vmatpush1.msra.mxu0 %v3773
    %3824 = vmatprep.subr.mxu0 0.0
    %3825 = vmatpush1.msra.mxu0 %v3772
    %3826 = vmatprep.subr.mxu0 0.0
    %3827 = vmatpush2.msra.mxu0 0.0
    %3828 = vmatprep.subr.mxu0 0.0
    %3829 = vmatpush2.msra.mxu0 0.0
    %3830 = vmatprep.subr.mxu0 0.0
    %3831 = vmatpush2.msra.mxu0 0.0
    %3832 = vmatprep.subr.mxu0 0.0
    %3833 = vmatpush2.msra.mxu0 0.0
    %3834 = vmatprep.subr.mxu0 0.0
    %3835 = vmatpush2.msra.mxu0 0.0
    %3836 = vmatprep.subr.mxu0 0.0
    %3837 = vmatpush2.msra.mxu0 0.0
    %3838 = vmatprep.subr.mxu0 0.0
    %3839 = vmatpush2.msra.mxu0 0.0
    %3840 = vmatprep.subr.mxu0 0.0
    %3841 = vmatpush2.msra.mxu0 0.0
    %3842 = vmatprep.subr.mxu0 0.0
    %3843 = vmatpush2.msra.mxu0 0.0
    %3844 = vmatprep.subr.mxu0 0.0
    %3845 = vmatpush2.msra.mxu0 0.0
    %3846 = vmatprep.subr.mxu0 0.0
    %3847 = vmatpush2.msra.mxu0 0.0
    %3848 = vmatprep.subr.mxu0 0.0
    %3849 = vmatpush2.msra.mxu0 0.0
    %3850 = vmatprep.subr.mxu0 0.0
    %3851 = vmatpush2.msra.mxu0 0.0
    %3852 = vmatprep.subr.mxu0 0.0
    %3853 = vmatpush2.msra.mxu0 0.0
    %3854 = vmatprep.subr.mxu0 0.0
    %3855 = vmatpush2.msra.mxu0 0.0
    %3856 = vmatprep.subr.mxu0 0.0
    %3857 = vmatpush2.msra.mxu0 0.0
    %3858 = vmatprep.mubr.f32.mxu0 0.0
    %3859 = vmatmul.mubr.f32.gmra.mxu0 %v3789
    %v3860 = vpop.f32.mrf.mxu0
    %v3861 = vadd.f32 %v3786, %v3860
    %v3862 = vpop.f32.mrf.mxu0
    %3863 = vmatprep.mubr.f32.mxu0 0.0
    %3864 = vmatmul.mubr.f32.gmra.mxu0 %v3792
    %v3865 = vpop.f32.mrf.mxu0
    %v3866 = vadd.f32 %v3786, %v3865
    %v3867 = vpop.f32.mrf.mxu0
    %3868 = vdwg.mxu0
    %v3869 = vmax.f32 %v3861, 0.0
    %v3870 = vmax.f32 %v3866, 0.0
    %v3871 = vld [vmem:[%s15] sm:$0xff]
    %v3872 = vld [vmem:[%s15 + $0x8] sm:$0xff]
    %v3873 = vld [vmem:[%s15 + $0x10] sm:$0xff]
    %v3874 = vld [vmem:[%s15 + $0x18] sm:$0xff]
    %v3875 = vld [vmem:[%s16] sm:$0x1]
    %v3877 = vlaneseq
    %v3878 = vshrl.u32 %v3877, 7
    %v3879 = vsub.s32 0, %v3878
    %v3880 = vrot.slane %v3875, %v3879
    %v3883 = vsel %vm236, %v3869, 0
    %v3886 = vsel %vm236, %v3870, 0
    %3888 = vmatprep.subr.mxu0 0.0
    %3889 = vmatpush1.msra.mxu0 0.0
    %3890 = vmatprep.subr.mxu0 0.0
    %3891 = vmatpush1.msra.mxu0 0.0
    %3892 = vmatprep.subr.mxu0 0.0
    %3893 = vmatpush1.msra.mxu0 0.0
    %3894 = vmatprep.subr.mxu0 0.0
    %3895 = vmatpush1.msra.mxu0 0.0
    %3896 = vmatprep.subr.mxu0 0.0
    %3897 = vmatpush1.msra.mxu0 0.0
    %3898 = vmatprep.subr.mxu0 0.0
    %3899 = vmatpush1.msra.mxu0 0.0
    %3900 = vmatprep.subr.mxu0 0.0
    %3901 = vmatpush1.msra.mxu0 0.0
    %3902 = vmatprep.subr.mxu0 0.0
    %3903 = vmatpush1.msra.mxu0 0.0
    %3904 = vmatprep.subr.mxu0 0.0
    %3905 = vmatpush1.msra.mxu0 0.0
    %3906 = vmatprep.subr.mxu0 0.0
    %3907 = vmatpush1.msra.mxu0 0.0
    %3908 = vmatprep.subr.mxu0 0.0
    %3909 = vmatpush1.msra.mxu0 0.0
    %3910 = vmatprep.subr.mxu0 0.0
    %3911 = vmatpush1.msra.mxu0 0.0
    %3912 = vmatprep.subr.mxu0 0.0
    %3913 = vmatpush1.msra.mxu0 %v3874
    %3914 = vmatprep.subr.mxu0 0.0
    %3915 = vmatpush1.msra.mxu0 %v3873
    %3916 = vmatprep.subr.mxu0 0.0
    %3917 = vmatpush1.msra.mxu0 %v3872
    %3918 = vmatprep.subr.mxu0 0.0
    %3919 = vmatpush1.msra.mxu0 %v3871
    %3920 = vmatprep.subr.mxu0 0.0
    %3921 = vmatpush2.msra.mxu0 0.0
    %3922 = vmatprep.subr.mxu0 0.0
    %3923 = vmatpush2.msra.mxu0 0.0
    %3924 = vmatprep.subr.mxu0 0.0
    %3925 = vmatpush2.msra.mxu0 0.0
    %3926 = vmatprep.subr.mxu0 0.0
    %3927 = vmatpush2.msra.mxu0 0.0
    %3928 = vmatprep.subr.mxu0 0.0
    %3929 = vmatpush2.msra.mxu0 0.0
    %3930 = vmatprep.subr.mxu0 0.0
    %3931 = vmatpush2.msra.mxu0 0.0
    %3932 = vmatprep.subr.mxu0 0.0
    %3933 = vmatpush2.msra.mxu0 0.0
    %3934 = vmatprep.subr.mxu0 0.0
    %3935 = vmatpush2.msra.mxu0 0.0
    %3936 = vmatprep.subr.mxu0 0.0
    %3937 = vmatpush2.msra.mxu0 0.0
    %3938 = vmatprep.subr.mxu0 0.0
    %3939 = vmatpush2.msra.mxu0 0.0
    %3940 = vmatprep.subr.mxu0 0.0
    %3941 = vmatpush2.msra.mxu0 0.0
    %3942 = vmatprep.subr.mxu0 0.0
    %3943 = vmatpush2.msra.mxu0 0.0
    %3944 = vmatprep.subr.mxu0 0.0
    %3945 = vmatpush2.msra.mxu0 0.0
    %3946 = vmatprep.subr.mxu0 0.0
    %3947 = vmatpush2.msra.mxu0 0.0
    %3948 = vmatprep.subr.mxu0 0.0
    %3949 = vmatpush2.msra.mxu0 0.0
    %3950 = vmatprep.subr.mxu0 0.0
    %3951 = vmatpush2.msra.mxu0 0.0
    %3952 = vmatprep.mubr.f32.mxu0 0.0
    %3953 = vmatmul.mubr.f32.gmra.mxu0 %v3883
    %v3954 = vpop.f32.mrf.mxu0
    %v3955 = vadd.f32 %v3880, %v3954
    %v3956 = vpop.f32.mrf.mxu0
    %3957 = vmatprep.mubr.f32.mxu0 0.0
    %3958 = vmatmul.mubr.f32.gmra.mxu0 %v3886
    %v3959 = vpop.f32.mrf.mxu0
    %v3960 = vadd.f32 %v3880, %v3959
    %v3961 = vpop.f32.mrf.mxu0
    %3962 = vdwg.mxu0
    %3963 = vst.msk [vmem:[#allocation13] sm:$0xff] %vm150, %v3955
    %3964 = vst.msk [vmem:[#allocation13 + $0x8] sm:$0xff] %vm150, %v3960
    // Predicated region
    $region94: #{tpu_custom_call.1} parent=1 // pred_check
      _
    $region95: #{tpu_custom_call.1} parent=1 // pred_check_branch
      %3966 = sbr.rel (0) target = $region97
    $region96: #{tpu_custom_call.1} parent=1 // pred_region
      %s3968 = ssub.s32 256, 256
      %3969 = vsyncadd [#allocation4], %s3968
      %s3970 = sshll.u32 [#allocation13], 4
      %s3971 = int_to_ptr.vmem [resolvable:$true] %s3970
      %3976 = dma.vmem_to_hbm [thread:$0]  %s3971, 256, %s17, [#allocation4], 128, 128, 8
    $region97: #{tpu_custom_call.1} parent=1 // pred_fallthru
      _
    // Predicated region
    $region98: #{tpu_custom_call.1} parent=1 // pred_check
      _
    $region99: #{tpu_custom_call.1} parent=1 // pred_check_branch
      %3978 = sbr.rel (0) target = $region101
    $region100: #{tpu_custom_call.1} parent=1 // pred_region
      %3979 = dma.done [#allocation4], 256
    $region101: #{tpu_custom_call.1} parent=1 // pred_fallthru
      _
    %3980 = vsyncpa [#allocation3], 1
    %3981 = vsyncpa [#allocation6], 1
    %3982 = vsyncpa [#allocation9], 1
    %3983 = vsyncpa [#allocation12], 1
    %3984 = vsyncpa [#allocation4], 1

</llo_original>
